<compile_context>
chip_gen: v6e
topology: v6e:2x2x1
jax: 0.10.0
libtpu: 0.0.40
codegen_flags: <defaults>
</compile_context>

<pallas_src>
import jax
import jax.numpy as jnp
from jax import lax
from jax.experimental import pallas as pl
from jax.experimental.pallas import tpu as pltpu

_LANE = 128


def _pad2d(x, rows, cols):
    r, c = x.shape
    return jnp.pad(x, ((0, rows - r), (0, cols - c)))


# ----------------------------------------------------------------------------
# Pallas kernels
# ----------------------------------------------------------------------------
def _conv1_stage_kernel(p_ref, w_ref, b_ref, o_ref):
    """conv1 (im2col matmul) + bias + ReLU + 2x2 maxpool, one grid step.

    p_ref rows are ordered (q = 2*di + dj, n, ph, pw), so pooling is an
    elementwise max over 4 contiguous, aligned row blocks.
    """
    acc = jnp.dot(p_ref[...], w_ref[...], preferred_element_type=jnp.float32)
    acc = jnp.maximum(acc + b_ref[...], 0.0)                 # (4*m4, 128)
    m4 = o_ref.shape[0]
    pooled = jnp.maximum(jnp.maximum(acc[0:m4], acc[m4:2 * m4]),
                         jnp.maximum(acc[2 * m4:3 * m4], acc[3 * m4:4 * m4]))
    o_ref[...] = pooled                                      # rows (n, ph, pw)


def _conv2_fc_stage_kernel(p_ref, cw_ref, cb_ref, f1w_ref, f1b_ref,
                           f2w_ref, f2b_ref, f3w_ref, f3b_ref, o_ref):
    """conv2 matmul + bias + ReLU + 2x2 maxpool + fc1 + fc2 + fc3.

    p_ref rows are ordered (q = 2*di + dj, hw = 4*ph + pw, n_padded_to_8):
      * pooling   = elementwise max over 4 contiguous 128-row blocks
      * flatten   = absorbed into fc1: one (8,128)x(128,128) matmul per hw
                    block (aligned 8-row slices of the pooled activation).
    """
    acc = jnp.dot(p_ref[...], cw_ref[...], preferred_element_type=jnp.float32)
    acc = jnp.maximum(acc + cb_ref[...], 0.0)                # (512, 128)

    m4 = acc.shape[0] // 4                                   # 128 = 16 * 8
    pooled = jnp.maximum(jnp.maximum(acc[0:m4], acc[m4:2 * m4]),
                         jnp.maximum(acc[2 * m4:3 * m4], acc[3 * m4:4 * m4]))
    # pooled rows: (hw, n_pad), lanes: conv2 output channels (first 16).

    n_hw = 16
    npad = m4 // n_hw                                        # 8 (sublane tile)
    acc1 = None
    for hw in range(n_hw):
        blk = pooled[hw * npad:(hw + 1) * npad, :]           # (8, 128) aligned
        part = jnp.dot(blk, f1w_ref[hw], preferred_element_type=jnp.float32)
        acc1 = part if acc1 is None else acc1 + part
    h1 = jnp.maximum(acc1 + f1b_ref[...], 0.0)               # (8, 128)
    h2 = jnp.maximum(
        jnp.dot(h1, f2w_ref[...], preferred_element_type=jnp.float32)
        + f2b_ref[...], 0.0)
    out = (jnp.dot(h2, f3w_ref[...], preferred_element_type=jnp.float32)
           + f3b_ref[...])                                   # (8, 128)
    nb, nc = o_ref.shape
    o_ref[...] = out[:nb, :nc]


# ----------------------------------------------------------------------------
# XLA-side patch gathers (pure data movement; row order chosen for the kernels)
# ----------------------------------------------------------------------------
def _build_patches1(x):
    """x: (N,1,28,28) -> (4*N*144, 128); rows (q, n, ph, pw), cols ki*5+kj."""
    n = x.shape[0]
    xs = x[:, 0]
    cols = [xs[:, ki:ki + 24, kj:kj + 24] for ki in range(5) for kj in range(5)]
    p = jnp.stack(cols, axis=-1)                  # (N, 24, 24, 25)
    p = p.reshape(n, 12, 2, 12, 2, 25)            # (n, ph, di, pw, dj, k)
    p = p.transpose(2, 4, 0, 1, 3, 5)             # (di, dj, n, ph, pw, k)
    p = p.reshape(4 * n * 144, 25)
    return jnp.pad(p, ((0, 0), (0, _LANE - 25)))  # lane pad is physically free


def _build_patches2(a1, npad=8):
    """a1: (N,12,12,6) NHWC -> (4*16*npad, 256); rows (q, hw, n_pad), cols (c,k)."""
    n = a1.shape[0]
    a1p = jnp.pad(a1, ((0, npad - n), (0, 0), (0, 0), (0, 0)))
    cols = [a1p[:, ki:ki + 8, kj:kj + 8, :] for ki in range(5) for kj in range(5)]
    p = jnp.stack(cols, axis=3)                   # (npad, 8, 8, 25, 6)
    p = p.transpose(0, 1, 2, 4, 3)                # (npad, 8, 8, 6, 25)
    p = p.reshape(npad, 4, 2, 4, 2, 6, 25)        # (n, ph, di, pw, dj, c, k)
    p = p.transpose(2, 4, 1, 3, 0, 5, 6)          # (di, dj, ph, pw, n, c, k)
    p = p.reshape(4 * 16 * npad, 150)
    return jnp.pad(p, ((0, 0), (0, 256 - 150)))


# ----------------------------------------------------------------------------
# pallas_call wrappers
# ----------------------------------------------------------------------------
def _conv1_stage(patches, w, b):
    m = patches.shape[0]
    m4 = m // 4
    return pl.pallas_call(
        _conv1_stage_kernel,
        out_shape=jax.ShapeDtypeStruct((m4, _LANE), jnp.float32),
        grid=(1,),
        in_specs=[
            pl.BlockSpec((m, _LANE), lambda i: (0, 0)),
            pl.BlockSpec((_LANE, _LANE), lambda i: (0, 0)),
            pl.BlockSpec((1, _LANE), lambda i: (0, 0)),
        ],
        out_specs=pl.BlockSpec((m4, _LANE), lambda i: (0, 0)),
        compiler_params=pltpu.CompilerParams(dimension_semantics=("arbitrary",)),
    )(patches, w, b)


def _conv2_fc_stage(patches, cw, cb, f1w, f1b, f2w, f2b, f3w, f3b, n_batch):
    m = patches.shape[0]
    return pl.pallas_call(
        _conv2_fc_stage_kernel,
        out_shape=jax.ShapeDtypeStruct((n_batch, 10), jnp.float32),
        grid=(1,),
        in_specs=[
            pl.BlockSpec((m, 256), lambda i: (0, 0)),
            pl.BlockSpec((256, _LANE), lambda i: (0, 0)),
            pl.BlockSpec((1, _LANE), lambda i: (0, 0)),
            pl.BlockSpec((16, _LANE, _LANE), lambda i: (0, 0, 0)),
            pl.BlockSpec((1, _LANE), lambda i: (0, 0)),
            pl.BlockSpec((_LANE, _LANE), lambda i: (0, 0)),
            pl.BlockSpec((1, _LANE), lambda i: (0, 0)),
            pl.BlockSpec((_LANE, _LANE), lambda i: (0, 0)),
            pl.BlockSpec((1, _LANE), lambda i: (0, 0)),
        ],
        out_specs=pl.BlockSpec((n_batch, 10), lambda i: (0, 0)),
        compiler_params=pltpu.CompilerParams(dimension_semantics=("arbitrary",)),
    )(patches, cw, cb, f1w, f1b, f2w, f2b, f3w, f3b)


# ----------------------------------------------------------------------------
# One-time weight layout prep (outside the hot path)
# ----------------------------------------------------------------------------
def prepare_params(p):
    f32 = jnp.float32
    w1 = _pad2d(p["conv1_w"].reshape(6, 25).T.astype(f32), _LANE, _LANE)
    b1 = _pad2d(p["conv1_b"].reshape(1, 6).astype(f32), 1, _LANE)
    w2 = _pad2d(p["conv2_w"].reshape(16, 150).T.astype(f32), 256, _LANE)
    b2 = _pad2d(p["conv2_b"].reshape(1, 16).astype(f32), 1, _LANE)
    # fc1: PyTorch flatten order is (c, h, w); regroup into 16 per-(h,w) blocks
    # of shape (c_in=16 -> padded 128, out=120 -> padded 128).
    f1w = p["fc1_w"].reshape(120, 16, 16).transpose(2, 1, 0)   # (hw, c, out)
    f1w = jnp.pad(f1w.astype(f32),
                  ((0, 0), (0, _LANE - 16), (0, _LANE - 120)))
    f1b = _pad2d(p["fc1_b"].reshape(1, 120).astype(f32), 1, _LANE)
    f2w = _pad2d(p["fc2_w"].T.astype(f32), _LANE, _LANE)
    f2b = _pad2d(p["fc2_b"].reshape(1, 84).astype(f32), 1, _LANE)
    f3w = _pad2d(p["fc3_w"].T.astype(f32), _LANE, _LANE)
    f3b = _pad2d(p["fc3_b"].reshape(1, 10).astype(f32), 1, _LANE)
    return dict(w1=w1, b1=b1, w2=w2, b2=b2, f1w=f1w, f1b=f1b,
                f2w=f2w, f2b=f2b, f3w=f3w, f3b=f3b)


# ----------------------------------------------------------------------------
# Forward pass: 2 pallas_calls + 2 XLA gather fusions
# ----------------------------------------------------------------------------
@jax.jit
def net_forward(x, kp):
    n = x.shape[0]
    patches1 = _build_patches1(x)                                  # (4*n*144, 128)
    o1 = _conv1_stage(patches1, kp["w1"], kp["b1"])                # (n*144, 128)
    a1 = o1[:, :6].reshape(n, 12, 12, 6)                           # NHWC, no copy work beyond gather
    patches2 = _build_patches2(a1)                                 # (512, 256)
    return _conv2_fc_stage(patches2, kp["w2"], kp["b2"], kp["f1w"], kp["f1b"],
                           kp["f2w"], kp["f2b"], kp["f3w"], kp["f3b"], n)


# ----------------------------------------------------------------------------
# Pure-JAX reference + param init
# ----------------------------------------------------------------------------
def ref_forward(x, p):
    def conv(x, w, b):
        y = lax.conv_general_dilated(x, w, (1, 1), "VALID",
                                     dimension_numbers=("NCHW", "OIHW", "NCHW"))
        return jax.nn.relu(y + b[None, :, None, None])

    def pool(x):
        N, C, H, W = x.shape
        return x.reshape(N, C, H // 2, 2, W // 2, 2).max(axis=(3, 5))

    x = pool(conv(x, p["conv1_w"], p["conv1_b"]))
    x = pool(conv(x, p["conv2_w"], p["conv2_b"]))
    x = x.reshape(x.shape[0], -1)
    x = jax.nn.relu(x @ p["fc1_w"].T + p["fc1_b"])
    x = jax.nn.relu(x @ p["fc2_w"].T + p["fc2_b"])
    return x @ p["fc3_w"].T + p["fc3_b"]


def init_params(key):
    ks = jax.random.split(key, 10)
    f32 = jnp.float32

    def rnd(k, shape, scale):
        return jax.random.normal(k, shape, dtype=f32) * scale

    return {
        "conv1_w": rnd(ks[0], (6, 1, 5, 5), 0.2),
        "conv1_b": rnd(ks[1], (6,), 0.1),
        "conv2_w": rnd(ks[2], (16, 6, 5, 5), 0.1),
        "conv2_b": rnd(ks[3], (16,), 0.1),
        "fc1_w": rnd(ks[4], (120, 256), 0.06),
        "fc1_b": rnd(ks[5], (120,), 0.05),
        "fc2_w": rnd(ks[6], (84, 120), 0.09),
        "fc2_b": rnd(ks[7], (84,), 0.05),
        "fc3_w": rnd(ks[8], (10, 84), 0.1),
        "fc3_b": rnd(ks[9], (10,), 0.05),
    }


if __name__ == "__main__":
    key = jax.random.PRNGKey(0)
    pkey, xkey = jax.random.split(key)
    params = init_params(pkey)
    kparams = prepare_params(params)

    # Module implies 28x28 single-channel input (16*4*4 flatten). batch=2.
    x = jax.random.normal(xkey, (2, 1, 28, 28), dtype=jnp.float32)

    out = jax.block_until_ready(net_forward(x, kparams))
    assert out.shape == (2, 10), out.shape

    ref = ref_forward(x, params)
    assert jnp.allclose(out, ref, atol=1e-4, rtol=1e-4), (
        "Pallas output mismatch vs reference")

    print("KERNEL_OK")
</pallas_src>

<mosaic_0001>
module attributes {stable_mosaic.version = 11 : i64} {
  func.func @_conv1_stage_kernel(%arg0: i32, %arg1: memref<1152x128xf32, #tpu.memory_space<vmem>>, %arg2: memref<128x128xf32, #tpu.memory_space<vmem>>, %arg3: memref<1x128xf32, #tpu.memory_space<vmem>>, %arg4: memref<288x128xf32, #tpu.memory_space<vmem>>) attributes {dimension_semantics = [#tpu.dimension_semantics<arbitrary>], iteration_bounds = array<i64: 1>, scalar_prefetch = 0 : i64, scratch_operands = 0 : i64, tpu.core_type = #tpu.core_type<tc>, window_params = [{pipeline_mode = #tpu.pipeline_mode<synchronous>, transform_indices = @transform_0, window_bounds = array<i64: 1152, 128>}, {pipeline_mode = #tpu.pipeline_mode<synchronous>, transform_indices = @transform_1, window_bounds = array<i64: 128, 128>}, {pipeline_mode = #tpu.pipeline_mode<synchronous>, transform_indices = @transform_2, window_bounds = array<i64: 1, 128>}, {pipeline_mode = #tpu.pipeline_mode<synchronous>, transform_indices = @transform_3, window_bounds = array<i64: 288, 128>}]} {
    %c0 = arith.constant 0 : index
    %c0_0 = arith.constant 0 : index
    %0 = vector.load %arg1[%c0, %c0_0] : memref<1152x128xf32, #tpu.memory_space<vmem>>, vector<1152x128xf32>
    %c0_1 = arith.constant 0 : index
    %c0_2 = arith.constant 0 : index
    %1 = vector.load %arg2[%c0_1, %c0_2] : memref<128x128xf32, #tpu.memory_space<vmem>>, vector<128x128xf32>
    %cst = arith.constant dense<0.000000e+00> : vector<1152x128xf32>
    %2 = tpu.matmul %0, %1, %cst {dimension_numbers = #tpu.dot_dimension_numbers<[1], [0], [0], [1], [0, 0, 1, 1], [], []>} : vector<1152x128xf32>, vector<128x128xf32>, vector<1152x128xf32> -> vector<1152x128xf32>
    %c0_3 = arith.constant 0 : index
    %c0_4 = arith.constant 0 : index
    %3 = vector.load %arg3[%c0_3, %c0_4] : memref<1x128xf32, #tpu.memory_space<vmem>>, vector<1x128xf32>
    %4 = vector.broadcast %3 : vector<1x128xf32> to vector<1152x128xf32>
    %5 = arith.addf %2, %4 : vector<1152x128xf32>
    %cst_5 = arith.constant 0.000000e+00 : f32
    %6 = vector.broadcast %cst_5 : f32 to vector<1152x128xf32>
    %7 = arith.maximumf %5, %6 : vector<1152x128xf32>
    %8 = vector.extract_strided_slice %7 {offsets = [0, 0], sizes = [288, 128], strides = [1, 1]} : vector<1152x128xf32> to vector<288x128xf32>
    %9 = vector.extract_strided_slice %7 {offsets = [288, 0], sizes = [288, 128], strides = [1, 1]} : vector<1152x128xf32> to vector<288x128xf32>
    %10 = arith.maximumf %8, %9 : vector<288x128xf32>
    %11 = vector.extract_strided_slice %7 {offsets = [576, 0], sizes = [288, 128], strides = [1, 1]} : vector<1152x128xf32> to vector<288x128xf32>
    %12 = vector.extract_strided_slice %7 {offsets = [864, 0], sizes = [288, 128], strides = [1, 1]} : vector<1152x128xf32> to vector<288x128xf32>
    %13 = arith.maximumf %11, %12 : vector<288x128xf32>
    %14 = arith.maximumf %10, %13 : vector<288x128xf32>
    %c0_6 = arith.constant 0 : index
    %c0_7 = arith.constant 0 : index
    %15 = vector.load %arg4[%c0_6, %c0_7] : memref<288x128xf32, #tpu.memory_space<vmem>>, vector<288x128xf32>
    tpu.vector_store %arg4[%c0_6, %c0_7], %14 {strides = array<i32>} : memref<288x128xf32, #tpu.memory_space<vmem>>, vector<288x128xf32>,
    return
  }
  func.func @transform_0(%arg0: i32) -> (i32, i32) {
    %c0_i32 = arith.constant 0 : i32
    %c0_i32_0 = arith.constant 0 : i32
    %c0_i32_1 = arith.constant 0 : i32
    return %c0_i32, %c0_i32_0 : i32, i32
  }
  func.func @transform_1(%arg0: i32) -> (i32, i32) {
    %c0_i32 = arith.constant 0 : i32
    %c0_i32_0 = arith.constant 0 : i32
    %c0_i32_1 = arith.constant 0 : i32
    return %c0_i32, %c0_i32_0 : i32, i32
  }
  func.func @transform_2(%arg0: i32) -> (i32, i32) {
    %c0_i32 = arith.constant 0 : i32
    %c0_i32_0 = arith.constant 0 : i32
    %c0_i32_1 = arith.constant 0 : i32
    return %c0_i32, %c0_i32_0 : i32, i32
  }
  func.func @transform_3(%arg0: i32) -> (i32, i32) {
    %c0_i32 = arith.constant 0 : i32
    %c0_i32_0 = arith.constant 0 : i32
    %c0_i32_1 = arith.constant 0 : i32
    return %c0_i32, %c0_i32_0 : i32, i32
  }
}

module attributes {stable_mosaic.version = 11 : i64} {
  func.func @_conv2_fc_stage_kernel(%arg0: i32, %arg1: memref<512x256xf32, #tpu.memory_space<vmem>>, %arg2: memref<256x128xf32, #tpu.memory_space<vmem>>, %arg3: memref<1x128xf32, #tpu.memory_space<vmem>>, %arg4: memref<16x128x128xf32, #tpu.memory_space<vmem>>, %arg5: memref<1x128xf32, #tpu.memory_space<vmem>>, %arg6: memref<128x128xf32, #tpu.memory_space<vmem>>, %arg7: memref<1x128xf32, #tpu.memory_space<vmem>>, %arg8: memref<128x128xf32, #tpu.memory_space<vmem>>, %arg9: memref<1x128xf32, #tpu.memory_space<vmem>>, %arg10: memref<2x10xf32, #tpu.memory_space<vmem>>) attributes {dimension_semantics = [#tpu.dimension_semantics<arbitrary>], iteration_bounds = array<i64: 1>, scalar_prefetch = 0 : i64, scratch_operands = 0 : i64, tpu.core_type = #tpu.core_type<tc>, window_params = [{pipeline_mode = #tpu.pipeline_mode<synchronous>, transform_indices = @transform_0, window_bounds = array<i64: 512, 256>}, {pipeline_mode = #tpu.pipeline_mode<synchronous>, transform_indices = @transform_1, window_bounds = array<i64: 256, 128>}, {pipeline_mode = #tpu.pipeline_mode<synchronous>, transform_indices = @transform_2, window_bounds = array<i64: 1, 128>}, {pipeline_mode = #tpu.pipeline_mode<synchronous>, transform_indices = @transform_3, window_bounds = array<i64: 16, 128, 128>}, {pipeline_mode = #tpu.pipeline_mode<synchronous>, transform_indices = @transform_4, window_bounds = array<i64: 1, 128>}, {pipeline_mode = #tpu.pipeline_mode<synchronous>, transform_indices = @transform_5, window_bounds = array<i64: 128, 128>}, {pipeline_mode = #tpu.pipeline_mode<synchronous>, transform_indices = @transform_6, window_bounds = array<i64: 1, 128>}, {pipeline_mode = #tpu.pipeline_mode<synchronous>, transform_indices = @transform_7, window_bounds = array<i64: 128, 128>}, {pipeline_mode = #tpu.pipeline_mode<synchronous>, transform_indices = @transform_8, window_bounds = array<i64: 1, 128>}, {pipeline_mode = #tpu.pipeline_mode<synchronous>, transform_indices = @transform_9, window_bounds = array<i64: 2, 10>}]} {
    %c0 = arith.constant 0 : index
    %c0_0 = arith.constant 0 : index
    %0 = vector.load %arg1[%c0, %c0_0] : memref<512x256xf32, #tpu.memory_space<vmem>>, vector<512x256xf32>
    %c0_1 = arith.constant 0 : index
    %c0_2 = arith.constant 0 : index
    %1 = vector.load %arg2[%c0_1, %c0_2] : memref<256x128xf32, #tpu.memory_space<vmem>>, vector<256x128xf32>
    %cst = arith.constant dense<0.000000e+00> : vector<512x128xf32>
    %2 = tpu.matmul %0, %1, %cst {dimension_numbers = #tpu.dot_dimension_numbers<[1], [0], [0], [1], [0, 0, 1, 1], [], []>} : vector<512x256xf32>, vector<256x128xf32>, vector<512x128xf32> -> vector<512x128xf32>
    %c0_3 = arith.constant 0 : index
    %c0_4 = arith.constant 0 : index
    %3 = vector.load %arg3[%c0_3, %c0_4] : memref<1x128xf32, #tpu.memory_space<vmem>>, vector<1x128xf32>
    %4 = vector.broadcast %3 : vector<1x128xf32> to vector<512x128xf32>
    %5 = arith.addf %2, %4 : vector<512x128xf32>
    %cst_5 = arith.constant 0.000000e+00 : f32
    %6 = vector.broadcast %cst_5 : f32 to vector<512x128xf32>
    %7 = arith.maximumf %5, %6 : vector<512x128xf32>
    %8 = vector.extract_strided_slice %7 {offsets = [0, 0], sizes = [128, 128], strides = [1, 1]} : vector<512x128xf32> to vector<128x128xf32>
    %9 = vector.extract_strided_slice %7 {offsets = [128, 0], sizes = [128, 128], strides = [1, 1]} : vector<512x128xf32> to vector<128x128xf32>
    %10 = arith.maximumf %8, %9 : vector<128x128xf32>
    %11 = vector.extract_strided_slice %7 {offsets = [256, 0], sizes = [128, 128], strides = [1, 1]} : vector<512x128xf32> to vector<128x128xf32>
    %12 = vector.extract_strided_slice %7 {offsets = [384, 0], sizes = [128, 128], strides = [1, 1]} : vector<512x128xf32> to vector<128x128xf32>
    %13 = arith.maximumf %11, %12 : vector<128x128xf32>
    %14 = arith.maximumf %10, %13 : vector<128x128xf32>
    %15 = vector.extract_strided_slice %14 {offsets = [0, 0], sizes = [8, 128], strides = [1, 1]} : vector<128x128xf32> to vector<8x128xf32>
    %c0_6 = arith.constant 0 : index
    %c0_7 = arith.constant 0 : index
    %c0_8 = arith.constant 0 : index
    %16 = vector.load %arg4[%c0_6, %c0_7, %c0_8] : memref<16x128x128xf32, #tpu.memory_space<vmem>>, vector<1x128x128xf32>
    %17 = vector.shape_cast %16 : vector<1x128x128xf32> to vector<128x128xf32>
    %cst_9 = arith.constant dense<0.000000e+00> : vector<8x128xf32>
    %18 = tpu.matmul %15, %17, %cst_9 {dimension_numbers = #tpu.dot_dimension_numbers<[1], [0], [0], [1], [0, 0, 1, 1], [], []>} : vector<8x128xf32>, vector<128x128xf32>, vector<8x128xf32> -> vector<8x128xf32>
    %19 = vector.extract_strided_slice %14 {offsets = [8, 0], sizes = [8, 128], strides = [1, 1]} : vector<128x128xf32> to vector<8x128xf32>
    %c1 = arith.constant 1 : index
    %c0_10 = arith.constant 0 : index
    %c0_11 = arith.constant 0 : index
    %20 = vector.load %arg4[%c1, %c0_10, %c0_11] : memref<16x128x128xf32, #tpu.memory_space<vmem>>, vector<1x128x128xf32>
    %21 = vector.shape_cast %20 : vector<1x128x128xf32> to vector<128x128xf32>
    %cst_12 = arith.constant dense<0.000000e+00> : vector<8x128xf32>
    %22 = tpu.matmul %19, %21, %cst_12 {dimension_numbers = #tpu.dot_dimension_numbers<[1], [0], [0], [1], [0, 0, 1, 1], [], []>} : vector<8x128xf32>, vector<128x128xf32>, vector<8x128xf32> -> vector<8x128xf32>
    %23 = arith.addf %18, %22 : vector<8x128xf32>
    %24 = vector.extract_strided_slice %14 {offsets = [16, 0], sizes = [8, 128], strides = [1, 1]} : vector<128x128xf32> to vector<8x128xf32>
    %c2 = arith.constant 2 : index
    %c0_13 = arith.constant 0 : index
    %c0_14 = arith.constant 0 : index
    %25 = vector.load %arg4[%c2, %c0_13, %c0_14] : memref<16x128x128xf32, #tpu.memory_space<vmem>>, vector<1x128x128xf32>
    %26 = vector.shape_cast %25 : vector<1x128x128xf32> to vector<128x128xf32>
    %cst_15 = arith.constant dense<0.000000e+00> : vector<8x128xf32>
    %27 = tpu.matmul %24, %26, %cst_15 {dimension_numbers = #tpu.dot_dimension_numbers<[1], [0], [0], [1], [0, 0, 1, 1], [], []>} : vector<8x128xf32>, vector<128x128xf32>, vector<8x128xf32> -> vector<8x128xf32>
    %28 = arith.addf %23, %27 : vector<8x128xf32>
    %29 = vector.extract_strided_slice %14 {offsets = [24, 0], sizes = [8, 128], strides = [1, 1]} : vector<128x128xf32> to vector<8x128xf32>
    %c3 = arith.constant 3 : index
    %c0_16 = arith.constant 0 : index
    %c0_17 = arith.constant 0 : index
    %30 = vector.load %arg4[%c3, %c0_16, %c0_17] : memref<16x128x128xf32, #tpu.memory_space<vmem>>, vector<1x128x128xf32>
    %31 = vector.shape_cast %30 : vector<1x128x128xf32> to vector<128x128xf32>
    %cst_18 = arith.constant dense<0.000000e+00> : vector<8x128xf32>
    %32 = tpu.matmul %29, %31, %cst_18 {dimension_numbers = #tpu.dot_dimension_numbers<[1], [0], [0], [1], [0, 0, 1, 1], [], []>} : vector<8x128xf32>, vector<128x128xf32>, vector<8x128xf32> -> vector<8x128xf32>
    %33 = arith.addf %28, %32 : vector<8x128xf32>
    %34 = vector.extract_strided_slice %14 {offsets = [32, 0], sizes = [8, 128], strides = [1, 1]} : vector<128x128xf32> to vector<8x128xf32>
    %c4 = arith.constant 4 : index
    %c0_19 = arith.constant 0 : index
    %c0_20 = arith.constant 0 : index
    %35 = vector.load %arg4[%c4, %c0_19, %c0_20] : memref<16x128x128xf32, #tpu.memory_space<vmem>>, vector<1x128x128xf32>
    %36 = vector.shape_cast %35 : vector<1x128x128xf32> to vector<128x128xf32>
    %cst_21 = arith.constant dense<0.000000e+00> : vector<8x128xf32>
    %37 = tpu.matmul %34, %36, %cst_21 {dimension_numbers = #tpu.dot_dimension_numbers<[1], [0], [0], [1], [0, 0, 1, 1], [], []>} : vector<8x128xf32>, vector<128x128xf32>, vector<8x128xf32> -> vector<8x128xf32>
    %38 = arith.addf %33, %37 : vector<8x128xf32>
    %39 = vector.extract_strided_slice %14 {offsets = [40, 0], sizes = [8, 128], strides = [1, 1]} : vector<128x128xf32> to vector<8x128xf32>
    %c5 = arith.constant 5 : index
    %c0_22 = arith.constant 0 : index
    %c0_23 = arith.constant 0 : index
    %40 = vector.load %arg4[%c5, %c0_22, %c0_23] : memref<16x128x128xf32, #tpu.memory_space<vmem>>, vector<1x128x128xf32>
    %41 = vector.shape_cast %40 : vector<1x128x128xf32> to vector<128x128xf32>
    %cst_24 = arith.constant dense<0.000000e+00> : vector<8x128xf32>
    %42 = tpu.matmul %39, %41, %cst_24 {dimension_numbers = #tpu.dot_dimension_numbers<[1], [0], [0], [1], [0, 0, 1, 1], [], []>} : vector<8x128xf32>, vector<128x128xf32>, vector<8x128xf32> -> vector<8x128xf32>
    %43 = arith.addf %38, %42 : vector<8x128xf32>
    %44 = vector.extract_strided_slice %14 {offsets = [48, 0], sizes = [8, 128], strides = [1, 1]} : vector<128x128xf32> to vector<8x128xf32>
    %c6 = arith.constant 6 : index
    %c0_25 = arith.constant 0 : index
    %c0_26 = arith.constant 0 : index
    %45 = vector.load %arg4[%c6, %c0_25, %c0_26] : memref<16x128x128xf32, #tpu.memory_space<vmem>>, vector<1x128x128xf32>
    %46 = vector.shape_cast %45 : vector<1x128x128xf32> to vector<128x128xf32>
    %cst_27 = arith.constant dense<0.000000e+00> : vector<8x128xf32>
    %47 = tpu.matmul %44, %46, %cst_27 {dimension_numbers = #tpu.dot_dimension_numbers<[1], [0], [0], [1], [0, 0, 1, 1], [], []>} : vector<8x128xf32>, vector<128x128xf32>, vector<8x128xf32> -> vector<8x128xf32>
    %48 = arith.addf %43, %47 : vector<8x128xf32>
    %49 = vector.extract_strided_slice %14 {offsets = [56, 0], sizes = [8, 128], strides = [1, 1]} : vector<128x128xf32> to vector<8x128xf32>
    %c7 = arith.constant 7 : index
    %c0_28 = arith.constant 0 : index
    %c0_29 = arith.constant 0 : index
    %50 = vector.load %arg4[%c7, %c0_28, %c0_29] : memref<16x128x128xf32, #tpu.memory_space<vmem>>, vector<1x128x128xf32>
    %51 = vector.shape_cast %50 : vector<1x128x128xf32> to vector<128x128xf32>
    %cst_30 = arith.constant dense<0.000000e+00> : vector<8x128xf32>
    %52 = tpu.matmul %49, %51, %cst_30 {dimension_numbers = #tpu.dot_dimension_numbers<[1], [0], [0], [1], [0, 0, 1, 1], [], []>} : vector<8x128xf32>, vector<128x128xf32>, vector<8x128xf32> -> vector<8x128xf32>
    %53 = arith.addf %48, %52 : vector<8x128xf32>
    %54 = vector.extract_strided_slice %14 {offsets = [64, 0], sizes = [8, 128], strides = [1, 1]} : vector<128x128xf32> to vector<8x128xf32>
    %c8 = arith.constant 8 : index
    %c0_31 = arith.constant 0 : index
    %c0_32 = arith.constant 0 : index
    %55 = vector.load %arg4[%c8, %c0_31, %c0_32] : memref<16x128x128xf32, #tpu.memory_space<vmem>>, vector<1x128x128xf32>
    %56 = vector.shape_cast %55 : vector<1x128x128xf32> to vector<128x128xf32>
    %cst_33 = arith.constant dense<0.000000e+00> : vector<8x128xf32>
    %57 = tpu.matmul %54, %56, %cst_33 {dimension_numbers = #tpu.dot_dimension_numbers<[1], [0], [0], [1], [0, 0, 1, 1], [], []>} : vector<8x128xf32>, vector<128x128xf32>, vector<8x128xf32> -> vector<8x128xf32>
    %58 = arith.addf %53, %57 : vector<8x128xf32>
    %59 = vector.extract_strided_slice %14 {offsets = [72, 0], sizes = [8, 128], strides = [1, 1]} : vector<128x128xf32> to vector<8x128xf32>
    %c9 = arith.constant 9 : index
    %c0_34 = arith.constant 0 : index
    %c0_35 = arith.constant 0 : index
    %60 = vector.load %arg4[%c9, %c0_34, %c0_35] : memref<16x128x128xf32, #tpu.memory_space<vmem>>, vector<1x128x128xf32>
    %61 = vector.shape_cast %60 : vector<1x128x128xf32> to vector<128x128xf32>
    %cst_36 = arith.constant dense<0.000000e+00> : vector<8x128xf32>
    %62 = tpu.matmul %59, %61, %cst_36 {dimension_numbers = #tpu.dot_dimension_numbers<[1], [0], [0], [1], [0, 0, 1, 1], [], []>} : vector<8x128xf32>, vector<128x128xf32>, vector<8x128xf32> -> vector<8x128xf32>
    %63 = arith.addf %58, %62 : vector<8x128xf32>
    %64 = vector.extract_strided_slice %14 {offsets = [80, 0], sizes = [8, 128], strides = [1, 1]} : vector<128x128xf32> to vector<8x128xf32>
    %c10 = arith.constant 10 : index
    %c0_37 = arith.constant 0 : index
    %c0_38 = arith.constant 0 : index
    %65 = vector.load %arg4[%c10, %c0_37, %c0_38] : memref<16x128x128xf32, #tpu.memory_space<vmem>>, vector<1x128x128xf32>
    %66 = vector.shape_cast %65 : vector<1x128x128xf32> to vector<128x128xf32>
    %cst_39 = arith.constant dense<0.000000e+00> : vector<8x128xf32>
    %67 = tpu.matmul %64, %66, %cst_39 {dimension_numbers = #tpu.dot_dimension_numbers<[1], [0], [0], [1], [0, 0, 1, 1], [], []>} : vector<8x128xf32>, vector<128x128xf32>, vector<8x128xf32> -> vector<8x128xf32>
    %68 = arith.addf %63, %67 : vector<8x128xf32>
    %69 = vector.extract_strided_slice %14 {offsets = [88, 0], sizes = [8, 128], strides = [1, 1]} : vector<128x128xf32> to vector<8x128xf32>
    %c11 = arith.constant 11 : index
    %c0_40 = arith.constant 0 : index
    %c0_41 = arith.constant 0 : index
    %70 = vector.load %arg4[%c11, %c0_40, %c0_41] : memref<16x128x128xf32, #tpu.memory_space<vmem>>, vector<1x128x128xf32>
    %71 = vector.shape_cast %70 : vector<1x128x128xf32> to vector<128x128xf32>
    %cst_42 = arith.constant dense<0.000000e+00> : vector<8x128xf32>
    %72 = tpu.matmul %69, %71, %cst_42 {dimension_numbers = #tpu.dot_dimension_numbers<[1], [0], [0], [1], [0, 0, 1, 1], [], []>} : vector<8x128xf32>, vector<128x128xf32>, vector<8x128xf32> -> vector<8x128xf32>
    %73 = arith.addf %68, %72 : vector<8x128xf32>
    %74 = vector.extract_strided_slice %14 {offsets = [96, 0], sizes = [8, 128], strides = [1, 1]} : vector<128x128xf32> to vector<8x128xf32>
    %c12 = arith.constant 12 : index
    %c0_43 = arith.constant 0 : index
    %c0_44 = arith.constant 0 : index
    %75 = vector.load %arg4[%c12, %c0_43, %c0_44] : memref<16x128x128xf32, #tpu.memory_space<vmem>>, vector<1x128x128xf32>
    %76 = vector.shape_cast %75 : vector<1x128x128xf32> to vector<128x128xf32>
    %cst_45 = arith.constant dense<0.000000e+00> : vector<8x128xf32>
    %77 = tpu.matmul %74, %76, %cst_45 {dimension_numbers = #tpu.dot_dimension_numbers<[1], [0], [0], [1], [0, 0, 1, 1], [], []>} : vector<8x128xf32>, vector<128x128xf32>, vector<8x128xf32> -> vector<8x128xf32>
    %78 = arith.addf %73, %77 : vector<8x128xf32>
    %79 = vector.extract_strided_slice %14 {offsets = [104, 0], sizes = [8, 128], strides = [1, 1]} : vector<128x128xf32> to vector<8x128xf32>
    %c13 = arith.constant 13 : index
    %c0_46 = arith.constant 0 : index
    %c0_47 = arith.constant 0 : index
    %80 = vector.load %arg4[%c13, %c0_46, %c0_47] : memref<16x128x128xf32, #tpu.memory_space<vmem>>, vector<1x128x128xf32>
    %81 = vector.shape_cast %80 : vector<1x128x128xf32> to vector<128x128xf32>
    %cst_48 = arith.constant dense<0.000000e+00> : vector<8x128xf32>
    %82 = tpu.matmul %79, %81, %cst_48 {dimension_numbers = #tpu.dot_dimension_numbers<[1], [0], [0], [1], [0, 0, 1, 1], [], []>} : vector<8x128xf32>, vector<128x128xf32>, vector<8x128xf32> -> vector<8x128xf32>
    %83 = arith.addf %78, %82 : vector<8x128xf32>
    %84 = vector.extract_strided_slice %14 {offsets = [112, 0], sizes = [8, 128], strides = [1, 1]} : vector<128x128xf32> to vector<8x128xf32>
    %c14 = arith.constant 14 : index
    %c0_49 = arith.constant 0 : index
    %c0_50 = arith.constant 0 : index
    %85 = vector.load %arg4[%c14, %c0_49, %c0_50] : memref<16x128x128xf32, #tpu.memory_space<vmem>>, vector<1x128x128xf32>
    %86 = vector.shape_cast %85 : vector<1x128x128xf32> to vector<128x128xf32>
    %cst_51 = arith.constant dense<0.000000e+00> : vector<8x128xf32>
    %87 = tpu.matmul %84, %86, %cst_51 {dimension_numbers = #tpu.dot_dimension_numbers<[1], [0], [0], [1], [0, 0, 1, 1], [], []>} : vector<8x128xf32>, vector<128x128xf32>, vector<8x128xf32> -> vector<8x128xf32>
    %88 = arith.addf %83, %87 : vector<8x128xf32>
    %89 = vector.extract_strided_slice %14 {offsets = [120, 0], sizes = [8, 128], strides = [1, 1]} : vector<128x128xf32> to vector<8x128xf32>
    %c15 = arith.constant 15 : index
    %c0_52 = arith.constant 0 : index
    %c0_53 = arith.constant 0 : index
    %90 = vector.load %arg4[%c15, %c0_52, %c0_53] : memref<16x128x128xf32, #tpu.memory_space<vmem>>, vector<1x128x128xf32>
    %91 = vector.shape_cast %90 : vector<1x128x128xf32> to vector<128x128xf32>
    %cst_54 = arith.constant dense<0.000000e+00> : vector<8x128xf32>
    %92 = tpu.matmul %89, %91, %cst_54 {dimension_numbers = #tpu.dot_dimension_numbers<[1], [0], [0], [1], [0, 0, 1, 1], [], []>} : vector<8x128xf32>, vector<128x128xf32>, vector<8x128xf32> -> vector<8x128xf32>
    %93 = arith.addf %88, %92 : vector<8x128xf32>
    %c0_55 = arith.constant 0 : index
    %c0_56 = arith.constant 0 : index
    %94 = vector.load %arg5[%c0_55, %c0_56] : memref<1x128xf32, #tpu.memory_space<vmem>>, vector<1x128xf32>
    %95 = vector.broadcast %94 : vector<1x128xf32> to vector<8x128xf32>
    %96 = arith.addf %93, %95 : vector<8x128xf32>
    %cst_57 = arith.constant 0.000000e+00 : f32
    %97 = vector.broadcast %cst_57 : f32 to vector<8x128xf32>
    %98 = arith.maximumf %96, %97 : vector<8x128xf32>
    %c0_58 = arith.constant 0 : index
    %c0_59 = arith.constant 0 : index
    %99 = vector.load %arg6[%c0_58, %c0_59] : memref<128x128xf32, #tpu.memory_space<vmem>>, vector<128x128xf32>
    %cst_60 = arith.constant dense<0.000000e+00> : vector<8x128xf32>
    %100 = tpu.matmul %98, %99, %cst_60 {dimension_numbers = #tpu.dot_dimension_numbers<[1], [0], [0], [1], [0, 0, 1, 1], [], []>} : vector<8x128xf32>, vector<128x128xf32>, vector<8x128xf32> -> vector<8x128xf32>
    %c0_61 = arith.constant 0 : index
    %c0_62 = arith.constant 0 : index
    %101 = vector.load %arg7[%c0_61, %c0_62] : memref<1x128xf32, #tpu.memory_space<vmem>>, vector<1x128xf32>
    %102 = vector.broadcast %101 : vector<1x128xf32> to vector<8x128xf32>
    %103 = arith.addf %100, %102 : vector<8x128xf32>
    %cst_63 = arith.constant 0.000000e+00 : f32
    %104 = vector.broadcast %cst_63 : f32 to vector<8x128xf32>
    %105 = arith.maximumf %103, %104 : vector<8x128xf32>
    %c0_64 = arith.constant 0 : index
    %c0_65 = arith.constant 0 : index
    %106 = vector.load %arg8[%c0_64, %c0_65] : memref<128x128xf32, #tpu.memory_space<vmem>>, vector<128x128xf32>
    %cst_66 = arith.constant dense<0.000000e+00> : vector<8x128xf32>
    %107 = tpu.matmul %105, %106, %cst_66 {dimension_numbers = #tpu.dot_dimension_numbers<[1], [0], [0], [1], [0, 0, 1, 1], [], []>} : vector<8x128xf32>, vector<128x128xf32>, vector<8x128xf32> -> vector<8x128xf32>
    %c0_67 = arith.constant 0 : index
    %c0_68 = arith.constant 0 : index
    %108 = vector.load %arg9[%c0_67, %c0_68] : memref<1x128xf32, #tpu.memory_space<vmem>>, vector<1x128xf32>
    %109 = vector.broadcast %108 : vector<1x128xf32> to vector<8x128xf32>
    %110 = arith.addf %107, %109 : vector<8x128xf32>
    %111 = vector.extract_strided_slice %110 {offsets = [0, 0], sizes = [2, 10], strides = [1, 1]} : vector<8x128xf32> to vector<2x10xf32>
    %c0_69 = arith.constant 0 : index
    %c0_70 = arith.constant 0 : index
    %112 = vector.load %arg10[%c0_69, %c0_70] : memref<2x10xf32, #tpu.memory_space<vmem>>, vector<2x10xf32>
    tpu.vector_store %arg10[%c0_69, %c0_70], %111 {strides = array<i32>} : memref<2x10xf32, #tpu.memory_space<vmem>>, vector<2x10xf32>,
    return
  }
  func.func @transform_0(%arg0: i32) -> (i32, i32) {
    %c0_i32 = arith.constant 0 : i32
    %c0_i32_0 = arith.constant 0 : i32
    %c0_i32_1 = arith.constant 0 : i32
    return %c0_i32, %c0_i32_0 : i32, i32
  }
  func.func @transform_1(%arg0: i32) -> (i32, i32) {
    %c0_i32 = arith.constant 0 : i32
    %c0_i32_0 = arith.constant 0 : i32
    %c0_i32_1 = arith.constant 0 : i32
    return %c0_i32, %c0_i32_0 : i32, i32
  }
  func.func @transform_2(%arg0: i32) -> (i32, i32) {
    %c0_i32 = arith.constant 0 : i32
    %c0_i32_0 = arith.constant 0 : i32
    %c0_i32_1 = arith.constant 0 : i32
    return %c0_i32, %c0_i32_0 : i32, i32
  }
  func.func @transform_3(%arg0: i32) -> (i32, i32, i32) {
    %c0_i32 = arith.constant 0 : i32
    %c0_i32_0 = arith.constant 0 : i32
    %c0_i32_1 = arith.constant 0 : i32
    %c0_i32_2 = arith.constant 0 : i32
    return %c0_i32, %c0_i32_0, %c0_i32_1 : i32, i32, i32
  }
  func.func @transform_4(%arg0: i32) -> (i32, i32) {
    %c0_i32 = arith.constant 0 : i32
    %c0_i32_0 = arith.constant 0 : i32
    %c0_i32_1 = arith.constant 0 : i32
    return %c0_i32, %c0_i32_0 : i32, i32
  }
  func.func @transform_5(%arg0: i32) -> (i32, i32) {
    %c0_i32 = arith.constant 0 : i32
    %c0_i32_0 = arith.constant 0 : i32
    %c0_i32_1 = arith.constant 0 : i32
    return %c0_i32, %c0_i32_0 : i32, i32
  }
  func.func @transform_6(%arg0: i32) -> (i32, i32) {
    %c0_i32 = arith.constant 0 : i32
    %c0_i32_0 = arith.constant 0 : i32
    %c0_i32_1 = arith.constant 0 : i32
    return %c0_i32, %c0_i32_0 : i32, i32
  }
  func.func @transform_7(%arg0: i32) -> (i32, i32) {
    %c0_i32 = arith.constant 0 : i32
    %c0_i32_0 = arith.constant 0 : i32
    %c0_i32_1 = arith.constant 0 : i32
    return %c0_i32, %c0_i32_0 : i32, i32
  }
  func.func @transform_8(%arg0: i32) -> (i32, i32) {
    %c0_i32 = arith.constant 0 : i32
    %c0_i32_0 = arith.constant 0 : i32
    %c0_i32_1 = arith.constant 0 : i32
    return %c0_i32, %c0_i32_0 : i32, i32
  }
  func.func @transform_9(%arg0: i32) -> (i32, i32) {
    %c0_i32 = arith.constant 0 : i32
    %c0_i32_0 = arith.constant 0 : i32
    %c0_i32_1 = arith.constant 0 : i32
    return %c0_i32, %c0_i32_0 : i32, i32
  }
}

</mosaic_0001>

<llo_original>
// kernel: net_forward.2
$region0: #{net_forward.2}
  #allocation0 [shape = 'u32[]', space=smem, size = 0x4, offset = 0x4, fixed_abs, tag = 'smem constant byte address 0x4 - core index']
  #allocation1 [shape = 'u32[144,128]{1,0:T(1,128)}', space=vmem, size = 0x12000, scoped, tag = 'internal scratch']
  %s0 = inlined_call_operand.vmem [shape: f32[1152,128], index: 0, kind: input, shape index: {}]
  %s1 = inlined_call_operand.vmem [shape: f32[128,128], index: 1, kind: input, shape index: {}]
  %s2 = inlined_call_operand.vmem [shape: f32[1,128], index: 2, kind: input, shape index: {}]
  %s3 = inlined_call_operand.vmem [shape: f32[288,128], index: 3, kind: output, shape index: {}]
  %s4 = sld [smem:[#allocation0]]
  $region22: #{net_forward.2} parent=0
    _
  %s6 = ssub.s32 1, %s4
  %s7 = scalar_select 0, %s6, %s4
  // Predicated region
  $region2: #{net_forward.2} parent=0 // pred_check
    _
  $region3: #{net_forward.2} parent=0 // pred_check_branch
    %9 = sbr.rel (0) target = $region5
  $region4: #{net_forward.2} parent=0 // pred_region
    _
  $region5: #{net_forward.2} parent=0 // pred_fallthru
    _
  // Predicated region
  $region6: #{net_forward.2} parent=0 // pred_check
    _
  $region7: #{net_forward.2} parent=0 // pred_check_branch
    %11 = sbr.rel (0) target = $region9
  $region8: #{net_forward.2} parent=0 // pred_region
    _
  $region9: #{net_forward.2} parent=0 // pred_fallthru
    _
  // Predicated region
  $region10: #{net_forward.2} parent=0 // pred_check
    _
  $region11: #{net_forward.2} parent=0 // pred_check_branch
    %13 = sbr.rel (0) target = $region13
  $region12: #{net_forward.2} parent=0 // pred_region
    _
  $region13: #{net_forward.2} parent=0 // pred_fallthru
    _
  %v14 = vld [vmem:[%s0] sm:$0xff]
  %v15 = vld [vmem:[%s0 + $0x8] sm:$0xff]
  %v16 = vld [vmem:[%s0 + $0x10] sm:$0xff]
  %v17 = vld [vmem:[%s0 + $0x18] sm:$0xff]
  %v18 = vld [vmem:[%s0 + $0x20] sm:$0xff]
  %v19 = vld [vmem:[%s0 + $0x28] sm:$0xff]
  %v20 = vld [vmem:[%s0 + $0x30] sm:$0xff]
  %v21 = vld [vmem:[%s0 + $0x38] sm:$0xff]
  %v22 = vld [vmem:[%s0 + $0x40] sm:$0xff]
  %v23 = vld [vmem:[%s0 + $0x48] sm:$0xff]
  %v24 = vld [vmem:[%s0 + $0x50] sm:$0xff]
  %v25 = vld [vmem:[%s0 + $0x58] sm:$0xff]
  %v26 = vld [vmem:[%s0 + $0x60] sm:$0xff]
  %v27 = vld [vmem:[%s0 + $0x68] sm:$0xff]
  %v28 = vld [vmem:[%s0 + $0x70] sm:$0xff]
  %v29 = vld [vmem:[%s0 + $0x78] sm:$0xff]
  %v30 = vld [vmem:[%s0 + $0x80] sm:$0xff]
  %v31 = vld [vmem:[%s0 + $0x88] sm:$0xff]
  %v32 = vld [vmem:[%s0 + $0x90] sm:$0xff]
  %v33 = vld [vmem:[%s0 + $0x98] sm:$0xff]
  %v34 = vld [vmem:[%s0 + $0xa0] sm:$0xff]
  %v35 = vld [vmem:[%s0 + $0xa8] sm:$0xff]
  %v36 = vld [vmem:[%s0 + $0xb0] sm:$0xff]
  %v37 = vld [vmem:[%s0 + $0xb8] sm:$0xff]
  %v38 = vld [vmem:[%s0 + $0xc0] sm:$0xff]
  %v39 = vld [vmem:[%s0 + $0xc8] sm:$0xff]
  %v40 = vld [vmem:[%s0 + $0xd0] sm:$0xff]
  %v41 = vld [vmem:[%s0 + $0xd8] sm:$0xff]
  %v42 = vld [vmem:[%s0 + $0xe0] sm:$0xff]
  %v43 = vld [vmem:[%s0 + $0xe8] sm:$0xff]
  %v44 = vld [vmem:[%s0 + $0xf0] sm:$0xff]
  %v45 = vld [vmem:[%s0 + $0xf8] sm:$0xff]
  %v46 = vld [vmem:[%s0 + $0x100] sm:$0xff]
  %v47 = vld [vmem:[%s0 + $0x108] sm:$0xff]
  %v48 = vld [vmem:[%s0 + $0x110] sm:$0xff]
  %v49 = vld [vmem:[%s0 + $0x118] sm:$0xff]
  %v50 = vld [vmem:[%s0 + $0x120] sm:$0xff]
  %v51 = vld [vmem:[%s0 + $0x128] sm:$0xff]
  %v52 = vld [vmem:[%s0 + $0x130] sm:$0xff]
  %v53 = vld [vmem:[%s0 + $0x138] sm:$0xff]
  %v54 = vld [vmem:[%s0 + $0x140] sm:$0xff]
  %v55 = vld [vmem:[%s0 + $0x148] sm:$0xff]
  %v56 = vld [vmem:[%s0 + $0x150] sm:$0xff]
  %v57 = vld [vmem:[%s0 + $0x158] sm:$0xff]
  %v58 = vld [vmem:[%s0 + $0x160] sm:$0xff]
  %v59 = vld [vmem:[%s0 + $0x168] sm:$0xff]
  %v60 = vld [vmem:[%s0 + $0x170] sm:$0xff]
  %v61 = vld [vmem:[%s0 + $0x178] sm:$0xff]
  %v62 = vld [vmem:[%s0 + $0x180] sm:$0xff]
  %v63 = vld [vmem:[%s0 + $0x188] sm:$0xff]
  %v64 = vld [vmem:[%s0 + $0x190] sm:$0xff]
  %v65 = vld [vmem:[%s0 + $0x198] sm:$0xff]
  %v66 = vld [vmem:[%s0 + $0x1a0] sm:$0xff]
  %v67 = vld [vmem:[%s0 + $0x1a8] sm:$0xff]
  %v68 = vld [vmem:[%s0 + $0x1b0] sm:$0xff]
  %v69 = vld [vmem:[%s0 + $0x1b8] sm:$0xff]
  %v70 = vld [vmem:[%s0 + $0x1c0] sm:$0xff]
  %v71 = vld [vmem:[%s0 + $0x1c8] sm:$0xff]
  %v72 = vld [vmem:[%s0 + $0x1d0] sm:$0xff]
  %v73 = vld [vmem:[%s0 + $0x1d8] sm:$0xff]
  %v74 = vld [vmem:[%s0 + $0x1e0] sm:$0xff]
  %v75 = vld [vmem:[%s0 + $0x1e8] sm:$0xff]
  %v76 = vld [vmem:[%s0 + $0x1f0] sm:$0xff]
  %v77 = vld [vmem:[%s0 + $0x1f8] sm:$0xff]
  %v78 = vld [vmem:[%s0 + $0x200] sm:$0xff]
  %v79 = vld [vmem:[%s0 + $0x208] sm:$0xff]
  %v80 = vld [vmem:[%s0 + $0x210] sm:$0xff]
  %v81 = vld [vmem:[%s0 + $0x218] sm:$0xff]
  %v82 = vld [vmem:[%s0 + $0x220] sm:$0xff]
  %v83 = vld [vmem:[%s0 + $0x228] sm:$0xff]
  %v84 = vld [vmem:[%s0 + $0x230] sm:$0xff]
  %v85 = vld [vmem:[%s0 + $0x238] sm:$0xff]
  %v86 = vld [vmem:[%s0 + $0x240] sm:$0xff]
  %v87 = vld [vmem:[%s0 + $0x248] sm:$0xff]
  %v88 = vld [vmem:[%s0 + $0x250] sm:$0xff]
  %v89 = vld [vmem:[%s0 + $0x258] sm:$0xff]
  %v90 = vld [vmem:[%s0 + $0x260] sm:$0xff]
  %v91 = vld [vmem:[%s0 + $0x268] sm:$0xff]
  %v92 = vld [vmem:[%s0 + $0x270] sm:$0xff]
  %v93 = vld [vmem:[%s0 + $0x278] sm:$0xff]
  %v94 = vld [vmem:[%s0 + $0x280] sm:$0xff]
  %v95 = vld [vmem:[%s0 + $0x288] sm:$0xff]
  %v96 = vld [vmem:[%s0 + $0x290] sm:$0xff]
  %v97 = vld [vmem:[%s0 + $0x298] sm:$0xff]
  %v98 = vld [vmem:[%s0 + $0x2a0] sm:$0xff]
  %v99 = vld [vmem:[%s0 + $0x2a8] sm:$0xff]
  %v100 = vld [vmem:[%s0 + $0x2b0] sm:$0xff]
  %v101 = vld [vmem:[%s0 + $0x2b8] sm:$0xff]
  %v102 = vld [vmem:[%s0 + $0x2c0] sm:$0xff]
  %v103 = vld [vmem:[%s0 + $0x2c8] sm:$0xff]
  %v104 = vld [vmem:[%s0 + $0x2d0] sm:$0xff]
  %v105 = vld [vmem:[%s0 + $0x2d8] sm:$0xff]
  %v106 = vld [vmem:[%s0 + $0x2e0] sm:$0xff]
  %v107 = vld [vmem:[%s0 + $0x2e8] sm:$0xff]
  %v108 = vld [vmem:[%s0 + $0x2f0] sm:$0xff]
  %v109 = vld [vmem:[%s0 + $0x2f8] sm:$0xff]
  %v110 = vld [vmem:[%s0 + $0x300] sm:$0xff]
  %v111 = vld [vmem:[%s0 + $0x308] sm:$0xff]
  %v112 = vld [vmem:[%s0 + $0x310] sm:$0xff]
  %v113 = vld [vmem:[%s0 + $0x318] sm:$0xff]
  %v114 = vld [vmem:[%s0 + $0x320] sm:$0xff]
  %v115 = vld [vmem:[%s0 + $0x328] sm:$0xff]
  %v116 = vld [vmem:[%s0 + $0x330] sm:$0xff]
  %v117 = vld [vmem:[%s0 + $0x338] sm:$0xff]
  %v118 = vld [vmem:[%s0 + $0x340] sm:$0xff]
  %v119 = vld [vmem:[%s0 + $0x348] sm:$0xff]
  %v120 = vld [vmem:[%s0 + $0x350] sm:$0xff]
  %v121 = vld [vmem:[%s0 + $0x358] sm:$0xff]
  %v122 = vld [vmem:[%s0 + $0x360] sm:$0xff]
  %v123 = vld [vmem:[%s0 + $0x368] sm:$0xff]
  %v124 = vld [vmem:[%s0 + $0x370] sm:$0xff]
  %v125 = vld [vmem:[%s0 + $0x378] sm:$0xff]
  %v126 = vld [vmem:[%s0 + $0x380] sm:$0xff]
  %v127 = vld [vmem:[%s0 + $0x388] sm:$0xff]
  %v128 = vld [vmem:[%s0 + $0x390] sm:$0xff]
  %v129 = vld [vmem:[%s0 + $0x398] sm:$0xff]
  %v130 = vld [vmem:[%s0 + $0x3a0] sm:$0xff]
  %v131 = vld [vmem:[%s0 + $0x3a8] sm:$0xff]
  %v132 = vld [vmem:[%s0 + $0x3b0] sm:$0xff]
  %v133 = vld [vmem:[%s0 + $0x3b8] sm:$0xff]
  %v134 = vld [vmem:[%s0 + $0x3c0] sm:$0xff]
  %v135 = vld [vmem:[%s0 + $0x3c8] sm:$0xff]
  %v136 = vld [vmem:[%s0 + $0x3d0] sm:$0xff]
  %v137 = vld [vmem:[%s0 + $0x3d8] sm:$0xff]
  %v138 = vld [vmem:[%s0 + $0x3e0] sm:$0xff]
  %v139 = vld [vmem:[%s0 + $0x3e8] sm:$0xff]
  %v140 = vld [vmem:[%s0 + $0x3f0] sm:$0xff]
  %v141 = vld [vmem:[%s0 + $0x3f8] sm:$0xff]
  %v142 = vld [vmem:[%s0 + $0x400] sm:$0xff]
  %v143 = vld [vmem:[%s0 + $0x408] sm:$0xff]
  %v144 = vld [vmem:[%s0 + $0x410] sm:$0xff]
  %v145 = vld [vmem:[%s0 + $0x418] sm:$0xff]
  %v146 = vld [vmem:[%s0 + $0x420] sm:$0xff]
  %v147 = vld [vmem:[%s0 + $0x428] sm:$0xff]
  %v148 = vld [vmem:[%s0 + $0x430] sm:$0xff]
  %v149 = vld [vmem:[%s0 + $0x438] sm:$0xff]
  %v150 = vld [vmem:[%s0 + $0x440] sm:$0xff]
  %v151 = vld [vmem:[%s0 + $0x448] sm:$0xff]
  %v152 = vld [vmem:[%s0 + $0x450] sm:$0xff]
  %v153 = vld [vmem:[%s0 + $0x458] sm:$0xff]
  %v154 = vld [vmem:[%s0 + $0x460] sm:$0xff]
  %v155 = vld [vmem:[%s0 + $0x468] sm:$0xff]
  %v156 = vld [vmem:[%s0 + $0x470] sm:$0xff]
  %v157 = vld [vmem:[%s0 + $0x478] sm:$0xff]
  %v158 = vld [vmem:[%s1] sm:$0xff]
  %v159 = vld [vmem:[%s1 + $0x8] sm:$0xff]
  %v160 = vld [vmem:[%s1 + $0x10] sm:$0xff]
  %v161 = vld [vmem:[%s1 + $0x18] sm:$0xff]
  %v162 = vld [vmem:[%s1 + $0x20] sm:$0xff]
  %v163 = vld [vmem:[%s1 + $0x28] sm:$0xff]
  %v164 = vld [vmem:[%s1 + $0x30] sm:$0xff]
  %v165 = vld [vmem:[%s1 + $0x38] sm:$0xff]
  %v166 = vld [vmem:[%s1 + $0x40] sm:$0xff]
  %v167 = vld [vmem:[%s1 + $0x48] sm:$0xff]
  %v168 = vld [vmem:[%s1 + $0x50] sm:$0xff]
  %v169 = vld [vmem:[%s1 + $0x58] sm:$0xff]
  %v170 = vld [vmem:[%s1 + $0x60] sm:$0xff]
  %v171 = vld [vmem:[%s1 + $0x68] sm:$0xff]
  %v172 = vld [vmem:[%s1 + $0x70] sm:$0xff]
  %v173 = vld [vmem:[%s1 + $0x78] sm:$0xff]
  %v174 = vld [vmem:[%s2] sm:$0x1]
  %v176 = vlaneseq
  %v177 = vshrl.u32 %v176, 7
  %v178 = vsub.s32 0, %v177
  %v179 = vrot.slane %v174, %v178
  %181 = vmatprep.subr.mxu0 0.0
  %182 = vmatpush1.msra.mxu0 %v173
  %183 = vmatprep.subr.mxu0 0.0
  %184 = vmatpush1.msra.mxu0 %v172
  %185 = vmatprep.subr.mxu0 0.0
  %186 = vmatpush1.msra.mxu0 %v171
  %187 = vmatprep.subr.mxu0 0.0
  %188 = vmatpush1.msra.mxu0 %v170
  %189 = vmatprep.subr.mxu0 0.0
  %190 = vmatpush1.msra.mxu0 %v169
  %191 = vmatprep.subr.mxu0 0.0
  %192 = vmatpush1.msra.mxu0 %v168
  %193 = vmatprep.subr.mxu0 0.0
  %194 = vmatpush1.msra.mxu0 %v167
  %195 = vmatprep.subr.mxu0 0.0
  %196 = vmatpush1.msra.mxu0 %v166
  %197 = vmatprep.subr.mxu0 0.0
  %198 = vmatpush1.msra.mxu0 %v165
  %199 = vmatprep.subr.mxu0 0.0
  %200 = vmatpush1.msra.mxu0 %v164
  %201 = vmatprep.subr.mxu0 0.0
  %202 = vmatpush1.msra.mxu0 %v163
  %203 = vmatprep.subr.mxu0 0.0
  %204 = vmatpush1.msra.mxu0 %v162
  %205 = vmatprep.subr.mxu0 0.0
  %206 = vmatpush1.msra.mxu0 %v161
  %207 = vmatprep.subr.mxu0 0.0
  %208 = vmatpush1.msra.mxu0 %v160
  %209 = vmatprep.subr.mxu0 0.0
  %210 = vmatpush1.msra.mxu0 %v159
  %211 = vmatprep.subr.mxu0 0.0
  %212 = vmatpush1.msra.mxu0 %v158
  %213 = vmatprep.subr.mxu0 0.0
  %214 = vmatpush2.msra.mxu0 0.0
  %215 = vmatprep.subr.mxu0 0.0
  %216 = vmatpush2.msra.mxu0 0.0
  %217 = vmatprep.subr.mxu0 0.0
  %218 = vmatpush2.msra.mxu0 0.0
  %219 = vmatprep.subr.mxu0 0.0
  %220 = vmatpush2.msra.mxu0 0.0
  %221 = vmatprep.subr.mxu0 0.0
  %222 = vmatpush2.msra.mxu0 0.0
  %223 = vmatprep.subr.mxu0 0.0
  %224 = vmatpush2.msra.mxu0 0.0
  %225 = vmatprep.subr.mxu0 0.0
  %226 = vmatpush2.msra.mxu0 0.0
  %227 = vmatprep.subr.mxu0 0.0
  %228 = vmatpush2.msra.mxu0 0.0
  %229 = vmatprep.subr.mxu0 0.0
  %230 = vmatpush2.msra.mxu0 0.0
  %231 = vmatprep.subr.mxu0 0.0
  %232 = vmatpush2.msra.mxu0 0.0
  %233 = vmatprep.subr.mxu0 0.0
  %234 = vmatpush2.msra.mxu0 0.0
  %235 = vmatprep.subr.mxu0 0.0
  %236 = vmatpush2.msra.mxu0 0.0
  %237 = vmatprep.subr.mxu0 0.0
  %238 = vmatpush2.msra.mxu0 0.0
  %239 = vmatprep.subr.mxu0 0.0
  %240 = vmatpush2.msra.mxu0 0.0
  %241 = vmatprep.subr.mxu0 0.0
  %242 = vmatpush2.msra.mxu0 0.0
  %243 = vmatprep.subr.mxu0 0.0
  %244 = vmatpush2.msra.mxu0 0.0
  %245 = vmatprep.mubr.f32.mxu0 0.0
  %246 = vmatmul.mubr.f32.gmra.mxu0 %v14
  %v247 = vpop.f32.mrf.mxu0
  %v248 = vadd.f32 %v179, %v247
  %v249 = vpop.f32.mrf.mxu0
  %250 = vmatprep.mubr.f32.mxu0 0.0
  %251 = vmatmul.mubr.f32.gmra.mxu0 %v15
  %v252 = vpop.f32.mrf.mxu0
  %v253 = vadd.f32 %v179, %v252
  %v254 = vpop.f32.mrf.mxu0
  %255 = vmatprep.mubr.f32.mxu0 0.0
  %256 = vmatmul.mubr.f32.gmra.mxu0 %v16
  %v257 = vpop.f32.mrf.mxu0
  %v258 = vadd.f32 %v179, %v257
  %v259 = vpop.f32.mrf.mxu0
  %260 = vmatprep.mubr.f32.mxu0 0.0
  %261 = vmatmul.mubr.f32.gmra.mxu0 %v17
  %v262 = vpop.f32.mrf.mxu0
  %v263 = vadd.f32 %v179, %v262
  %v264 = vpop.f32.mrf.mxu0
  %265 = vmatprep.mubr.f32.mxu0 0.0
  %266 = vmatmul.mubr.f32.gmra.mxu0 %v18
  %v267 = vpop.f32.mrf.mxu0
  %v268 = vadd.f32 %v179, %v267
  %v269 = vpop.f32.mrf.mxu0
  %270 = vmatprep.mubr.f32.mxu0 0.0
  %271 = vmatmul.mubr.f32.gmra.mxu0 %v19
  %v272 = vpop.f32.mrf.mxu0
  %v273 = vadd.f32 %v179, %v272
  %v274 = vpop.f32.mrf.mxu0
  %275 = vmatprep.mubr.f32.mxu0 0.0
  %276 = vmatmul.mubr.f32.gmra.mxu0 %v20
  %v277 = vpop.f32.mrf.mxu0
  %v278 = vadd.f32 %v179, %v277
  %v279 = vpop.f32.mrf.mxu0
  %280 = vmatprep.mubr.f32.mxu0 0.0
  %281 = vmatmul.mubr.f32.gmra.mxu0 %v21
  %v282 = vpop.f32.mrf.mxu0
  %v283 = vadd.f32 %v179, %v282
  %v284 = vpop.f32.mrf.mxu0
  %285 = vmatprep.mubr.f32.mxu0 0.0
  %286 = vmatmul.mubr.f32.gmra.mxu0 %v22
  %v287 = vpop.f32.mrf.mxu0
  %v288 = vadd.f32 %v179, %v287
  %v289 = vpop.f32.mrf.mxu0
  %290 = vmatprep.mubr.f32.mxu0 0.0
  %291 = vmatmul.mubr.f32.gmra.mxu0 %v23
  %v292 = vpop.f32.mrf.mxu0
  %v293 = vadd.f32 %v179, %v292
  %v294 = vpop.f32.mrf.mxu0
  %295 = vmatprep.mubr.f32.mxu0 0.0
  %296 = vmatmul.mubr.f32.gmra.mxu0 %v24
  %v297 = vpop.f32.mrf.mxu0
  %v298 = vadd.f32 %v179, %v297
  %v299 = vpop.f32.mrf.mxu0
  %300 = vmatprep.mubr.f32.mxu0 0.0
  %301 = vmatmul.mubr.f32.gmra.mxu0 %v25
  %v302 = vpop.f32.mrf.mxu0
  %v303 = vadd.f32 %v179, %v302
  %v304 = vpop.f32.mrf.mxu0
  %305 = vmatprep.mubr.f32.mxu0 0.0
  %306 = vmatmul.mubr.f32.gmra.mxu0 %v26
  %v307 = vpop.f32.mrf.mxu0
  %v308 = vadd.f32 %v179, %v307
  %v309 = vpop.f32.mrf.mxu0
  %310 = vmatprep.mubr.f32.mxu0 0.0
  %311 = vmatmul.mubr.f32.gmra.mxu0 %v27
  %v312 = vpop.f32.mrf.mxu0
  %v313 = vadd.f32 %v179, %v312
  %v314 = vpop.f32.mrf.mxu0
  %315 = vmatprep.mubr.f32.mxu0 0.0
  %316 = vmatmul.mubr.f32.gmra.mxu0 %v28
  %v317 = vpop.f32.mrf.mxu0
  %v318 = vadd.f32 %v179, %v317
  %v319 = vpop.f32.mrf.mxu0
  %320 = vmatprep.mubr.f32.mxu0 0.0
  %321 = vmatmul.mubr.f32.gmra.mxu0 %v29
  %v322 = vpop.f32.mrf.mxu0
  %v323 = vadd.f32 %v179, %v322
  %v324 = vpop.f32.mrf.mxu0
  %325 = vmatprep.mubr.f32.mxu0 0.0
  %326 = vmatmul.mubr.f32.gmra.mxu0 %v30
  %v327 = vpop.f32.mrf.mxu0
  %v328 = vadd.f32 %v179, %v327
  %v329 = vpop.f32.mrf.mxu0
  %330 = vmatprep.mubr.f32.mxu0 0.0
  %331 = vmatmul.mubr.f32.gmra.mxu0 %v31
  %v332 = vpop.f32.mrf.mxu0
  %v333 = vadd.f32 %v179, %v332
  %v334 = vpop.f32.mrf.mxu0
  %335 = vmatprep.mubr.f32.mxu0 0.0
  %336 = vmatmul.mubr.f32.gmra.mxu0 %v32
  %v337 = vpop.f32.mrf.mxu0
  %v338 = vadd.f32 %v179, %v337
  %v339 = vpop.f32.mrf.mxu0
  %340 = vmatprep.mubr.f32.mxu0 0.0
  %341 = vmatmul.mubr.f32.gmra.mxu0 %v33
  %v342 = vpop.f32.mrf.mxu0
  %v343 = vadd.f32 %v179, %v342
  %v344 = vpop.f32.mrf.mxu0
  %345 = vmatprep.mubr.f32.mxu0 0.0
  %346 = vmatmul.mubr.f32.gmra.mxu0 %v34
  %v347 = vpop.f32.mrf.mxu0
  %v348 = vadd.f32 %v179, %v347
  %v349 = vpop.f32.mrf.mxu0
  %350 = vmatprep.mubr.f32.mxu0 0.0
  %351 = vmatmul.mubr.f32.gmra.mxu0 %v35
  %v352 = vpop.f32.mrf.mxu0
  %v353 = vadd.f32 %v179, %v352
  %v354 = vpop.f32.mrf.mxu0
  %355 = vmatprep.mubr.f32.mxu0 0.0
  %356 = vmatmul.mubr.f32.gmra.mxu0 %v36
  %v357 = vpop.f32.mrf.mxu0
  %v358 = vadd.f32 %v179, %v357
  %v359 = vpop.f32.mrf.mxu0
  %360 = vmatprep.mubr.f32.mxu0 0.0
  %361 = vmatmul.mubr.f32.gmra.mxu0 %v37
  %v362 = vpop.f32.mrf.mxu0
  %v363 = vadd.f32 %v179, %v362
  %v364 = vpop.f32.mrf.mxu0
  %365 = vmatprep.mubr.f32.mxu0 0.0
  %366 = vmatmul.mubr.f32.gmra.mxu0 %v38
  %v367 = vpop.f32.mrf.mxu0
  %v368 = vadd.f32 %v179, %v367
  %v369 = vpop.f32.mrf.mxu0
  %370 = vmatprep.mubr.f32.mxu0 0.0
  %371 = vmatmul.mubr.f32.gmra.mxu0 %v39
  %v372 = vpop.f32.mrf.mxu0
  %v373 = vadd.f32 %v179, %v372
  %v374 = vpop.f32.mrf.mxu0
  %375 = vmatprep.mubr.f32.mxu0 0.0
  %376 = vmatmul.mubr.f32.gmra.mxu0 %v40
  %v377 = vpop.f32.mrf.mxu0
  %v378 = vadd.f32 %v179, %v377
  %v379 = vpop.f32.mrf.mxu0
  %380 = vmatprep.mubr.f32.mxu0 0.0
  %381 = vmatmul.mubr.f32.gmra.mxu0 %v41
  %v382 = vpop.f32.mrf.mxu0
  %v383 = vadd.f32 %v179, %v382
  %v384 = vpop.f32.mrf.mxu0
  %385 = vmatprep.mubr.f32.mxu0 0.0
  %386 = vmatmul.mubr.f32.gmra.mxu0 %v42
  %v387 = vpop.f32.mrf.mxu0
  %v388 = vadd.f32 %v179, %v387
  %v389 = vpop.f32.mrf.mxu0
  %390 = vmatprep.mubr.f32.mxu0 0.0
  %391 = vmatmul.mubr.f32.gmra.mxu0 %v43
  %v392 = vpop.f32.mrf.mxu0
  %v393 = vadd.f32 %v179, %v392
  %v394 = vpop.f32.mrf.mxu0
  %395 = vmatprep.mubr.f32.mxu0 0.0
  %396 = vmatmul.mubr.f32.gmra.mxu0 %v44
  %v397 = vpop.f32.mrf.mxu0
  %v398 = vadd.f32 %v179, %v397
  %v399 = vpop.f32.mrf.mxu0
  %400 = vmatprep.mubr.f32.mxu0 0.0
  %401 = vmatmul.mubr.f32.gmra.mxu0 %v45
  %v402 = vpop.f32.mrf.mxu0
  %v403 = vadd.f32 %v179, %v402
  %v404 = vpop.f32.mrf.mxu0
  %405 = vmatprep.mubr.f32.mxu0 0.0
  %406 = vmatmul.mubr.f32.gmra.mxu0 %v46
  %v407 = vpop.f32.mrf.mxu0
  %v408 = vadd.f32 %v179, %v407
  %v409 = vpop.f32.mrf.mxu0
  %410 = vmatprep.mubr.f32.mxu0 0.0
  %411 = vmatmul.mubr.f32.gmra.mxu0 %v47
  %v412 = vpop.f32.mrf.mxu0
  %v413 = vadd.f32 %v179, %v412
  %v414 = vpop.f32.mrf.mxu0
  %415 = vmatprep.mubr.f32.mxu0 0.0
  %416 = vmatmul.mubr.f32.gmra.mxu0 %v48
  %v417 = vpop.f32.mrf.mxu0
  %v418 = vadd.f32 %v179, %v417
  %v419 = vpop.f32.mrf.mxu0
  %420 = vmatprep.mubr.f32.mxu0 0.0
  %421 = vmatmul.mubr.f32.gmra.mxu0 %v49
  %v422 = vpop.f32.mrf.mxu0
  %v423 = vadd.f32 %v179, %v422
  %v424 = vpop.f32.mrf.mxu0
  %425 = vmatprep.mubr.f32.mxu0 0.0
  %426 = vmatmul.mubr.f32.gmra.mxu0 %v50
  %v427 = vpop.f32.mrf.mxu0
  %v428 = vadd.f32 %v179, %v427
  %v429 = vpop.f32.mrf.mxu0
  %430 = vmatprep.mubr.f32.mxu0 0.0
  %431 = vmatmul.mubr.f32.gmra.mxu0 %v51
  %v432 = vpop.f32.mrf.mxu0
  %v433 = vadd.f32 %v179, %v432
  %v434 = vpop.f32.mrf.mxu0
  %435 = vmatprep.mubr.f32.mxu0 0.0
  %436 = vmatmul.mubr.f32.gmra.mxu0 %v52
  %v437 = vpop.f32.mrf.mxu0
  %v438 = vadd.f32 %v179, %v437
  %v439 = vpop.f32.mrf.mxu0
  %440 = vmatprep.mubr.f32.mxu0 0.0
  %441 = vmatmul.mubr.f32.gmra.mxu0 %v53
  %v442 = vpop.f32.mrf.mxu0
  %v443 = vadd.f32 %v179, %v442
  %v444 = vpop.f32.mrf.mxu0
  %445 = vmatprep.mubr.f32.mxu0 0.0
  %446 = vmatmul.mubr.f32.gmra.mxu0 %v54
  %v447 = vpop.f32.mrf.mxu0
  %v448 = vadd.f32 %v179, %v447
  %v449 = vpop.f32.mrf.mxu0
  %450 = vmatprep.mubr.f32.mxu0 0.0
  %451 = vmatmul.mubr.f32.gmra.mxu0 %v55
  %v452 = vpop.f32.mrf.mxu0
  %v453 = vadd.f32 %v179, %v452
  %v454 = vpop.f32.mrf.mxu0
  %455 = vmatprep.mubr.f32.mxu0 0.0
  %456 = vmatmul.mubr.f32.gmra.mxu0 %v56
  %v457 = vpop.f32.mrf.mxu0
  %v458 = vadd.f32 %v179, %v457
  %v459 = vpop.f32.mrf.mxu0
  %460 = vmatprep.mubr.f32.mxu0 0.0
  %461 = vmatmul.mubr.f32.gmra.mxu0 %v57
  %v462 = vpop.f32.mrf.mxu0
  %v463 = vadd.f32 %v179, %v462
  %v464 = vpop.f32.mrf.mxu0
  %465 = vmatprep.mubr.f32.mxu0 0.0
  %466 = vmatmul.mubr.f32.gmra.mxu0 %v58
  %v467 = vpop.f32.mrf.mxu0
  %v468 = vadd.f32 %v179, %v467
  %v469 = vpop.f32.mrf.mxu0
  %470 = vmatprep.mubr.f32.mxu0 0.0
  %471 = vmatmul.mubr.f32.gmra.mxu0 %v59
  %v472 = vpop.f32.mrf.mxu0
  %v473 = vadd.f32 %v179, %v472
  %v474 = vpop.f32.mrf.mxu0
  %475 = vmatprep.mubr.f32.mxu0 0.0
  %476 = vmatmul.mubr.f32.gmra.mxu0 %v60
  %v477 = vpop.f32.mrf.mxu0
  %v478 = vadd.f32 %v179, %v477
  %v479 = vpop.f32.mrf.mxu0
  %480 = vmatprep.mubr.f32.mxu0 0.0
  %481 = vmatmul.mubr.f32.gmra.mxu0 %v61
  %v482 = vpop.f32.mrf.mxu0
  %v483 = vadd.f32 %v179, %v482
  %v484 = vpop.f32.mrf.mxu0
  %485 = vmatprep.mubr.f32.mxu0 0.0
  %486 = vmatmul.mubr.f32.gmra.mxu0 %v62
  %v487 = vpop.f32.mrf.mxu0
  %v488 = vadd.f32 %v179, %v487
  %v489 = vpop.f32.mrf.mxu0
  %490 = vmatprep.mubr.f32.mxu0 0.0
  %491 = vmatmul.mubr.f32.gmra.mxu0 %v63
  %v492 = vpop.f32.mrf.mxu0
  %v493 = vadd.f32 %v179, %v492
  %v494 = vpop.f32.mrf.mxu0
  %495 = vmatprep.mubr.f32.mxu0 0.0
  %496 = vmatmul.mubr.f32.gmra.mxu0 %v64
  %v497 = vpop.f32.mrf.mxu0
  %v498 = vadd.f32 %v179, %v497
  %v499 = vpop.f32.mrf.mxu0
  %500 = vmatprep.mubr.f32.mxu0 0.0
  %501 = vmatmul.mubr.f32.gmra.mxu0 %v65
  %v502 = vpop.f32.mrf.mxu0
  %v503 = vadd.f32 %v179, %v502
  %v504 = vpop.f32.mrf.mxu0
  %505 = vmatprep.mubr.f32.mxu0 0.0
  %506 = vmatmul.mubr.f32.gmra.mxu0 %v66
  %v507 = vpop.f32.mrf.mxu0
  %v508 = vadd.f32 %v179, %v507
  %v509 = vpop.f32.mrf.mxu0
  %510 = vmatprep.mubr.f32.mxu0 0.0
  %511 = vmatmul.mubr.f32.gmra.mxu0 %v67
  %v512 = vpop.f32.mrf.mxu0
  %v513 = vadd.f32 %v179, %v512
  %v514 = vpop.f32.mrf.mxu0
  %515 = vmatprep.mubr.f32.mxu0 0.0
  %516 = vmatmul.mubr.f32.gmra.mxu0 %v68
  %v517 = vpop.f32.mrf.mxu0
  %v518 = vadd.f32 %v179, %v517
  %v519 = vpop.f32.mrf.mxu0
  %520 = vmatprep.mubr.f32.mxu0 0.0
  %521 = vmatmul.mubr.f32.gmra.mxu0 %v69
  %v522 = vpop.f32.mrf.mxu0
  %v523 = vadd.f32 %v179, %v522
  %v524 = vpop.f32.mrf.mxu0
  %525 = vmatprep.mubr.f32.mxu0 0.0
  %526 = vmatmul.mubr.f32.gmra.mxu0 %v70
  %v527 = vpop.f32.mrf.mxu0
  %v528 = vadd.f32 %v179, %v527
  %v529 = vpop.f32.mrf.mxu0
  %530 = vmatprep.mubr.f32.mxu0 0.0
  %531 = vmatmul.mubr.f32.gmra.mxu0 %v71
  %v532 = vpop.f32.mrf.mxu0
  %v533 = vadd.f32 %v179, %v532
  %v534 = vpop.f32.mrf.mxu0
  %535 = vmatprep.mubr.f32.mxu0 0.0
  %536 = vmatmul.mubr.f32.gmra.mxu0 %v72
  %v537 = vpop.f32.mrf.mxu0
  %v538 = vadd.f32 %v179, %v537
  %v539 = vpop.f32.mrf.mxu0
  %540 = vmatprep.mubr.f32.mxu0 0.0
  %541 = vmatmul.mubr.f32.gmra.mxu0 %v73
  %v542 = vpop.f32.mrf.mxu0
  %v543 = vadd.f32 %v179, %v542
  %v544 = vpop.f32.mrf.mxu0
  %545 = vmatprep.mubr.f32.mxu0 0.0
  %546 = vmatmul.mubr.f32.gmra.mxu0 %v74
  %v547 = vpop.f32.mrf.mxu0
  %v548 = vadd.f32 %v179, %v547
  %v549 = vpop.f32.mrf.mxu0
  %550 = vmatprep.mubr.f32.mxu0 0.0
  %551 = vmatmul.mubr.f32.gmra.mxu0 %v75
  %v552 = vpop.f32.mrf.mxu0
  %v553 = vadd.f32 %v179, %v552
  %v554 = vpop.f32.mrf.mxu0
  %555 = vmatprep.mubr.f32.mxu0 0.0
  %556 = vmatmul.mubr.f32.gmra.mxu0 %v76
  %v557 = vpop.f32.mrf.mxu0
  %v558 = vadd.f32 %v179, %v557
  %v559 = vpop.f32.mrf.mxu0
  %560 = vmatprep.mubr.f32.mxu0 0.0
  %561 = vmatmul.mubr.f32.gmra.mxu0 %v77
  %v562 = vpop.f32.mrf.mxu0
  %v563 = vadd.f32 %v179, %v562
  %v564 = vpop.f32.mrf.mxu0
  %565 = vmatprep.mubr.f32.mxu0 0.0
  %566 = vmatmul.mubr.f32.gmra.mxu0 %v78
  %v567 = vpop.f32.mrf.mxu0
  %v568 = vadd.f32 %v179, %v567
  %v569 = vpop.f32.mrf.mxu0
  %570 = vmatprep.mubr.f32.mxu0 0.0
  %571 = vmatmul.mubr.f32.gmra.mxu0 %v79
  %v572 = vpop.f32.mrf.mxu0
  %v573 = vadd.f32 %v179, %v572
  %v574 = vpop.f32.mrf.mxu0
  %575 = vmatprep.mubr.f32.mxu0 0.0
  %576 = vmatmul.mubr.f32.gmra.mxu0 %v80
  %v577 = vpop.f32.mrf.mxu0
  %v578 = vadd.f32 %v179, %v577
  %v579 = vpop.f32.mrf.mxu0
  %580 = vmatprep.mubr.f32.mxu0 0.0
  %581 = vmatmul.mubr.f32.gmra.mxu0 %v81
  %v582 = vpop.f32.mrf.mxu0
  %v583 = vadd.f32 %v179, %v582
  %v584 = vpop.f32.mrf.mxu0
  %585 = vmatprep.mubr.f32.mxu0 0.0
  %586 = vmatmul.mubr.f32.gmra.mxu0 %v82
  %v587 = vpop.f32.mrf.mxu0
  %v588 = vadd.f32 %v179, %v587
  %v589 = vpop.f32.mrf.mxu0
  %590 = vmatprep.mubr.f32.mxu0 0.0
  %591 = vmatmul.mubr.f32.gmra.mxu0 %v83
  %v592 = vpop.f32.mrf.mxu0
  %v593 = vadd.f32 %v179, %v592
  %v594 = vpop.f32.mrf.mxu0
  %595 = vmatprep.mubr.f32.mxu0 0.0
  %596 = vmatmul.mubr.f32.gmra.mxu0 %v84
  %v597 = vpop.f32.mrf.mxu0
  %v598 = vadd.f32 %v179, %v597
  %v599 = vpop.f32.mrf.mxu0
  %600 = vmatprep.mubr.f32.mxu0 0.0
  %601 = vmatmul.mubr.f32.gmra.mxu0 %v85
  %v602 = vpop.f32.mrf.mxu0
  %v603 = vadd.f32 %v179, %v602
  %v604 = vpop.f32.mrf.mxu0
  %605 = vmatprep.mubr.f32.mxu0 0.0
  %606 = vmatmul.mubr.f32.gmra.mxu0 %v86
  %v607 = vpop.f32.mrf.mxu0
  %v608 = vadd.f32 %v179, %v607
  %v609 = vpop.f32.mrf.mxu0
  %610 = vmatprep.mubr.f32.mxu0 0.0
  %611 = vmatmul.mubr.f32.gmra.mxu0 %v87
  %v612 = vpop.f32.mrf.mxu0
  %v613 = vadd.f32 %v179, %v612
  %v614 = vpop.f32.mrf.mxu0
  %615 = vmatprep.mubr.f32.mxu0 0.0
  %616 = vmatmul.mubr.f32.gmra.mxu0 %v88
  %v617 = vpop.f32.mrf.mxu0
  %v618 = vadd.f32 %v179, %v617
  %v619 = vpop.f32.mrf.mxu0
  %620 = vmatprep.mubr.f32.mxu0 0.0
  %621 = vmatmul.mubr.f32.gmra.mxu0 %v89
  %v622 = vpop.f32.mrf.mxu0
  %v623 = vadd.f32 %v179, %v622
  %v624 = vpop.f32.mrf.mxu0
  %625 = vmatprep.mubr.f32.mxu0 0.0
  %626 = vmatmul.mubr.f32.gmra.mxu0 %v90
  %v627 = vpop.f32.mrf.mxu0
  %v628 = vadd.f32 %v179, %v627
  %v629 = vpop.f32.mrf.mxu0
  %630 = vmatprep.mubr.f32.mxu0 0.0
  %631 = vmatmul.mubr.f32.gmra.mxu0 %v91
  %v632 = vpop.f32.mrf.mxu0
  %v633 = vadd.f32 %v179, %v632
  %v634 = vpop.f32.mrf.mxu0
  %635 = vmatprep.mubr.f32.mxu0 0.0
  %636 = vmatmul.mubr.f32.gmra.mxu0 %v92
  %v637 = vpop.f32.mrf.mxu0
  %v638 = vadd.f32 %v179, %v637
  %v639 = vpop.f32.mrf.mxu0
  %640 = vmatprep.mubr.f32.mxu0 0.0
  %641 = vmatmul.mubr.f32.gmra.mxu0 %v93
  %v642 = vpop.f32.mrf.mxu0
  %v643 = vadd.f32 %v179, %v642
  %v644 = vpop.f32.mrf.mxu0
  %645 = vmatprep.mubr.f32.mxu0 0.0
  %646 = vmatmul.mubr.f32.gmra.mxu0 %v94
  %v647 = vpop.f32.mrf.mxu0
  %v648 = vadd.f32 %v179, %v647
  %v649 = vpop.f32.mrf.mxu0
  %650 = vmatprep.mubr.f32.mxu0 0.0
  %651 = vmatmul.mubr.f32.gmra.mxu0 %v95
  %v652 = vpop.f32.mrf.mxu0
  %v653 = vadd.f32 %v179, %v652
  %v654 = vpop.f32.mrf.mxu0
  %655 = vmatprep.mubr.f32.mxu0 0.0
  %656 = vmatmul.mubr.f32.gmra.mxu0 %v96
  %v657 = vpop.f32.mrf.mxu0
  %v658 = vadd.f32 %v179, %v657
  %v659 = vpop.f32.mrf.mxu0
  %660 = vmatprep.mubr.f32.mxu0 0.0
  %661 = vmatmul.mubr.f32.gmra.mxu0 %v97
  %v662 = vpop.f32.mrf.mxu0
  %v663 = vadd.f32 %v179, %v662
  %v664 = vpop.f32.mrf.mxu0
  %665 = vmatprep.mubr.f32.mxu0 0.0
  %666 = vmatmul.mubr.f32.gmra.mxu0 %v98
  %v667 = vpop.f32.mrf.mxu0
  %v668 = vadd.f32 %v179, %v667
  %v669 = vpop.f32.mrf.mxu0
  %670 = vmatprep.mubr.f32.mxu0 0.0
  %671 = vmatmul.mubr.f32.gmra.mxu0 %v99
  %v672 = vpop.f32.mrf.mxu0
  %v673 = vadd.f32 %v179, %v672
  %v674 = vpop.f32.mrf.mxu0
  %675 = vmatprep.mubr.f32.mxu0 0.0
  %676 = vmatmul.mubr.f32.gmra.mxu0 %v100
  %v677 = vpop.f32.mrf.mxu0
  %v678 = vadd.f32 %v179, %v677
  %v679 = vpop.f32.mrf.mxu0
  %680 = vmatprep.mubr.f32.mxu0 0.0
  %681 = vmatmul.mubr.f32.gmra.mxu0 %v101
  %v682 = vpop.f32.mrf.mxu0
  %v683 = vadd.f32 %v179, %v682
  %v684 = vpop.f32.mrf.mxu0
  %685 = vmatprep.mubr.f32.mxu0 0.0
  %686 = vmatmul.mubr.f32.gmra.mxu0 %v102
  %v687 = vpop.f32.mrf.mxu0
  %v688 = vadd.f32 %v179, %v687
  %v689 = vpop.f32.mrf.mxu0
  %690 = vmatprep.mubr.f32.mxu0 0.0
  %691 = vmatmul.mubr.f32.gmra.mxu0 %v103
  %v692 = vpop.f32.mrf.mxu0
  %v693 = vadd.f32 %v179, %v692
  %v694 = vpop.f32.mrf.mxu0
  %695 = vmatprep.mubr.f32.mxu0 0.0
  %696 = vmatmul.mubr.f32.gmra.mxu0 %v104
  %v697 = vpop.f32.mrf.mxu0
  %v698 = vadd.f32 %v179, %v697
  %v699 = vpop.f32.mrf.mxu0
  %700 = vmatprep.mubr.f32.mxu0 0.0
  %701 = vmatmul.mubr.f32.gmra.mxu0 %v105
  %v702 = vpop.f32.mrf.mxu0
  %v703 = vadd.f32 %v179, %v702
  %v704 = vpop.f32.mrf.mxu0
  %705 = vmatprep.mubr.f32.mxu0 0.0
  %706 = vmatmul.mubr.f32.gmra.mxu0 %v106
  %v707 = vpop.f32.mrf.mxu0
  %v708 = vadd.f32 %v179, %v707
  %v709 = vpop.f32.mrf.mxu0
  %710 = vmatprep.mubr.f32.mxu0 0.0
  %711 = vmatmul.mubr.f32.gmra.mxu0 %v107
  %v712 = vpop.f32.mrf.mxu0
  %v713 = vadd.f32 %v179, %v712
  %v714 = vpop.f32.mrf.mxu0
  %715 = vmatprep.mubr.f32.mxu0 0.0
  %716 = vmatmul.mubr.f32.gmra.mxu0 %v108
  %v717 = vpop.f32.mrf.mxu0
  %v718 = vadd.f32 %v179, %v717
  %v719 = vpop.f32.mrf.mxu0
  %720 = vmatprep.mubr.f32.mxu0 0.0
  %721 = vmatmul.mubr.f32.gmra.mxu0 %v109
  %v722 = vpop.f32.mrf.mxu0
  %v723 = vadd.f32 %v179, %v722
  %v724 = vpop.f32.mrf.mxu0
  %725 = vmatprep.mubr.f32.mxu0 0.0
  %726 = vmatmul.mubr.f32.gmra.mxu0 %v110
  %v727 = vpop.f32.mrf.mxu0
  %v728 = vadd.f32 %v179, %v727
  %v729 = vpop.f32.mrf.mxu0
  %730 = vmatprep.mubr.f32.mxu0 0.0
  %731 = vmatmul.mubr.f32.gmra.mxu0 %v111
  %v732 = vpop.f32.mrf.mxu0
  %v733 = vadd.f32 %v179, %v732
  %v734 = vpop.f32.mrf.mxu0
  %735 = vmatprep.mubr.f32.mxu0 0.0
  %736 = vmatmul.mubr.f32.gmra.mxu0 %v112
  %v737 = vpop.f32.mrf.mxu0
  %v738 = vadd.f32 %v179, %v737
  %v739 = vpop.f32.mrf.mxu0
  %740 = vmatprep.mubr.f32.mxu0 0.0
  %741 = vmatmul.mubr.f32.gmra.mxu0 %v113
  %v742 = vpop.f32.mrf.mxu0
  %v743 = vadd.f32 %v179, %v742
  %v744 = vpop.f32.mrf.mxu0
  %745 = vmatprep.mubr.f32.mxu0 0.0
  %746 = vmatmul.mubr.f32.gmra.mxu0 %v114
  %v747 = vpop.f32.mrf.mxu0
  %v748 = vadd.f32 %v179, %v747
  %v749 = vpop.f32.mrf.mxu0
  %750 = vmatprep.mubr.f32.mxu0 0.0
  %751 = vmatmul.mubr.f32.gmra.mxu0 %v115
  %v752 = vpop.f32.mrf.mxu0
  %v753 = vadd.f32 %v179, %v752
  %v754 = vpop.f32.mrf.mxu0
  %755 = vmatprep.mubr.f32.mxu0 0.0
  %756 = vmatmul.mubr.f32.gmra.mxu0 %v116
  %v757 = vpop.f32.mrf.mxu0
  %v758 = vadd.f32 %v179, %v757
  %v759 = vpop.f32.mrf.mxu0
  %760 = vmatprep.mubr.f32.mxu0 0.0
  %761 = vmatmul.mubr.f32.gmra.mxu0 %v117
  %v762 = vpop.f32.mrf.mxu0
  %v763 = vadd.f32 %v179, %v762
  %v764 = vpop.f32.mrf.mxu0
  %765 = vmatprep.mubr.f32.mxu0 0.0
  %766 = vmatmul.mubr.f32.gmra.mxu0 %v118
  %v767 = vpop.f32.mrf.mxu0
  %v768 = vadd.f32 %v179, %v767
  %v769 = vpop.f32.mrf.mxu0
  %770 = vmatprep.mubr.f32.mxu0 0.0
  %771 = vmatmul.mubr.f32.gmra.mxu0 %v119
  %v772 = vpop.f32.mrf.mxu0
  %v773 = vadd.f32 %v179, %v772
  %v774 = vpop.f32.mrf.mxu0
  %775 = vmatprep.mubr.f32.mxu0 0.0
  %776 = vmatmul.mubr.f32.gmra.mxu0 %v120
  %v777 = vpop.f32.mrf.mxu0
  %v778 = vadd.f32 %v179, %v777
  %v779 = vpop.f32.mrf.mxu0
  %780 = vmatprep.mubr.f32.mxu0 0.0
  %781 = vmatmul.mubr.f32.gmra.mxu0 %v121
  %v782 = vpop.f32.mrf.mxu0
  %v783 = vadd.f32 %v179, %v782
  %v784 = vpop.f32.mrf.mxu0
  %785 = vmatprep.mubr.f32.mxu0 0.0
  %786 = vmatmul.mubr.f32.gmra.mxu0 %v122
  %v787 = vpop.f32.mrf.mxu0
  %v788 = vadd.f32 %v179, %v787
  %v789 = vpop.f32.mrf.mxu0
  %790 = vmatprep.mubr.f32.mxu0 0.0
  %791 = vmatmul.mubr.f32.gmra.mxu0 %v123
  %v792 = vpop.f32.mrf.mxu0
  %v793 = vadd.f32 %v179, %v792
  %v794 = vpop.f32.mrf.mxu0
  %795 = vmatprep.mubr.f32.mxu0 0.0
  %796 = vmatmul.mubr.f32.gmra.mxu0 %v124
  %v797 = vpop.f32.mrf.mxu0
  %v798 = vadd.f32 %v179, %v797
  %v799 = vpop.f32.mrf.mxu0
  %800 = vmatprep.mubr.f32.mxu0 0.0
  %801 = vmatmul.mubr.f32.gmra.mxu0 %v125
  %v802 = vpop.f32.mrf.mxu0
  %v803 = vadd.f32 %v179, %v802
  %v804 = vpop.f32.mrf.mxu0
  %805 = vmatprep.mubr.f32.mxu0 0.0
  %806 = vmatmul.mubr.f32.gmra.mxu0 %v126
  %v807 = vpop.f32.mrf.mxu0
  %v808 = vadd.f32 %v179, %v807
  %v809 = vpop.f32.mrf.mxu0
  %810 = vmatprep.mubr.f32.mxu0 0.0
  %811 = vmatmul.mubr.f32.gmra.mxu0 %v127
  %v812 = vpop.f32.mrf.mxu0
  %v813 = vadd.f32 %v179, %v812
  %v814 = vpop.f32.mrf.mxu0
  %815 = vmatprep.mubr.f32.mxu0 0.0
  %816 = vmatmul.mubr.f32.gmra.mxu0 %v128
  %v817 = vpop.f32.mrf.mxu0
  %v818 = vadd.f32 %v179, %v817
  %v819 = vpop.f32.mrf.mxu0
  %820 = vmatprep.mubr.f32.mxu0 0.0
  %821 = vmatmul.mubr.f32.gmra.mxu0 %v129
  %v822 = vpop.f32.mrf.mxu0
  %v823 = vadd.f32 %v179, %v822
  %v824 = vpop.f32.mrf.mxu0
  %825 = vmatprep.mubr.f32.mxu0 0.0
  %826 = vmatmul.mubr.f32.gmra.mxu0 %v130
  %v827 = vpop.f32.mrf.mxu0
  %v828 = vadd.f32 %v179, %v827
  %v829 = vpop.f32.mrf.mxu0
  %830 = vmatprep.mubr.f32.mxu0 0.0
  %831 = vmatmul.mubr.f32.gmra.mxu0 %v131
  %v832 = vpop.f32.mrf.mxu0
  %v833 = vadd.f32 %v179, %v832
  %v834 = vpop.f32.mrf.mxu0
  %835 = vmatprep.mubr.f32.mxu0 0.0
  %836 = vmatmul.mubr.f32.gmra.mxu0 %v132
  %v837 = vpop.f32.mrf.mxu0
  %v838 = vadd.f32 %v179, %v837
  %v839 = vpop.f32.mrf.mxu0
  %840 = vmatprep.mubr.f32.mxu0 0.0
  %841 = vmatmul.mubr.f32.gmra.mxu0 %v133
  %v842 = vpop.f32.mrf.mxu0
  %v843 = vadd.f32 %v179, %v842
  %v844 = vpop.f32.mrf.mxu0
  %845 = vmatprep.mubr.f32.mxu0 0.0
  %846 = vmatmul.mubr.f32.gmra.mxu0 %v134
  %v847 = vpop.f32.mrf.mxu0
  %v848 = vadd.f32 %v179, %v847
  %v849 = vpop.f32.mrf.mxu0
  %850 = vmatprep.mubr.f32.mxu0 0.0
  %851 = vmatmul.mubr.f32.gmra.mxu0 %v135
  %v852 = vpop.f32.mrf.mxu0
  %v853 = vadd.f32 %v179, %v852
  %v854 = vpop.f32.mrf.mxu0
  %855 = vmatprep.mubr.f32.mxu0 0.0
  %856 = vmatmul.mubr.f32.gmra.mxu0 %v136
  %v857 = vpop.f32.mrf.mxu0
  %v858 = vadd.f32 %v179, %v857
  %v859 = vpop.f32.mrf.mxu0
  %860 = vmatprep.mubr.f32.mxu0 0.0
  %861 = vmatmul.mubr.f32.gmra.mxu0 %v137
  %v862 = vpop.f32.mrf.mxu0
  %v863 = vadd.f32 %v179, %v862
  %v864 = vpop.f32.mrf.mxu0
  %865 = vmatprep.mubr.f32.mxu0 0.0
  %866 = vmatmul.mubr.f32.gmra.mxu0 %v138
  %v867 = vpop.f32.mrf.mxu0
  %v868 = vadd.f32 %v179, %v867
  %v869 = vpop.f32.mrf.mxu0
  %870 = vmatprep.mubr.f32.mxu0 0.0
  %871 = vmatmul.mubr.f32.gmra.mxu0 %v139
  %v872 = vpop.f32.mrf.mxu0
  %v873 = vadd.f32 %v179, %v872
  %v874 = vpop.f32.mrf.mxu0
  %875 = vmatprep.mubr.f32.mxu0 0.0
  %876 = vmatmul.mubr.f32.gmra.mxu0 %v140
  %v877 = vpop.f32.mrf.mxu0
  %v878 = vadd.f32 %v179, %v877
  %v879 = vpop.f32.mrf.mxu0
  %880 = vmatprep.mubr.f32.mxu0 0.0
  %881 = vmatmul.mubr.f32.gmra.mxu0 %v141
  %v882 = vpop.f32.mrf.mxu0
  %v883 = vadd.f32 %v179, %v882
  %v884 = vpop.f32.mrf.mxu0
  %885 = vmatprep.mubr.f32.mxu0 0.0
  %886 = vmatmul.mubr.f32.gmra.mxu0 %v142
  %v887 = vpop.f32.mrf.mxu0
  %v888 = vadd.f32 %v179, %v887
  %v889 = vpop.f32.mrf.mxu0
  %890 = vmatprep.mubr.f32.mxu0 0.0
  %891 = vmatmul.mubr.f32.gmra.mxu0 %v143
  %v892 = vpop.f32.mrf.mxu0
  %v893 = vadd.f32 %v179, %v892
  %v894 = vpop.f32.mrf.mxu0
  %895 = vmatprep.mubr.f32.mxu0 0.0
  %896 = vmatmul.mubr.f32.gmra.mxu0 %v144
  %v897 = vpop.f32.mrf.mxu0
  %v898 = vadd.f32 %v179, %v897
  %v899 = vpop.f32.mrf.mxu0
  %900 = vmatprep.mubr.f32.mxu0 0.0
  %901 = vmatmul.mubr.f32.gmra.mxu0 %v145
  %v902 = vpop.f32.mrf.mxu0
  %v903 = vadd.f32 %v179, %v902
  %v904 = vpop.f32.mrf.mxu0
  %905 = vmatprep.mubr.f32.mxu0 0.0
  %906 = vmatmul.mubr.f32.gmra.mxu0 %v146
  %v907 = vpop.f32.mrf.mxu0
  %v908 = vadd.f32 %v179, %v907
  %v909 = vpop.f32.mrf.mxu0
  %910 = vmatprep.mubr.f32.mxu0 0.0
  %911 = vmatmul.mubr.f32.gmra.mxu0 %v147
  %v912 = vpop.f32.mrf.mxu0
  %v913 = vadd.f32 %v179, %v912
  %v914 = vpop.f32.mrf.mxu0
  %915 = vmatprep.mubr.f32.mxu0 0.0
  %916 = vmatmul.mubr.f32.gmra.mxu0 %v148
  %v917 = vpop.f32.mrf.mxu0
  %v918 = vadd.f32 %v179, %v917
  %v919 = vpop.f32.mrf.mxu0
  %920 = vmatprep.mubr.f32.mxu0 0.0
  %921 = vmatmul.mubr.f32.gmra.mxu0 %v149
  %v922 = vpop.f32.mrf.mxu0
  %v923 = vadd.f32 %v179, %v922
  %v924 = vpop.f32.mrf.mxu0
  %925 = vmatprep.mubr.f32.mxu0 0.0
  %926 = vmatmul.mubr.f32.gmra.mxu0 %v150
  %v927 = vpop.f32.mrf.mxu0
  %v928 = vadd.f32 %v179, %v927
  %v929 = vpop.f32.mrf.mxu0
  %930 = vmatprep.mubr.f32.mxu0 0.0
  %931 = vmatmul.mubr.f32.gmra.mxu0 %v151
  %v932 = vpop.f32.mrf.mxu0
  %v933 = vadd.f32 %v179, %v932
  %v934 = vpop.f32.mrf.mxu0
  %935 = vmatprep.mubr.f32.mxu0 0.0
  %936 = vmatmul.mubr.f32.gmra.mxu0 %v152
  %v937 = vpop.f32.mrf.mxu0
  %v938 = vadd.f32 %v179, %v937
  %v939 = vpop.f32.mrf.mxu0
  %940 = vmatprep.mubr.f32.mxu0 0.0
  %941 = vmatmul.mubr.f32.gmra.mxu0 %v153
  %v942 = vpop.f32.mrf.mxu0
  %v943 = vadd.f32 %v179, %v942
  %v944 = vpop.f32.mrf.mxu0
  %945 = vmatprep.mubr.f32.mxu0 0.0
  %946 = vmatmul.mubr.f32.gmra.mxu0 %v154
  %v947 = vpop.f32.mrf.mxu0
  %v948 = vadd.f32 %v179, %v947
  %v949 = vpop.f32.mrf.mxu0
  %950 = vmatprep.mubr.f32.mxu0 0.0
  %951 = vmatmul.mubr.f32.gmra.mxu0 %v155
  %v952 = vpop.f32.mrf.mxu0
  %v953 = vadd.f32 %v179, %v952
  %v954 = vpop.f32.mrf.mxu0
  %955 = vmatprep.mubr.f32.mxu0 0.0
  %956 = vmatmul.mubr.f32.gmra.mxu0 %v156
  %v957 = vpop.f32.mrf.mxu0
  %v958 = vadd.f32 %v179, %v957
  %v959 = vpop.f32.mrf.mxu0
  %960 = vmatprep.mubr.f32.mxu0 0.0
  %961 = vmatmul.mubr.f32.gmra.mxu0 %v157
  %v962 = vpop.f32.mrf.mxu0
  %v963 = vadd.f32 %v179, %v962
  %v964 = vpop.f32.mrf.mxu0
  %965 = vdwg.mxu0
  %v966 = vmax.f32 %v248, 0.0
  %v967 = vmax.f32 %v253, 0.0
  %v968 = vmax.f32 %v258, 0.0
  %v969 = vmax.f32 %v263, 0.0
  %v970 = vmax.f32 %v268, 0.0
  %v971 = vmax.f32 %v273, 0.0
  %v972 = vmax.f32 %v278, 0.0
  %v973 = vmax.f32 %v283, 0.0
  %v974 = vmax.f32 %v288, 0.0
  %v975 = vmax.f32 %v293, 0.0
  %v976 = vmax.f32 %v298, 0.0
  %v977 = vmax.f32 %v303, 0.0
  %v978 = vmax.f32 %v308, 0.0
  %v979 = vmax.f32 %v313, 0.0
  %v980 = vmax.f32 %v318, 0.0
  %v981 = vmax.f32 %v323, 0.0
  %v982 = vmax.f32 %v328, 0.0
  %v983 = vmax.f32 %v333, 0.0
  %v984 = vmax.f32 %v338, 0.0
  %v985 = vmax.f32 %v343, 0.0
  %v986 = vmax.f32 %v348, 0.0
  %v987 = vmax.f32 %v353, 0.0
  %v988 = vmax.f32 %v358, 0.0
  %v989 = vmax.f32 %v363, 0.0
  %v990 = vmax.f32 %v368, 0.0
  %v991 = vmax.f32 %v373, 0.0
  %v992 = vmax.f32 %v378, 0.0
  %v993 = vmax.f32 %v383, 0.0
  %v994 = vmax.f32 %v388, 0.0
  %v995 = vmax.f32 %v393, 0.0
  %v996 = vmax.f32 %v398, 0.0
  %v997 = vmax.f32 %v403, 0.0
  %v998 = vmax.f32 %v408, 0.0
  %v999 = vmax.f32 %v413, 0.0
  %v1000 = vmax.f32 %v418, 0.0
  %v1001 = vmax.f32 %v423, 0.0
  %v1002 = vmax.f32 %v428, 0.0
  %v1003 = vmax.f32 %v433, 0.0
  %v1004 = vmax.f32 %v438, 0.0
  %v1005 = vmax.f32 %v443, 0.0
  %v1006 = vmax.f32 %v448, 0.0
  %v1007 = vmax.f32 %v453, 0.0
  %v1008 = vmax.f32 %v458, 0.0
  %v1009 = vmax.f32 %v463, 0.0
  %v1010 = vmax.f32 %v468, 0.0
  %v1011 = vmax.f32 %v473, 0.0
  %v1012 = vmax.f32 %v478, 0.0
  %v1013 = vmax.f32 %v483, 0.0
  %v1014 = vmax.f32 %v488, 0.0
  %v1015 = vmax.f32 %v493, 0.0
  %v1016 = vmax.f32 %v498, 0.0
  %v1017 = vmax.f32 %v503, 0.0
  %v1018 = vmax.f32 %v508, 0.0
  %v1019 = vmax.f32 %v513, 0.0
  %v1020 = vmax.f32 %v518, 0.0
  %v1021 = vmax.f32 %v523, 0.0
  %v1022 = vmax.f32 %v528, 0.0
  %v1023 = vmax.f32 %v533, 0.0
  %v1024 = vmax.f32 %v538, 0.0
  %v1025 = vmax.f32 %v543, 0.0
  %v1026 = vmax.f32 %v548, 0.0
  %v1027 = vmax.f32 %v553, 0.0
  %v1028 = vmax.f32 %v558, 0.0
  %v1029 = vmax.f32 %v563, 0.0
  %v1030 = vmax.f32 %v568, 0.0
  %v1031 = vmax.f32 %v573, 0.0
  %v1032 = vmax.f32 %v578, 0.0
  %v1033 = vmax.f32 %v583, 0.0
  %v1034 = vmax.f32 %v588, 0.0
  %v1035 = vmax.f32 %v593, 0.0
  %v1036 = vmax.f32 %v598, 0.0
  %v1037 = vmax.f32 %v603, 0.0
  %v1038 = vmax.f32 %v608, 0.0
  %v1039 = vmax.f32 %v613, 0.0
  %v1040 = vmax.f32 %v618, 0.0
  %v1041 = vmax.f32 %v623, 0.0
  %v1042 = vmax.f32 %v628, 0.0
  %v1043 = vmax.f32 %v633, 0.0
  %v1044 = vmax.f32 %v638, 0.0
  %v1045 = vmax.f32 %v643, 0.0
  %v1046 = vmax.f32 %v648, 0.0
  %v1047 = vmax.f32 %v653, 0.0
  %v1048 = vmax.f32 %v658, 0.0
  %v1049 = vmax.f32 %v663, 0.0
  %v1050 = vmax.f32 %v668, 0.0
  %v1051 = vmax.f32 %v673, 0.0
  %v1052 = vmax.f32 %v678, 0.0
  %v1053 = vmax.f32 %v683, 0.0
  %v1054 = vmax.f32 %v688, 0.0
  %v1055 = vmax.f32 %v693, 0.0
  %v1056 = vmax.f32 %v698, 0.0
  %v1057 = vmax.f32 %v703, 0.0
  %v1058 = vmax.f32 %v708, 0.0
  %v1059 = vmax.f32 %v713, 0.0
  %v1060 = vmax.f32 %v718, 0.0
  %v1061 = vmax.f32 %v723, 0.0
  %v1062 = vmax.f32 %v728, 0.0
  %v1063 = vmax.f32 %v733, 0.0
  %v1064 = vmax.f32 %v738, 0.0
  %v1065 = vmax.f32 %v743, 0.0
  %v1066 = vmax.f32 %v748, 0.0
  %v1067 = vmax.f32 %v753, 0.0
  %v1068 = vmax.f32 %v758, 0.0
  %v1069 = vmax.f32 %v763, 0.0
  %v1070 = vmax.f32 %v768, 0.0
  %v1071 = vmax.f32 %v773, 0.0
  %v1072 = vmax.f32 %v778, 0.0
  %v1073 = vmax.f32 %v783, 0.0
  %v1074 = vmax.f32 %v788, 0.0
  %v1075 = vmax.f32 %v793, 0.0
  %v1076 = vmax.f32 %v798, 0.0
  %v1077 = vmax.f32 %v803, 0.0
  %v1078 = vmax.f32 %v808, 0.0
  %v1079 = vmax.f32 %v813, 0.0
  %v1080 = vmax.f32 %v818, 0.0
  %v1081 = vmax.f32 %v823, 0.0
  %v1082 = vmax.f32 %v828, 0.0
  %v1083 = vmax.f32 %v833, 0.0
  %v1084 = vmax.f32 %v838, 0.0
  %v1085 = vmax.f32 %v843, 0.0
  %v1086 = vmax.f32 %v848, 0.0
  %v1087 = vmax.f32 %v853, 0.0
  %v1088 = vmax.f32 %v858, 0.0
  %v1089 = vmax.f32 %v863, 0.0
  %v1090 = vmax.f32 %v868, 0.0
  %v1091 = vmax.f32 %v873, 0.0
  %v1092 = vmax.f32 %v878, 0.0
  %v1093 = vmax.f32 %v883, 0.0
  %v1094 = vmax.f32 %v888, 0.0
  %v1095 = vmax.f32 %v893, 0.0
  %v1096 = vmax.f32 %v898, 0.0
  %v1097 = vmax.f32 %v903, 0.0
  %v1098 = vmax.f32 %v908, 0.0
  %v1099 = vmax.f32 %v913, 0.0
  %v1100 = vmax.f32 %v918, 0.0
  %v1101 = vmax.f32 %v923, 0.0
  %v1102 = vmax.f32 %v928, 0.0
  %v1103 = vmax.f32 %v933, 0.0
  %v1104 = vmax.f32 %v938, 0.0
  %v1105 = vmax.f32 %v943, 0.0
  %v1106 = vmax.f32 %v948, 0.0
  %v1107 = vmax.f32 %v953, 0.0
  %v1108 = vmax.f32 %v958, 0.0
  %v1109 = vmax.f32 %v963, 0.0
  %v1110 = vmax.f32 %v966, %v1002
  %v1111 = vmax.f32 %v967, %v1003
  %v1112 = vmax.f32 %v968, %v1004
  %v1113 = vmax.f32 %v969, %v1005
  %v1114 = vmax.f32 %v970, %v1006
  %v1115 = vmax.f32 %v971, %v1007
  %v1116 = vmax.f32 %v972, %v1008
  %v1117 = vmax.f32 %v973, %v1009
  %v1118 = vmax.f32 %v974, %v1010
  %v1119 = vmax.f32 %v975, %v1011
  %v1120 = vmax.f32 %v976, %v1012
  %v1121 = vmax.f32 %v977, %v1013
  %v1122 = vmax.f32 %v978, %v1014
  %v1123 = vmax.f32 %v979, %v1015
  %v1124 = vmax.f32 %v980, %v1016
  %v1125 = vmax.f32 %v981, %v1017
  %v1126 = vmax.f32 %v982, %v1018
  %v1127 = vmax.f32 %v983, %v1019
  %v1128 = vmax.f32 %v984, %v1020
  %v1129 = vmax.f32 %v985, %v1021
  %v1130 = vmax.f32 %v986, %v1022
  %v1131 = vmax.f32 %v987, %v1023
  %v1132 = vmax.f32 %v988, %v1024
  %v1133 = vmax.f32 %v989, %v1025
  %v1134 = vmax.f32 %v990, %v1026
  %v1135 = vmax.f32 %v991, %v1027
  %v1136 = vmax.f32 %v992, %v1028
  %v1137 = vmax.f32 %v993, %v1029
  %v1138 = vmax.f32 %v994, %v1030
  %v1139 = vmax.f32 %v995, %v1031
  %v1140 = vmax.f32 %v996, %v1032
  %v1141 = vmax.f32 %v997, %v1033
  %v1142 = vmax.f32 %v998, %v1034
  %v1143 = vmax.f32 %v999, %v1035
  %v1144 = vmax.f32 %v1000, %v1036
  %v1145 = vmax.f32 %v1001, %v1037
  %v1146 = vmax.f32 %v1038, %v1074
  %v1147 = vmax.f32 %v1039, %v1075
  %v1148 = vmax.f32 %v1040, %v1076
  %v1149 = vmax.f32 %v1041, %v1077
  %v1150 = vmax.f32 %v1042, %v1078
  %v1151 = vmax.f32 %v1043, %v1079
  %v1152 = vmax.f32 %v1044, %v1080
  %v1153 = vmax.f32 %v1045, %v1081
  %v1154 = vmax.f32 %v1046, %v1082
  %v1155 = vmax.f32 %v1047, %v1083
  %v1156 = vmax.f32 %v1048, %v1084
  %v1157 = vmax.f32 %v1049, %v1085
  %v1158 = vmax.f32 %v1050, %v1086
  %v1159 = vmax.f32 %v1051, %v1087
  %v1160 = vmax.f32 %v1052, %v1088
  %v1161 = vmax.f32 %v1053, %v1089
  %v1162 = vmax.f32 %v1054, %v1090
  %v1163 = vmax.f32 %v1055, %v1091
  %v1164 = vmax.f32 %v1056, %v1092
  %v1165 = vmax.f32 %v1057, %v1093
  %v1166 = vmax.f32 %v1058, %v1094
  %v1167 = vmax.f32 %v1059, %v1095
  %v1168 = vmax.f32 %v1060, %v1096
  %v1169 = vmax.f32 %v1061, %v1097
  %v1170 = vmax.f32 %v1062, %v1098
  %v1171 = vmax.f32 %v1063, %v1099
  %v1172 = vmax.f32 %v1064, %v1100
  %v1173 = vmax.f32 %v1065, %v1101
  %v1174 = vmax.f32 %v1066, %v1102
  %v1175 = vmax.f32 %v1067, %v1103
  %v1176 = vmax.f32 %v1068, %v1104
  %v1177 = vmax.f32 %v1069, %v1105
  %v1178 = vmax.f32 %v1070, %v1106
  %v1179 = vmax.f32 %v1071, %v1107
  %v1180 = vmax.f32 %v1072, %v1108
  %v1181 = vmax.f32 %v1073, %v1109
  %v1182 = vmax.f32 %v1110, %v1146
  %v1183 = vmax.f32 %v1111, %v1147
  %v1184 = vmax.f32 %v1112, %v1148
  %v1185 = vmax.f32 %v1113, %v1149
  %v1186 = vmax.f32 %v1114, %v1150
  %v1187 = vmax.f32 %v1115, %v1151
  %v1188 = vmax.f32 %v1116, %v1152
  %v1189 = vmax.f32 %v1117, %v1153
  %v1190 = vmax.f32 %v1118, %v1154
  %v1191 = vmax.f32 %v1119, %v1155
  %v1192 = vmax.f32 %v1120, %v1156
  %v1193 = vmax.f32 %v1121, %v1157
  %v1194 = vmax.f32 %v1122, %v1158
  %v1195 = vmax.f32 %v1123, %v1159
  %v1196 = vmax.f32 %v1124, %v1160
  %v1197 = vmax.f32 %v1125, %v1161
  %v1198 = vmax.f32 %v1126, %v1162
  %v1199 = vmax.f32 %v1127, %v1163
  %v1200 = vmax.f32 %v1128, %v1164
  %v1201 = vmax.f32 %v1129, %v1165
  %v1202 = vmax.f32 %v1130, %v1166
  %v1203 = vmax.f32 %v1131, %v1167
  %v1204 = vmax.f32 %v1132, %v1168
  %v1205 = vmax.f32 %v1133, %v1169
  %v1206 = vmax.f32 %v1134, %v1170
  %v1207 = vmax.f32 %v1135, %v1171
  %v1208 = vmax.f32 %v1136, %v1172
  %v1209 = vmax.f32 %v1137, %v1173
  %v1210 = vmax.f32 %v1138, %v1174
  %v1211 = vmax.f32 %v1139, %v1175
  %v1212 = vmax.f32 %v1140, %v1176
  %v1213 = vmax.f32 %v1141, %v1177
  %v1214 = vmax.f32 %v1142, %v1178
  %v1215 = vmax.f32 %v1143, %v1179
  %v1216 = vmax.f32 %v1144, %v1180
  %v1217 = vmax.f32 %v1145, %v1181
  %1218 = vst [vmem:[%s3] sm:$0xff] %v1182
  %1219 = vst [vmem:[%s3 + $0x8] sm:$0xff] %v1183
  %1220 = vst [vmem:[%s3 + $0x10] sm:$0xff] %v1184
  %1221 = vst [vmem:[%s3 + $0x18] sm:$0xff] %v1185
  %1222 = vst [vmem:[%s3 + $0x20] sm:$0xff] %v1186
  %1223 = vst [vmem:[%s3 + $0x28] sm:$0xff] %v1187
  %1224 = vst [vmem:[%s3 + $0x30] sm:$0xff] %v1188
  %1225 = vst [vmem:[%s3 + $0x38] sm:$0xff] %v1189
  %1226 = vst [vmem:[%s3 + $0x40] sm:$0xff] %v1190
  %1227 = vst [vmem:[%s3 + $0x48] sm:$0xff] %v1191
  %1228 = vst [vmem:[%s3 + $0x50] sm:$0xff] %v1192
  %1229 = vst [vmem:[%s3 + $0x58] sm:$0xff] %v1193
  %1230 = vst [vmem:[%s3 + $0x60] sm:$0xff] %v1194
  %1231 = vst [vmem:[%s3 + $0x68] sm:$0xff] %v1195
  %1232 = vst [vmem:[%s3 + $0x70] sm:$0xff] %v1196
  %1233 = vst [vmem:[%s3 + $0x78] sm:$0xff] %v1197
  %1234 = vst [vmem:[%s3 + $0x80] sm:$0xff] %v1198
  %1235 = vst [vmem:[%s3 + $0x88] sm:$0xff] %v1199
  %1236 = vst [vmem:[%s3 + $0x90] sm:$0xff] %v1200
  %1237 = vst [vmem:[%s3 + $0x98] sm:$0xff] %v1201
  %1238 = vst [vmem:[%s3 + $0xa0] sm:$0xff] %v1202
  %1239 = vst [vmem:[%s3 + $0xa8] sm:$0xff] %v1203
  %1240 = vst [vmem:[%s3 + $0xb0] sm:$0xff] %v1204
  %1241 = vst [vmem:[%s3 + $0xb8] sm:$0xff] %v1205
  %1242 = vst [vmem:[%s3 + $0xc0] sm:$0xff] %v1206
  %1243 = vst [vmem:[%s3 + $0xc8] sm:$0xff] %v1207
  %1244 = vst [vmem:[%s3 + $0xd0] sm:$0xff] %v1208
  %1245 = vst [vmem:[%s3 + $0xd8] sm:$0xff] %v1209
  %1246 = vst [vmem:[%s3 + $0xe0] sm:$0xff] %v1210
  %1247 = vst [vmem:[%s3 + $0xe8] sm:$0xff] %v1211
  %1248 = vst [vmem:[%s3 + $0xf0] sm:$0xff] %v1212
  %1249 = vst [vmem:[%s3 + $0xf8] sm:$0xff] %v1213
  %1250 = vst [vmem:[%s3 + $0x100] sm:$0xff] %v1214
  %1251 = vst [vmem:[%s3 + $0x108] sm:$0xff] %v1215
  %1252 = vst [vmem:[%s3 + $0x110] sm:$0xff] %v1216
  %1253 = vst [vmem:[%s3 + $0x118] sm:$0xff] %v1217
  // Predicated region
  $region14: #{net_forward.2} parent=0 // pred_check
    _
  $region15: #{net_forward.2} parent=0 // pred_check_branch
    %1255 = sbr.rel (0) target = $region17
  $region16: #{net_forward.2} parent=0 // pred_region
    _
  $region17: #{net_forward.2} parent=0 // pred_fallthru
    _
  // Predicated region
  $region18: #{net_forward.2} parent=0 // pred_check
    _
  $region19: #{net_forward.2} parent=0 // pred_check_branch
    %1257 = sbr.rel (0) target = $region21
  $region20: #{net_forward.2} parent=0 // pred_region
    _
  $region21: #{net_forward.2} parent=0 // pred_fallthru
    _

// kernel: net_forward.3
$region0: #{net_forward.3}
  #allocation0 [shape = 'u32[]', space=smem, size = 0x4, offset = 0x4, fixed_abs, tag = 'smem constant byte address 0x4 - core index']
  #allocation1 [shape = 'u32[144,128]{1,0:T(1,128)}', space=vmem, size = 0x12000, scoped, tag = 'internal scratch']
  %s0 = inlined_call_operand.vmem [shape: f32[512,256], index: 0, kind: input, shape index: {}]
  %s1 = inlined_call_operand.vmem [shape: f32[256,128], index: 1, kind: input, shape index: {}]
  %s2 = inlined_call_operand.vmem [shape: f32[1,128], index: 2, kind: input, shape index: {}]
  %s3 = inlined_call_operand.vmem [shape: f32[16,128,128], index: 3, kind: input, shape index: {}]
  %s4 = inlined_call_operand.vmem [shape: f32[1,128], index: 4, kind: input, shape index: {}]
  %s5 = inlined_call_operand.vmem [shape: f32[128,128], index: 5, kind: input, shape index: {}]
  %s6 = inlined_call_operand.vmem [shape: f32[1,128], index: 6, kind: input, shape index: {}]
  %s7 = inlined_call_operand.vmem [shape: f32[128,128], index: 7, kind: input, shape index: {}]
  %s8 = inlined_call_operand.vmem [shape: f32[1,128], index: 8, kind: input, shape index: {}]
  %s9 = inlined_call_operand.hbm [shape: f32[2,10], index: 9, kind: output, shape index: {}]
  %s10 = sld [smem:[#allocation0]]
  $region46: #{net_forward.3} parent=0
    _
  %s12 = ssub.s32 1, %s10
  %s13 = scalar_select 0, %s12, %s10
  $region1: #{net_forward.3} parent=0
    #allocation2 [shape = 'u8[1024]{0}', space=vmem, size = 0x400, scoped, tag = 'output window, operand 0, single buffered']
    #allocation3 [shape = 's32[1]{0}', space=sflag, size = 0x4, scoped, tag = 'scoped memory for net_forward.3']
    %14 = vsyncpa [#allocation3], 0
    // Predicated region
    $region2: #{net_forward.3} parent=1 // pred_check
      _
    $region3: #{net_forward.3} parent=1 // pred_check_branch
      %16 = sbr.rel (0) target = $region5
    $region4: #{net_forward.3} parent=1 // pred_region
      _
    $region5: #{net_forward.3} parent=1 // pred_fallthru
      _
    // Predicated region
    $region6: #{net_forward.3} parent=1 // pred_check
      _
    $region7: #{net_forward.3} parent=1 // pred_check_branch
      %18 = sbr.rel (0) target = $region9
    $region8: #{net_forward.3} parent=1 // pred_region
      _
    $region9: #{net_forward.3} parent=1 // pred_fallthru
      _
    // Predicated region
    $region10: #{net_forward.3} parent=1 // pred_check
      _
    $region11: #{net_forward.3} parent=1 // pred_check_branch
      %20 = sbr.rel (0) target = $region13
    $region12: #{net_forward.3} parent=1 // pred_region
      _
    $region13: #{net_forward.3} parent=1 // pred_fallthru
      _
    // Predicated region
    $region14: #{net_forward.3} parent=1 // pred_check
      _
    $region15: #{net_forward.3} parent=1 // pred_check_branch
      %22 = sbr.rel (0) target = $region17
    $region16: #{net_forward.3} parent=1 // pred_region
      _
    $region17: #{net_forward.3} parent=1 // pred_fallthru
      _
    // Predicated region
    $region18: #{net_forward.3} parent=1 // pred_check
      _
    $region19: #{net_forward.3} parent=1 // pred_check_branch
      %24 = sbr.rel (0) target = $region21
    $region20: #{net_forward.3} parent=1 // pred_region
      _
    $region21: #{net_forward.3} parent=1 // pred_fallthru
      _
    // Predicated region
    $region22: #{net_forward.3} parent=1 // pred_check
      _
    $region23: #{net_forward.3} parent=1 // pred_check_branch
      %26 = sbr.rel (0) target = $region25
    $region24: #{net_forward.3} parent=1 // pred_region
      _
    $region25: #{net_forward.3} parent=1 // pred_fallthru
      _
    // Predicated region
    $region26: #{net_forward.3} parent=1 // pred_check
      _
    $region27: #{net_forward.3} parent=1 // pred_check_branch
      %28 = sbr.rel (0) target = $region29
    $region28: #{net_forward.3} parent=1 // pred_region
      _
    $region29: #{net_forward.3} parent=1 // pred_fallthru
      _
    // Predicated region
    $region30: #{net_forward.3} parent=1 // pred_check
      _
    $region31: #{net_forward.3} parent=1 // pred_check_branch
      %30 = sbr.rel (0) target = $region33
    $region32: #{net_forward.3} parent=1 // pred_region
      _
    $region33: #{net_forward.3} parent=1 // pred_fallthru
      _
    // Predicated region
    $region34: #{net_forward.3} parent=1 // pred_check
      _
    $region35: #{net_forward.3} parent=1 // pred_check_branch
      %32 = sbr.rel (0) target = $region37
    $region36: #{net_forward.3} parent=1 // pred_region
      _
    $region37: #{net_forward.3} parent=1 // pred_fallthru
      _
    %v33 = vld [vmem:[%s0] sm:$0xff]
    %v34 = vld [vmem:[%s0 + $0x8] sm:$0xff]
    %v35 = vld [vmem:[%s0 + $0x10] sm:$0xff]
    %v36 = vld [vmem:[%s0 + $0x18] sm:$0xff]
    %v37 = vld [vmem:[%s0 + $0x20] sm:$0xff]
    %v38 = vld [vmem:[%s0 + $0x28] sm:$0xff]
    %v39 = vld [vmem:[%s0 + $0x30] sm:$0xff]
    %v40 = vld [vmem:[%s0 + $0x38] sm:$0xff]
    %v41 = vld [vmem:[%s0 + $0x40] sm:$0xff]
    %v42 = vld [vmem:[%s0 + $0x48] sm:$0xff]
    %v43 = vld [vmem:[%s0 + $0x50] sm:$0xff]
    %v44 = vld [vmem:[%s0 + $0x58] sm:$0xff]
    %v45 = vld [vmem:[%s0 + $0x60] sm:$0xff]
    %v46 = vld [vmem:[%s0 + $0x68] sm:$0xff]
    %v47 = vld [vmem:[%s0 + $0x70] sm:$0xff]
    %v48 = vld [vmem:[%s0 + $0x78] sm:$0xff]
    %v49 = vld [vmem:[%s0 + $0x80] sm:$0xff]
    %v50 = vld [vmem:[%s0 + $0x88] sm:$0xff]
    %v51 = vld [vmem:[%s0 + $0x90] sm:$0xff]
    %v52 = vld [vmem:[%s0 + $0x98] sm:$0xff]
    %v53 = vld [vmem:[%s0 + $0xa0] sm:$0xff]
    %v54 = vld [vmem:[%s0 + $0xa8] sm:$0xff]
    %v55 = vld [vmem:[%s0 + $0xb0] sm:$0xff]
    %v56 = vld [vmem:[%s0 + $0xb8] sm:$0xff]
    %v57 = vld [vmem:[%s0 + $0xc0] sm:$0xff]
    %v58 = vld [vmem:[%s0 + $0xc8] sm:$0xff]
    %v59 = vld [vmem:[%s0 + $0xd0] sm:$0xff]
    %v60 = vld [vmem:[%s0 + $0xd8] sm:$0xff]
    %v61 = vld [vmem:[%s0 + $0xe0] sm:$0xff]
    %v62 = vld [vmem:[%s0 + $0xe8] sm:$0xff]
    %v63 = vld [vmem:[%s0 + $0xf0] sm:$0xff]
    %v64 = vld [vmem:[%s0 + $0xf8] sm:$0xff]
    %v65 = vld [vmem:[%s0 + $0x100] sm:$0xff]
    %v66 = vld [vmem:[%s0 + $0x108] sm:$0xff]
    %v67 = vld [vmem:[%s0 + $0x110] sm:$0xff]
    %v68 = vld [vmem:[%s0 + $0x118] sm:$0xff]
    %v69 = vld [vmem:[%s0 + $0x120] sm:$0xff]
    %v70 = vld [vmem:[%s0 + $0x128] sm:$0xff]
    %v71 = vld [vmem:[%s0 + $0x130] sm:$0xff]
    %v72 = vld [vmem:[%s0 + $0x138] sm:$0xff]
    %v73 = vld [vmem:[%s0 + $0x140] sm:$0xff]
    %v74 = vld [vmem:[%s0 + $0x148] sm:$0xff]
    %v75 = vld [vmem:[%s0 + $0x150] sm:$0xff]
    %v76 = vld [vmem:[%s0 + $0x158] sm:$0xff]
    %v77 = vld [vmem:[%s0 + $0x160] sm:$0xff]
    %v78 = vld [vmem:[%s0 + $0x168] sm:$0xff]
    %v79 = vld [vmem:[%s0 + $0x170] sm:$0xff]
    %v80 = vld [vmem:[%s0 + $0x178] sm:$0xff]
    %v81 = vld [vmem:[%s0 + $0x180] sm:$0xff]
    %v82 = vld [vmem:[%s0 + $0x188] sm:$0xff]
    %v83 = vld [vmem:[%s0 + $0x190] sm:$0xff]
    %v84 = vld [vmem:[%s0 + $0x198] sm:$0xff]
    %v85 = vld [vmem:[%s0 + $0x1a0] sm:$0xff]
    %v86 = vld [vmem:[%s0 + $0x1a8] sm:$0xff]
    %v87 = vld [vmem:[%s0 + $0x1b0] sm:$0xff]
    %v88 = vld [vmem:[%s0 + $0x1b8] sm:$0xff]
    %v89 = vld [vmem:[%s0 + $0x1c0] sm:$0xff]
    %v90 = vld [vmem:[%s0 + $0x1c8] sm:$0xff]
    %v91 = vld [vmem:[%s0 + $0x1d0] sm:$0xff]
    %v92 = vld [vmem:[%s0 + $0x1d8] sm:$0xff]
    %v93 = vld [vmem:[%s0 + $0x1e0] sm:$0xff]
    %v94 = vld [vmem:[%s0 + $0x1e8] sm:$0xff]
    %v95 = vld [vmem:[%s0 + $0x1f0] sm:$0xff]
    %v96 = vld [vmem:[%s0 + $0x1f8] sm:$0xff]
    %v97 = vld [vmem:[%s0 + $0x200] sm:$0xff]
    %v98 = vld [vmem:[%s0 + $0x208] sm:$0xff]
    %v99 = vld [vmem:[%s0 + $0x210] sm:$0xff]
    %v100 = vld [vmem:[%s0 + $0x218] sm:$0xff]
    %v101 = vld [vmem:[%s0 + $0x220] sm:$0xff]
    %v102 = vld [vmem:[%s0 + $0x228] sm:$0xff]
    %v103 = vld [vmem:[%s0 + $0x230] sm:$0xff]
    %v104 = vld [vmem:[%s0 + $0x238] sm:$0xff]
    %v105 = vld [vmem:[%s0 + $0x240] sm:$0xff]
    %v106 = vld [vmem:[%s0 + $0x248] sm:$0xff]
    %v107 = vld [vmem:[%s0 + $0x250] sm:$0xff]
    %v108 = vld [vmem:[%s0 + $0x258] sm:$0xff]
    %v109 = vld [vmem:[%s0 + $0x260] sm:$0xff]
    %v110 = vld [vmem:[%s0 + $0x268] sm:$0xff]
    %v111 = vld [vmem:[%s0 + $0x270] sm:$0xff]
    %v112 = vld [vmem:[%s0 + $0x278] sm:$0xff]
    %v113 = vld [vmem:[%s0 + $0x280] sm:$0xff]
    %v114 = vld [vmem:[%s0 + $0x288] sm:$0xff]
    %v115 = vld [vmem:[%s0 + $0x290] sm:$0xff]
    %v116 = vld [vmem:[%s0 + $0x298] sm:$0xff]
    %v117 = vld [vmem:[%s0 + $0x2a0] sm:$0xff]
    %v118 = vld [vmem:[%s0 + $0x2a8] sm:$0xff]
    %v119 = vld [vmem:[%s0 + $0x2b0] sm:$0xff]
    %v120 = vld [vmem:[%s0 + $0x2b8] sm:$0xff]
    %v121 = vld [vmem:[%s0 + $0x2c0] sm:$0xff]
    %v122 = vld [vmem:[%s0 + $0x2c8] sm:$0xff]
    %v123 = vld [vmem:[%s0 + $0x2d0] sm:$0xff]
    %v124 = vld [vmem:[%s0 + $0x2d8] sm:$0xff]
    %v125 = vld [vmem:[%s0 + $0x2e0] sm:$0xff]
    %v126 = vld [vmem:[%s0 + $0x2e8] sm:$0xff]
    %v127 = vld [vmem:[%s0 + $0x2f0] sm:$0xff]
    %v128 = vld [vmem:[%s0 + $0x2f8] sm:$0xff]
    %v129 = vld [vmem:[%s0 + $0x300] sm:$0xff]
    %v130 = vld [vmem:[%s0 + $0x308] sm:$0xff]
    %v131 = vld [vmem:[%s0 + $0x310] sm:$0xff]
    %v132 = vld [vmem:[%s0 + $0x318] sm:$0xff]
    %v133 = vld [vmem:[%s0 + $0x320] sm:$0xff]
    %v134 = vld [vmem:[%s0 + $0x328] sm:$0xff]
    %v135 = vld [vmem:[%s0 + $0x330] sm:$0xff]
    %v136 = vld [vmem:[%s0 + $0x338] sm:$0xff]
    %v137 = vld [vmem:[%s0 + $0x340] sm:$0xff]
    %v138 = vld [vmem:[%s0 + $0x348] sm:$0xff]
    %v139 = vld [vmem:[%s0 + $0x350] sm:$0xff]
    %v140 = vld [vmem:[%s0 + $0x358] sm:$0xff]
    %v141 = vld [vmem:[%s0 + $0x360] sm:$0xff]
    %v142 = vld [vmem:[%s0 + $0x368] sm:$0xff]
    %v143 = vld [vmem:[%s0 + $0x370] sm:$0xff]
    %v144 = vld [vmem:[%s0 + $0x378] sm:$0xff]
    %v145 = vld [vmem:[%s0 + $0x380] sm:$0xff]
    %v146 = vld [vmem:[%s0 + $0x388] sm:$0xff]
    %v147 = vld [vmem:[%s0 + $0x390] sm:$0xff]
    %v148 = vld [vmem:[%s0 + $0x398] sm:$0xff]
    %v149 = vld [vmem:[%s0 + $0x3a0] sm:$0xff]
    %v150 = vld [vmem:[%s0 + $0x3a8] sm:$0xff]
    %v151 = vld [vmem:[%s0 + $0x3b0] sm:$0xff]
    %v152 = vld [vmem:[%s0 + $0x3b8] sm:$0xff]
    %v153 = vld [vmem:[%s0 + $0x3c0] sm:$0xff]
    %v154 = vld [vmem:[%s0 + $0x3c8] sm:$0xff]
    %v155 = vld [vmem:[%s0 + $0x3d0] sm:$0xff]
    %v156 = vld [vmem:[%s0 + $0x3d8] sm:$0xff]
    %v157 = vld [vmem:[%s0 + $0x3e0] sm:$0xff]
    %v158 = vld [vmem:[%s0 + $0x3e8] sm:$0xff]
    %v159 = vld [vmem:[%s0 + $0x3f0] sm:$0xff]
    %v160 = vld [vmem:[%s0 + $0x3f8] sm:$0xff]
    %v161 = vld [vmem:[%s1] sm:$0xff]
    %v162 = vld [vmem:[%s1 + $0x8] sm:$0xff]
    %v163 = vld [vmem:[%s1 + $0x10] sm:$0xff]
    %v164 = vld [vmem:[%s1 + $0x18] sm:$0xff]
    %v165 = vld [vmem:[%s1 + $0x20] sm:$0xff]
    %v166 = vld [vmem:[%s1 + $0x28] sm:$0xff]
    %v167 = vld [vmem:[%s1 + $0x30] sm:$0xff]
    %v168 = vld [vmem:[%s1 + $0x38] sm:$0xff]
    %v169 = vld [vmem:[%s1 + $0x40] sm:$0xff]
    %v170 = vld [vmem:[%s1 + $0x48] sm:$0xff]
    %v171 = vld [vmem:[%s1 + $0x50] sm:$0xff]
    %v172 = vld [vmem:[%s1 + $0x58] sm:$0xff]
    %v173 = vld [vmem:[%s1 + $0x60] sm:$0xff]
    %v174 = vld [vmem:[%s1 + $0x68] sm:$0xff]
    %v175 = vld [vmem:[%s1 + $0x70] sm:$0xff]
    %v176 = vld [vmem:[%s1 + $0x78] sm:$0xff]
    %v177 = vld [vmem:[%s1 + $0x80] sm:$0xff]
    %v178 = vld [vmem:[%s1 + $0x88] sm:$0xff]
    %v179 = vld [vmem:[%s1 + $0x90] sm:$0xff]
    %v180 = vld [vmem:[%s1 + $0x98] sm:$0xff]
    %v181 = vld [vmem:[%s1 + $0xa0] sm:$0xff]
    %v182 = vld [vmem:[%s1 + $0xa8] sm:$0xff]
    %v183 = vld [vmem:[%s1 + $0xb0] sm:$0xff]
    %v184 = vld [vmem:[%s1 + $0xb8] sm:$0xff]
    %v185 = vld [vmem:[%s1 + $0xc0] sm:$0xff]
    %v186 = vld [vmem:[%s1 + $0xc8] sm:$0xff]
    %v187 = vld [vmem:[%s1 + $0xd0] sm:$0xff]
    %v188 = vld [vmem:[%s1 + $0xd8] sm:$0xff]
    %v189 = vld [vmem:[%s1 + $0xe0] sm:$0xff]
    %v190 = vld [vmem:[%s1 + $0xe8] sm:$0xff]
    %v191 = vld [vmem:[%s1 + $0xf0] sm:$0xff]
    %v192 = vld [vmem:[%s1 + $0xf8] sm:$0xff]
    %v193 = vld [vmem:[%s2] sm:$0x1]
    %v195 = vlaneseq
    %v196 = vshrl.u32 %v195, 7
    %v197 = vsub.s32 0, %v196
    %v198 = vrot.slane %v193, %v197
    %200 = vmatprep.subr.mxu0 0.0
    %201 = vmatpush1.msra.mxu0 %v176
    %202 = vmatprep.subr.mxu0 0.0
    %203 = vmatpush1.msra.mxu0 %v175
    %204 = vmatprep.subr.mxu0 0.0
    %205 = vmatpush1.msra.mxu0 %v174
    %206 = vmatprep.subr.mxu0 0.0
    %207 = vmatpush1.msra.mxu0 %v173
    %208 = vmatprep.subr.mxu0 0.0
    %209 = vmatpush1.msra.mxu0 %v172
    %210 = vmatprep.subr.mxu0 0.0
    %211 = vmatpush1.msra.mxu0 %v171
    %212 = vmatprep.subr.mxu0 0.0
    %213 = vmatpush1.msra.mxu0 %v170
    %214 = vmatprep.subr.mxu0 0.0
    %215 = vmatpush1.msra.mxu0 %v169
    %216 = vmatprep.subr.mxu0 0.0
    %217 = vmatpush1.msra.mxu0 %v168
    %218 = vmatprep.subr.mxu0 0.0
    %219 = vmatpush1.msra.mxu0 %v167
    %220 = vmatprep.subr.mxu0 0.0
    %221 = vmatpush1.msra.mxu0 %v166
    %222 = vmatprep.subr.mxu0 0.0
    %223 = vmatpush1.msra.mxu0 %v165
    %224 = vmatprep.subr.mxu0 0.0
    %225 = vmatpush1.msra.mxu0 %v164
    %226 = vmatprep.subr.mxu0 0.0
    %227 = vmatpush1.msra.mxu0 %v163
    %228 = vmatprep.subr.mxu0 0.0
    %229 = vmatpush1.msra.mxu0 %v162
    %230 = vmatprep.subr.mxu0 0.0
    %231 = vmatpush1.msra.mxu0 %v161
    %232 = vmatprep.subr.mxu0 0.0
    %233 = vmatpush2.msra.mxu0 %v192
    %234 = vmatprep.subr.mxu0 0.0
    %235 = vmatpush2.msra.mxu0 %v191
    %236 = vmatprep.subr.mxu0 0.0
    %237 = vmatpush2.msra.mxu0 %v190
    %238 = vmatprep.subr.mxu0 0.0
    %239 = vmatpush2.msra.mxu0 %v189
    %240 = vmatprep.subr.mxu0 0.0
    %241 = vmatpush2.msra.mxu0 %v188
    %242 = vmatprep.subr.mxu0 0.0
    %243 = vmatpush2.msra.mxu0 %v187
    %244 = vmatprep.subr.mxu0 0.0
    %245 = vmatpush2.msra.mxu0 %v186
    %246 = vmatprep.subr.mxu0 0.0
    %247 = vmatpush2.msra.mxu0 %v185
    %248 = vmatprep.subr.mxu0 0.0
    %249 = vmatpush2.msra.mxu0 %v184
    %250 = vmatprep.subr.mxu0 0.0
    %251 = vmatpush2.msra.mxu0 %v183
    %252 = vmatprep.subr.mxu0 0.0
    %253 = vmatpush2.msra.mxu0 %v182
    %254 = vmatprep.subr.mxu0 0.0
    %255 = vmatpush2.msra.mxu0 %v181
    %256 = vmatprep.subr.mxu0 0.0
    %257 = vmatpush2.msra.mxu0 %v180
    %258 = vmatprep.subr.mxu0 0.0
    %259 = vmatpush2.msra.mxu0 %v179
    %260 = vmatprep.subr.mxu0 0.0
    %261 = vmatpush2.msra.mxu0 %v178
    %262 = vmatprep.subr.mxu0 0.0
    %263 = vmatpush2.msra.mxu0 %v177
    %264 = vmatprep.mubr.f32.mxu0 %v34
    %265 = vmatmul.mubr.f32.gmra.mxu0 %v33
    %v266 = vpop.f32.mrf.mxu0
    %v267 = vadd.f32 %v198, %v266
    %v268 = vpop.f32.mrf.mxu0
    %269 = vmatprep.mubr.f32.mxu0 %v36
    %270 = vmatmul.mubr.f32.gmra.mxu0 %v35
    %v271 = vpop.f32.mrf.mxu0
    %v272 = vadd.f32 %v198, %v271
    %v273 = vpop.f32.mrf.mxu0
    %274 = vmatprep.mubr.f32.mxu0 %v38
    %275 = vmatmul.mubr.f32.gmra.mxu0 %v37
    %v276 = vpop.f32.mrf.mxu0
    %v277 = vadd.f32 %v198, %v276
    %v278 = vpop.f32.mrf.mxu0
    %279 = vmatprep.mubr.f32.mxu0 %v40
    %280 = vmatmul.mubr.f32.gmra.mxu0 %v39
    %v281 = vpop.f32.mrf.mxu0
    %v282 = vadd.f32 %v198, %v281
    %v283 = vpop.f32.mrf.mxu0
    %284 = vmatprep.mubr.f32.mxu0 %v42
    %285 = vmatmul.mubr.f32.gmra.mxu0 %v41
    %v286 = vpop.f32.mrf.mxu0
    %v287 = vadd.f32 %v198, %v286
    %v288 = vpop.f32.mrf.mxu0
    %289 = vmatprep.mubr.f32.mxu0 %v44
    %290 = vmatmul.mubr.f32.gmra.mxu0 %v43
    %v291 = vpop.f32.mrf.mxu0
    %v292 = vadd.f32 %v198, %v291
    %v293 = vpop.f32.mrf.mxu0
    %294 = vmatprep.mubr.f32.mxu0 %v46
    %295 = vmatmul.mubr.f32.gmra.mxu0 %v45
    %v296 = vpop.f32.mrf.mxu0
    %v297 = vadd.f32 %v198, %v296
    %v298 = vpop.f32.mrf.mxu0
    %299 = vmatprep.mubr.f32.mxu0 %v48
    %300 = vmatmul.mubr.f32.gmra.mxu0 %v47
    %v301 = vpop.f32.mrf.mxu0
    %v302 = vadd.f32 %v198, %v301
    %v303 = vpop.f32.mrf.mxu0
    %304 = vmatprep.mubr.f32.mxu0 %v50
    %305 = vmatmul.mubr.f32.gmra.mxu0 %v49
    %v306 = vpop.f32.mrf.mxu0
    %v307 = vadd.f32 %v198, %v306
    %v308 = vpop.f32.mrf.mxu0
    %309 = vmatprep.mubr.f32.mxu0 %v52
    %310 = vmatmul.mubr.f32.gmra.mxu0 %v51
    %v311 = vpop.f32.mrf.mxu0
    %v312 = vadd.f32 %v198, %v311
    %v313 = vpop.f32.mrf.mxu0
    %314 = vmatprep.mubr.f32.mxu0 %v54
    %315 = vmatmul.mubr.f32.gmra.mxu0 %v53
    %v316 = vpop.f32.mrf.mxu0
    %v317 = vadd.f32 %v198, %v316
    %v318 = vpop.f32.mrf.mxu0
    %319 = vmatprep.mubr.f32.mxu0 %v56
    %320 = vmatmul.mubr.f32.gmra.mxu0 %v55
    %v321 = vpop.f32.mrf.mxu0
    %v322 = vadd.f32 %v198, %v321
    %v323 = vpop.f32.mrf.mxu0
    %324 = vmatprep.mubr.f32.mxu0 %v58
    %325 = vmatmul.mubr.f32.gmra.mxu0 %v57
    %v326 = vpop.f32.mrf.mxu0
    %v327 = vadd.f32 %v198, %v326
    %v328 = vpop.f32.mrf.mxu0
    %329 = vmatprep.mubr.f32.mxu0 %v60
    %330 = vmatmul.mubr.f32.gmra.mxu0 %v59
    %v331 = vpop.f32.mrf.mxu0
    %v332 = vadd.f32 %v198, %v331
    %v333 = vpop.f32.mrf.mxu0
    %334 = vmatprep.mubr.f32.mxu0 %v62
    %335 = vmatmul.mubr.f32.gmra.mxu0 %v61
    %v336 = vpop.f32.mrf.mxu0
    %v337 = vadd.f32 %v198, %v336
    %v338 = vpop.f32.mrf.mxu0
    %339 = vmatprep.mubr.f32.mxu0 %v64
    %340 = vmatmul.mubr.f32.gmra.mxu0 %v63
    %v341 = vpop.f32.mrf.mxu0
    %v342 = vadd.f32 %v198, %v341
    %v343 = vpop.f32.mrf.mxu0
    %344 = vmatprep.mubr.f32.mxu0 %v66
    %345 = vmatmul.mubr.f32.gmra.mxu0 %v65
    %v346 = vpop.f32.mrf.mxu0
    %v347 = vadd.f32 %v198, %v346
    %v348 = vpop.f32.mrf.mxu0
    %349 = vmatprep.mubr.f32.mxu0 %v68
    %350 = vmatmul.mubr.f32.gmra.mxu0 %v67
    %v351 = vpop.f32.mrf.mxu0
    %v352 = vadd.f32 %v198, %v351
    %v353 = vpop.f32.mrf.mxu0
    %354 = vmatprep.mubr.f32.mxu0 %v70
    %355 = vmatmul.mubr.f32.gmra.mxu0 %v69
    %v356 = vpop.f32.mrf.mxu0
    %v357 = vadd.f32 %v198, %v356
    %v358 = vpop.f32.mrf.mxu0
    %359 = vmatprep.mubr.f32.mxu0 %v72
    %360 = vmatmul.mubr.f32.gmra.mxu0 %v71
    %v361 = vpop.f32.mrf.mxu0
    %v362 = vadd.f32 %v198, %v361
    %v363 = vpop.f32.mrf.mxu0
    %364 = vmatprep.mubr.f32.mxu0 %v74
    %365 = vmatmul.mubr.f32.gmra.mxu0 %v73
    %v366 = vpop.f32.mrf.mxu0
    %v367 = vadd.f32 %v198, %v366
    %v368 = vpop.f32.mrf.mxu0
    %369 = vmatprep.mubr.f32.mxu0 %v76
    %370 = vmatmul.mubr.f32.gmra.mxu0 %v75
    %v371 = vpop.f32.mrf.mxu0
    %v372 = vadd.f32 %v198, %v371
    %v373 = vpop.f32.mrf.mxu0
    %374 = vmatprep.mubr.f32.mxu0 %v78
    %375 = vmatmul.mubr.f32.gmra.mxu0 %v77
    %v376 = vpop.f32.mrf.mxu0
    %v377 = vadd.f32 %v198, %v376
    %v378 = vpop.f32.mrf.mxu0
    %379 = vmatprep.mubr.f32.mxu0 %v80
    %380 = vmatmul.mubr.f32.gmra.mxu0 %v79
    %v381 = vpop.f32.mrf.mxu0
    %v382 = vadd.f32 %v198, %v381
    %v383 = vpop.f32.mrf.mxu0
    %384 = vmatprep.mubr.f32.mxu0 %v82
    %385 = vmatmul.mubr.f32.gmra.mxu0 %v81
    %v386 = vpop.f32.mrf.mxu0
    %v387 = vadd.f32 %v198, %v386
    %v388 = vpop.f32.mrf.mxu0
    %389 = vmatprep.mubr.f32.mxu0 %v84
    %390 = vmatmul.mubr.f32.gmra.mxu0 %v83
    %v391 = vpop.f32.mrf.mxu0
    %v392 = vadd.f32 %v198, %v391
    %v393 = vpop.f32.mrf.mxu0
    %394 = vmatprep.mubr.f32.mxu0 %v86
    %395 = vmatmul.mubr.f32.gmra.mxu0 %v85
    %v396 = vpop.f32.mrf.mxu0
    %v397 = vadd.f32 %v198, %v396
    %v398 = vpop.f32.mrf.mxu0
    %399 = vmatprep.mubr.f32.mxu0 %v88
    %400 = vmatmul.mubr.f32.gmra.mxu0 %v87
    %v401 = vpop.f32.mrf.mxu0
    %v402 = vadd.f32 %v198, %v401
    %v403 = vpop.f32.mrf.mxu0
    %404 = vmatprep.mubr.f32.mxu0 %v90
    %405 = vmatmul.mubr.f32.gmra.mxu0 %v89
    %v406 = vpop.f32.mrf.mxu0
    %v407 = vadd.f32 %v198, %v406
    %v408 = vpop.f32.mrf.mxu0
    %409 = vmatprep.mubr.f32.mxu0 %v92
    %410 = vmatmul.mubr.f32.gmra.mxu0 %v91
    %v411 = vpop.f32.mrf.mxu0
    %v412 = vadd.f32 %v198, %v411
    %v413 = vpop.f32.mrf.mxu0
    %414 = vmatprep.mubr.f32.mxu0 %v94
    %415 = vmatmul.mubr.f32.gmra.mxu0 %v93
    %v416 = vpop.f32.mrf.mxu0
    %v417 = vadd.f32 %v198, %v416
    %v418 = vpop.f32.mrf.mxu0
    %419 = vmatprep.mubr.f32.mxu0 %v96
    %420 = vmatmul.mubr.f32.gmra.mxu0 %v95
    %v421 = vpop.f32.mrf.mxu0
    %v422 = vadd.f32 %v198, %v421
    %v423 = vpop.f32.mrf.mxu0
    %424 = vmatprep.mubr.f32.mxu0 %v98
    %425 = vmatmul.mubr.f32.gmra.mxu0 %v97
    %v426 = vpop.f32.mrf.mxu0
    %v427 = vadd.f32 %v198, %v426
    %v428 = vpop.f32.mrf.mxu0
    %429 = vmatprep.mubr.f32.mxu0 %v100
    %430 = vmatmul.mubr.f32.gmra.mxu0 %v99
    %v431 = vpop.f32.mrf.mxu0
    %v432 = vadd.f32 %v198, %v431
    %v433 = vpop.f32.mrf.mxu0
    %434 = vmatprep.mubr.f32.mxu0 %v102
    %435 = vmatmul.mubr.f32.gmra.mxu0 %v101
    %v436 = vpop.f32.mrf.mxu0
    %v437 = vadd.f32 %v198, %v436
    %v438 = vpop.f32.mrf.mxu0
    %439 = vmatprep.mubr.f32.mxu0 %v104
    %440 = vmatmul.mubr.f32.gmra.mxu0 %v103
    %v441 = vpop.f32.mrf.mxu0
    %v442 = vadd.f32 %v198, %v441
    %v443 = vpop.f32.mrf.mxu0
    %444 = vmatprep.mubr.f32.mxu0 %v106
    %445 = vmatmul.mubr.f32.gmra.mxu0 %v105
    %v446 = vpop.f32.mrf.mxu0
    %v447 = vadd.f32 %v198, %v446
    %v448 = vpop.f32.mrf.mxu0
    %449 = vmatprep.mubr.f32.mxu0 %v108
    %450 = vmatmul.mubr.f32.gmra.mxu0 %v107
    %v451 = vpop.f32.mrf.mxu0
    %v452 = vadd.f32 %v198, %v451
    %v453 = vpop.f32.mrf.mxu0
    %454 = vmatprep.mubr.f32.mxu0 %v110
    %455 = vmatmul.mubr.f32.gmra.mxu0 %v109
    %v456 = vpop.f32.mrf.mxu0
    %v457 = vadd.f32 %v198, %v456
    %v458 = vpop.f32.mrf.mxu0
    %459 = vmatprep.mubr.f32.mxu0 %v112
    %460 = vmatmul.mubr.f32.gmra.mxu0 %v111
    %v461 = vpop.f32.mrf.mxu0
    %v462 = vadd.f32 %v198, %v461
    %v463 = vpop.f32.mrf.mxu0
    %464 = vmatprep.mubr.f32.mxu0 %v114
    %465 = vmatmul.mubr.f32.gmra.mxu0 %v113
    %v466 = vpop.f32.mrf.mxu0
    %v467 = vadd.f32 %v198, %v466
    %v468 = vpop.f32.mrf.mxu0
    %469 = vmatprep.mubr.f32.mxu0 %v116
    %470 = vmatmul.mubr.f32.gmra.mxu0 %v115
    %v471 = vpop.f32.mrf.mxu0
    %v472 = vadd.f32 %v198, %v471
    %v473 = vpop.f32.mrf.mxu0
    %474 = vmatprep.mubr.f32.mxu0 %v118
    %475 = vmatmul.mubr.f32.gmra.mxu0 %v117
    %v476 = vpop.f32.mrf.mxu0
    %v477 = vadd.f32 %v198, %v476
    %v478 = vpop.f32.mrf.mxu0
    %479 = vmatprep.mubr.f32.mxu0 %v120
    %480 = vmatmul.mubr.f32.gmra.mxu0 %v119
    %v481 = vpop.f32.mrf.mxu0
    %v482 = vadd.f32 %v198, %v481
    %v483 = vpop.f32.mrf.mxu0
    %484 = vmatprep.mubr.f32.mxu0 %v122
    %485 = vmatmul.mubr.f32.gmra.mxu0 %v121
    %v486 = vpop.f32.mrf.mxu0
    %v487 = vadd.f32 %v198, %v486
    %v488 = vpop.f32.mrf.mxu0
    %489 = vmatprep.mubr.f32.mxu0 %v124
    %490 = vmatmul.mubr.f32.gmra.mxu0 %v123
    %v491 = vpop.f32.mrf.mxu0
    %v492 = vadd.f32 %v198, %v491
    %v493 = vpop.f32.mrf.mxu0
    %494 = vmatprep.mubr.f32.mxu0 %v126
    %495 = vmatmul.mubr.f32.gmra.mxu0 %v125
    %v496 = vpop.f32.mrf.mxu0
    %v497 = vadd.f32 %v198, %v496
    %v498 = vpop.f32.mrf.mxu0
    %499 = vmatprep.mubr.f32.mxu0 %v128
    %500 = vmatmul.mubr.f32.gmra.mxu0 %v127
    %v501 = vpop.f32.mrf.mxu0
    %v502 = vadd.f32 %v198, %v501
    %v503 = vpop.f32.mrf.mxu0
    %504 = vmatprep.mubr.f32.mxu0 %v130
    %505 = vmatmul.mubr.f32.gmra.mxu0 %v129
    %v506 = vpop.f32.mrf.mxu0
    %v507 = vadd.f32 %v198, %v506
    %v508 = vpop.f32.mrf.mxu0
    %509 = vmatprep.mubr.f32.mxu0 %v132
    %510 = vmatmul.mubr.f32.gmra.mxu0 %v131
    %v511 = vpop.f32.mrf.mxu0
    %v512 = vadd.f32 %v198, %v511
    %v513 = vpop.f32.mrf.mxu0
    %514 = vmatprep.mubr.f32.mxu0 %v134
    %515 = vmatmul.mubr.f32.gmra.mxu0 %v133
    %v516 = vpop.f32.mrf.mxu0
    %v517 = vadd.f32 %v198, %v516
    %v518 = vpop.f32.mrf.mxu0
    %519 = vmatprep.mubr.f32.mxu0 %v136
    %520 = vmatmul.mubr.f32.gmra.mxu0 %v135
    %v521 = vpop.f32.mrf.mxu0
    %v522 = vadd.f32 %v198, %v521
    %v523 = vpop.f32.mrf.mxu0
    %524 = vmatprep.mubr.f32.mxu0 %v138
    %525 = vmatmul.mubr.f32.gmra.mxu0 %v137
    %v526 = vpop.f32.mrf.mxu0
    %v527 = vadd.f32 %v198, %v526
    %v528 = vpop.f32.mrf.mxu0
    %529 = vmatprep.mubr.f32.mxu0 %v140
    %530 = vmatmul.mubr.f32.gmra.mxu0 %v139
    %v531 = vpop.f32.mrf.mxu0
    %v532 = vadd.f32 %v198, %v531
    %v533 = vpop.f32.mrf.mxu0
    %534 = vmatprep.mubr.f32.mxu0 %v142
    %535 = vmatmul.mubr.f32.gmra.mxu0 %v141
    %v536 = vpop.f32.mrf.mxu0
    %v537 = vadd.f32 %v198, %v536
    %v538 = vpop.f32.mrf.mxu0
    %539 = vmatprep.mubr.f32.mxu0 %v144
    %540 = vmatmul.mubr.f32.gmra.mxu0 %v143
    %v541 = vpop.f32.mrf.mxu0
    %v542 = vadd.f32 %v198, %v541
    %v543 = vpop.f32.mrf.mxu0
    %544 = vmatprep.mubr.f32.mxu0 %v146
    %545 = vmatmul.mubr.f32.gmra.mxu0 %v145
    %v546 = vpop.f32.mrf.mxu0
    %v547 = vadd.f32 %v198, %v546
    %v548 = vpop.f32.mrf.mxu0
    %549 = vmatprep.mubr.f32.mxu0 %v148
    %550 = vmatmul.mubr.f32.gmra.mxu0 %v147
    %v551 = vpop.f32.mrf.mxu0
    %v552 = vadd.f32 %v198, %v551
    %v553 = vpop.f32.mrf.mxu0
    %554 = vmatprep.mubr.f32.mxu0 %v150
    %555 = vmatmul.mubr.f32.gmra.mxu0 %v149
    %v556 = vpop.f32.mrf.mxu0
    %v557 = vadd.f32 %v198, %v556
    %v558 = vpop.f32.mrf.mxu0
    %559 = vmatprep.mubr.f32.mxu0 %v152
    %560 = vmatmul.mubr.f32.gmra.mxu0 %v151
    %v561 = vpop.f32.mrf.mxu0
    %v562 = vadd.f32 %v198, %v561
    %v563 = vpop.f32.mrf.mxu0
    %564 = vmatprep.mubr.f32.mxu0 %v154
    %565 = vmatmul.mubr.f32.gmra.mxu0 %v153
    %v566 = vpop.f32.mrf.mxu0
    %v567 = vadd.f32 %v198, %v566
    %v568 = vpop.f32.mrf.mxu0
    %569 = vmatprep.mubr.f32.mxu0 %v156
    %570 = vmatmul.mubr.f32.gmra.mxu0 %v155
    %v571 = vpop.f32.mrf.mxu0
    %v572 = vadd.f32 %v198, %v571
    %v573 = vpop.f32.mrf.mxu0
    %574 = vmatprep.mubr.f32.mxu0 %v158
    %575 = vmatmul.mubr.f32.gmra.mxu0 %v157
    %v576 = vpop.f32.mrf.mxu0
    %v577 = vadd.f32 %v198, %v576
    %v578 = vpop.f32.mrf.mxu0
    %579 = vmatprep.mubr.f32.mxu0 %v160
    %580 = vmatmul.mubr.f32.gmra.mxu0 %v159
    %v581 = vpop.f32.mrf.mxu0
    %v582 = vadd.f32 %v198, %v581
    %v583 = vpop.f32.mrf.mxu0
    %584 = vdwg.mxu0
    %v585 = vmax.f32 %v267, 0.0
    %v586 = vmax.f32 %v272, 0.0
    %v587 = vmax.f32 %v277, 0.0
    %v588 = vmax.f32 %v282, 0.0
    %v589 = vmax.f32 %v287, 0.0
    %v590 = vmax.f32 %v292, 0.0
    %v591 = vmax.f32 %v297, 0.0
    %v592 = vmax.f32 %v302, 0.0
    %v593 = vmax.f32 %v307, 0.0
    %v594 = vmax.f32 %v312, 0.0
    %v595 = vmax.f32 %v317, 0.0
    %v596 = vmax.f32 %v322, 0.0
    %v597 = vmax.f32 %v327, 0.0
    %v598 = vmax.f32 %v332, 0.0
    %v599 = vmax.f32 %v337, 0.0
    %v600 = vmax.f32 %v342, 0.0
    %v601 = vmax.f32 %v347, 0.0
    %v602 = vmax.f32 %v352, 0.0
    %v603 = vmax.f32 %v357, 0.0
    %v604 = vmax.f32 %v362, 0.0
    %v605 = vmax.f32 %v367, 0.0
    %v606 = vmax.f32 %v372, 0.0
    %v607 = vmax.f32 %v377, 0.0
    %v608 = vmax.f32 %v382, 0.0
    %v609 = vmax.f32 %v387, 0.0
    %v610 = vmax.f32 %v392, 0.0
    %v611 = vmax.f32 %v397, 0.0
    %v612 = vmax.f32 %v402, 0.0
    %v613 = vmax.f32 %v407, 0.0
    %v614 = vmax.f32 %v412, 0.0
    %v615 = vmax.f32 %v417, 0.0
    %v616 = vmax.f32 %v422, 0.0
    %v617 = vmax.f32 %v427, 0.0
    %v618 = vmax.f32 %v432, 0.0
    %v619 = vmax.f32 %v437, 0.0
    %v620 = vmax.f32 %v442, 0.0
    %v621 = vmax.f32 %v447, 0.0
    %v622 = vmax.f32 %v452, 0.0
    %v623 = vmax.f32 %v457, 0.0
    %v624 = vmax.f32 %v462, 0.0
    %v625 = vmax.f32 %v467, 0.0
    %v626 = vmax.f32 %v472, 0.0
    %v627 = vmax.f32 %v477, 0.0
    %v628 = vmax.f32 %v482, 0.0
    %v629 = vmax.f32 %v487, 0.0
    %v630 = vmax.f32 %v492, 0.0
    %v631 = vmax.f32 %v497, 0.0
    %v632 = vmax.f32 %v502, 0.0
    %v633 = vmax.f32 %v507, 0.0
    %v634 = vmax.f32 %v512, 0.0
    %v635 = vmax.f32 %v517, 0.0
    %v636 = vmax.f32 %v522, 0.0
    %v637 = vmax.f32 %v527, 0.0
    %v638 = vmax.f32 %v532, 0.0
    %v639 = vmax.f32 %v537, 0.0
    %v640 = vmax.f32 %v542, 0.0
    %v641 = vmax.f32 %v547, 0.0
    %v642 = vmax.f32 %v552, 0.0
    %v643 = vmax.f32 %v557, 0.0
    %v644 = vmax.f32 %v562, 0.0
    %v645 = vmax.f32 %v567, 0.0
    %v646 = vmax.f32 %v572, 0.0
    %v647 = vmax.f32 %v577, 0.0
    %v648 = vmax.f32 %v582, 0.0
    %v649 = vmax.f32 %v585, %v601
    %v650 = vmax.f32 %v586, %v602
    %v651 = vmax.f32 %v587, %v603
    %v652 = vmax.f32 %v588, %v604
    %v653 = vmax.f32 %v589, %v605
    %v654 = vmax.f32 %v590, %v606
    %v655 = vmax.f32 %v591, %v607
    %v656 = vmax.f32 %v592, %v608
    %v657 = vmax.f32 %v593, %v609
    %v658 = vmax.f32 %v594, %v610
    %v659 = vmax.f32 %v595, %v611
    %v660 = vmax.f32 %v596, %v612
    %v661 = vmax.f32 %v597, %v613
    %v662 = vmax.f32 %v598, %v614
    %v663 = vmax.f32 %v599, %v615
    %v664 = vmax.f32 %v600, %v616
    %v665 = vmax.f32 %v617, %v633
    %v666 = vmax.f32 %v618, %v634
    %v667 = vmax.f32 %v619, %v635
    %v668 = vmax.f32 %v620, %v636
    %v669 = vmax.f32 %v621, %v637
    %v670 = vmax.f32 %v622, %v638
    %v671 = vmax.f32 %v623, %v639
    %v672 = vmax.f32 %v624, %v640
    %v673 = vmax.f32 %v625, %v641
    %v674 = vmax.f32 %v626, %v642
    %v675 = vmax.f32 %v627, %v643
    %v676 = vmax.f32 %v628, %v644
    %v677 = vmax.f32 %v629, %v645
    %v678 = vmax.f32 %v630, %v646
    %v679 = vmax.f32 %v631, %v647
    %v680 = vmax.f32 %v632, %v648
    %v681 = vmax.f32 %v649, %v665
    %v682 = vmax.f32 %v650, %v666
    %v683 = vmax.f32 %v651, %v667
    %v684 = vmax.f32 %v652, %v668
    %v685 = vmax.f32 %v653, %v669
    %v686 = vmax.f32 %v654, %v670
    %v687 = vmax.f32 %v655, %v671
    %v688 = vmax.f32 %v656, %v672
    %v689 = vmax.f32 %v657, %v673
    %v690 = vmax.f32 %v658, %v674
    %v691 = vmax.f32 %v659, %v675
    %v692 = vmax.f32 %v660, %v676
    %v693 = vmax.f32 %v661, %v677
    %v694 = vmax.f32 %v662, %v678
    %v695 = vmax.f32 %v663, %v679
    %v696 = vmax.f32 %v664, %v680
    %v697 = vld [vmem:[%s3] sm:$0xff]
    %v698 = vld [vmem:[%s3 + $0x8] sm:$0xff]
    %v699 = vld [vmem:[%s3 + $0x10] sm:$0xff]
    %v700 = vld [vmem:[%s3 + $0x18] sm:$0xff]
    %v701 = vld [vmem:[%s3 + $0x20] sm:$0xff]
    %v702 = vld [vmem:[%s3 + $0x28] sm:$0xff]
    %v703 = vld [vmem:[%s3 + $0x30] sm:$0xff]
    %v704 = vld [vmem:[%s3 + $0x38] sm:$0xff]
    %v705 = vld [vmem:[%s3 + $0x40] sm:$0xff]
    %v706 = vld [vmem:[%s3 + $0x48] sm:$0xff]
    %v707 = vld [vmem:[%s3 + $0x50] sm:$0xff]
    %v708 = vld [vmem:[%s3 + $0x58] sm:$0xff]
    %v709 = vld [vmem:[%s3 + $0x60] sm:$0xff]
    %v710 = vld [vmem:[%s3 + $0x68] sm:$0xff]
    %v711 = vld [vmem:[%s3 + $0x70] sm:$0xff]
    %v712 = vld [vmem:[%s3 + $0x78] sm:$0xff]
    %s713 = scalar_lea.vmem %s3, 128
    %v714 = vld [vmem:[%s713] sm:$0xff]
    %v715 = vld [vmem:[%s713 + $0x8] sm:$0xff]
    %v716 = vld [vmem:[%s713 + $0x10] sm:$0xff]
    %v717 = vld [vmem:[%s713 + $0x18] sm:$0xff]
    %v718 = vld [vmem:[%s713 + $0x20] sm:$0xff]
    %v719 = vld [vmem:[%s713 + $0x28] sm:$0xff]
    %v720 = vld [vmem:[%s713 + $0x30] sm:$0xff]
    %v721 = vld [vmem:[%s713 + $0x38] sm:$0xff]
    %v722 = vld [vmem:[%s713 + $0x40] sm:$0xff]
    %v723 = vld [vmem:[%s713 + $0x48] sm:$0xff]
    %v724 = vld [vmem:[%s713 + $0x50] sm:$0xff]
    %v725 = vld [vmem:[%s713 + $0x58] sm:$0xff]
    %v726 = vld [vmem:[%s713 + $0x60] sm:$0xff]
    %v727 = vld [vmem:[%s713 + $0x68] sm:$0xff]
    %v728 = vld [vmem:[%s713 + $0x70] sm:$0xff]
    %v729 = vld [vmem:[%s713 + $0x78] sm:$0xff]
    %730 = vmatprep.subr.mxu0 0.0
    %731 = vmatpush1.msra.mxu0 %v729
    %732 = vmatprep.subr.mxu0 0.0
    %733 = vmatpush1.msra.mxu0 %v728
    %734 = vmatprep.subr.mxu0 0.0
    %735 = vmatpush1.msra.mxu0 %v727
    %736 = vmatprep.subr.mxu0 0.0
    %737 = vmatpush1.msra.mxu0 %v726
    %738 = vmatprep.subr.mxu0 0.0
    %739 = vmatpush1.msra.mxu0 %v725
    %740 = vmatprep.subr.mxu0 0.0
    %741 = vmatpush1.msra.mxu0 %v724
    %742 = vmatprep.subr.mxu0 0.0
    %743 = vmatpush1.msra.mxu0 %v723
    %744 = vmatprep.subr.mxu0 0.0
    %745 = vmatpush1.msra.mxu0 %v722
    %746 = vmatprep.subr.mxu0 0.0
    %747 = vmatpush1.msra.mxu0 %v721
    %748 = vmatprep.subr.mxu0 0.0
    %749 = vmatpush1.msra.mxu0 %v720
    %750 = vmatprep.subr.mxu0 0.0
    %751 = vmatpush1.msra.mxu0 %v719
    %752 = vmatprep.subr.mxu0 0.0
    %753 = vmatpush1.msra.mxu0 %v718
    %754 = vmatprep.subr.mxu0 0.0
    %755 = vmatpush1.msra.mxu0 %v717
    %756 = vmatprep.subr.mxu0 0.0
    %757 = vmatpush1.msra.mxu0 %v716
    %758 = vmatprep.subr.mxu0 0.0
    %759 = vmatpush1.msra.mxu0 %v715
    %760 = vmatprep.subr.mxu0 0.0
    %761 = vmatpush1.msra.mxu0 %v714
    %762 = vmatprep.subr.mxu0 0.0
    %763 = vmatpush2.msra.mxu0 0.0
    %764 = vmatprep.subr.mxu0 0.0
    %765 = vmatpush2.msra.mxu0 0.0
    %766 = vmatprep.subr.mxu0 0.0
    %767 = vmatpush2.msra.mxu0 0.0
    %768 = vmatprep.subr.mxu0 0.0
    %769 = vmatpush2.msra.mxu0 0.0
    %770 = vmatprep.subr.mxu0 0.0
    %771 = vmatpush2.msra.mxu0 0.0
    %772 = vmatprep.subr.mxu0 0.0
    %773 = vmatpush2.msra.mxu0 0.0
    %774 = vmatprep.subr.mxu0 0.0
    %775 = vmatpush2.msra.mxu0 0.0
    %776 = vmatprep.subr.mxu0 0.0
    %777 = vmatpush2.msra.mxu0 0.0
    %778 = vmatprep.subr.mxu0 0.0
    %779 = vmatpush2.msra.mxu0 0.0
    %780 = vmatprep.subr.mxu0 0.0
    %781 = vmatpush2.msra.mxu0 0.0
    %782 = vmatprep.subr.mxu0 0.0
    %783 = vmatpush2.msra.mxu0 0.0
    %784 = vmatprep.subr.mxu0 0.0
    %785 = vmatpush2.msra.mxu0 0.0
    %786 = vmatprep.subr.mxu0 0.0
    %787 = vmatpush2.msra.mxu0 0.0
    %788 = vmatprep.subr.mxu0 0.0
    %789 = vmatpush2.msra.mxu0 0.0
    %790 = vmatprep.subr.mxu0 0.0
    %791 = vmatpush2.msra.mxu0 0.0
    %792 = vmatprep.subr.mxu0 0.0
    %793 = vmatpush2.msra.mxu0 0.0
    %794 = vmatprep.mubr.f32.mxu0 0.0
    %795 = vmatmul.mubr.f32.gmra.mxu0 %v682
    %v796 = vpop.f32.mrf.mxu0
    %v797 = vadd.f32 0.0, %v796
    %v798 = vpop.f32.mrf.mxu0
    %799 = vdwg.mxu0
    %800 = vmatprep.subr.mxu0 0.0
    %801 = vmatpush1.msra.mxu0 %v712
    %802 = vmatprep.subr.mxu0 0.0
    %803 = vmatpush1.msra.mxu0 %v711
    %804 = vmatprep.subr.mxu0 0.0
    %805 = vmatpush1.msra.mxu0 %v710
    %806 = vmatprep.subr.mxu0 0.0
    %807 = vmatpush1.msra.mxu0 %v709
    %808 = vmatprep.subr.mxu0 0.0
    %809 = vmatpush1.msra.mxu0 %v708
    %810 = vmatprep.subr.mxu0 0.0
    %811 = vmatpush1.msra.mxu0 %v707
    %812 = vmatprep.subr.mxu0 0.0
    %813 = vmatpush1.msra.mxu0 %v706
    %814 = vmatprep.subr.mxu0 0.0
    %815 = vmatpush1.msra.mxu0 %v705
    %816 = vmatprep.subr.mxu0 0.0
    %817 = vmatpush1.msra.mxu0 %v704
    %818 = vmatprep.subr.mxu0 0.0
    %819 = vmatpush1.msra.mxu0 %v703
    %820 = vmatprep.subr.mxu0 0.0
    %821 = vmatpush1.msra.mxu0 %v702
    %822 = vmatprep.subr.mxu0 0.0
    %823 = vmatpush1.msra.mxu0 %v701
    %824 = vmatprep.subr.mxu0 0.0
    %825 = vmatpush1.msra.mxu0 %v700
    %826 = vmatprep.subr.mxu0 0.0
    %827 = vmatpush1.msra.mxu0 %v699
    %828 = vmatprep.subr.mxu0 0.0
    %829 = vmatpush1.msra.mxu0 %v698
    %830 = vmatprep.subr.mxu0 0.0
    %831 = vmatpush1.msra.mxu0 %v697
    %832 = vmatprep.subr.mxu0 0.0
    %833 = vmatpush2.msra.mxu0 0.0
    %834 = vmatprep.subr.mxu0 0.0
    %835 = vmatpush2.msra.mxu0 0.0
    %836 = vmatprep.subr.mxu0 0.0
    %837 = vmatpush2.msra.mxu0 0.0
    %838 = vmatprep.subr.mxu0 0.0
    %839 = vmatpush2.msra.mxu0 0.0
    %840 = vmatprep.subr.mxu0 0.0
    %841 = vmatpush2.msra.mxu0 0.0
    %842 = vmatprep.subr.mxu0 0.0
    %843 = vmatpush2.msra.mxu0 0.0
    %844 = vmatprep.subr.mxu0 0.0
    %845 = vmatpush2.msra.mxu0 0.0
    %846 = vmatprep.subr.mxu0 0.0
    %847 = vmatpush2.msra.mxu0 0.0
    %848 = vmatprep.subr.mxu0 0.0
    %849 = vmatpush2.msra.mxu0 0.0
    %850 = vmatprep.subr.mxu0 0.0
    %851 = vmatpush2.msra.mxu0 0.0
    %852 = vmatprep.subr.mxu0 0.0
    %853 = vmatpush2.msra.mxu0 0.0
    %854 = vmatprep.subr.mxu0 0.0
    %855 = vmatpush2.msra.mxu0 0.0
    %856 = vmatprep.subr.mxu0 0.0
    %857 = vmatpush2.msra.mxu0 0.0
    %858 = vmatprep.subr.mxu0 0.0
    %859 = vmatpush2.msra.mxu0 0.0
    %860 = vmatprep.subr.mxu0 0.0
    %861 = vmatpush2.msra.mxu0 0.0
    %862 = vmatprep.subr.mxu0 0.0
    %863 = vmatpush2.msra.mxu0 0.0
    %864 = vmatprep.mubr.f32.mxu0 0.0
    %865 = vmatmul.mubr.f32.gmra.mxu0 %v681
    %v866 = vpop.f32.mrf.mxu0
    %v867 = vadd.f32 %v797, %v866
    %v868 = vpop.f32.mrf.mxu0
    %869 = vdwg.mxu0
    %s870 = scalar_lea.vmem %s3, 256
    %v871 = vld [vmem:[%s870] sm:$0xff]
    %v872 = vld [vmem:[%s870 + $0x8] sm:$0xff]
    %v873 = vld [vmem:[%s870 + $0x10] sm:$0xff]
    %v874 = vld [vmem:[%s870 + $0x18] sm:$0xff]
    %v875 = vld [vmem:[%s870 + $0x20] sm:$0xff]
    %v876 = vld [vmem:[%s870 + $0x28] sm:$0xff]
    %v877 = vld [vmem:[%s870 + $0x30] sm:$0xff]
    %v878 = vld [vmem:[%s870 + $0x38] sm:$0xff]
    %v879 = vld [vmem:[%s870 + $0x40] sm:$0xff]
    %v880 = vld [vmem:[%s870 + $0x48] sm:$0xff]
    %v881 = vld [vmem:[%s870 + $0x50] sm:$0xff]
    %v882 = vld [vmem:[%s870 + $0x58] sm:$0xff]
    %v883 = vld [vmem:[%s870 + $0x60] sm:$0xff]
    %v884 = vld [vmem:[%s870 + $0x68] sm:$0xff]
    %v885 = vld [vmem:[%s870 + $0x70] sm:$0xff]
    %v886 = vld [vmem:[%s870 + $0x78] sm:$0xff]
    %887 = vmatprep.subr.mxu0 0.0
    %888 = vmatpush1.msra.mxu0 %v886
    %889 = vmatprep.subr.mxu0 0.0
    %890 = vmatpush1.msra.mxu0 %v885
    %891 = vmatprep.subr.mxu0 0.0
    %892 = vmatpush1.msra.mxu0 %v884
    %893 = vmatprep.subr.mxu0 0.0
    %894 = vmatpush1.msra.mxu0 %v883
    %895 = vmatprep.subr.mxu0 0.0
    %896 = vmatpush1.msra.mxu0 %v882
    %897 = vmatprep.subr.mxu0 0.0
    %898 = vmatpush1.msra.mxu0 %v881
    %899 = vmatprep.subr.mxu0 0.0
    %900 = vmatpush1.msra.mxu0 %v880
    %901 = vmatprep.subr.mxu0 0.0
    %902 = vmatpush1.msra.mxu0 %v879
    %903 = vmatprep.subr.mxu0 0.0
    %904 = vmatpush1.msra.mxu0 %v878
    %905 = vmatprep.subr.mxu0 0.0
    %906 = vmatpush1.msra.mxu0 %v877
    %907 = vmatprep.subr.mxu0 0.0
    %908 = vmatpush1.msra.mxu0 %v876
    %909 = vmatprep.subr.mxu0 0.0
    %910 = vmatpush1.msra.mxu0 %v875
    %911 = vmatprep.subr.mxu0 0.0
    %912 = vmatpush1.msra.mxu0 %v874
    %913 = vmatprep.subr.mxu0 0.0
    %914 = vmatpush1.msra.mxu0 %v873
    %915 = vmatprep.subr.mxu0 0.0
    %916 = vmatpush1.msra.mxu0 %v872
    %917 = vmatprep.subr.mxu0 0.0
    %918 = vmatpush1.msra.mxu0 %v871
    %919 = vmatprep.subr.mxu0 0.0
    %920 = vmatpush2.msra.mxu0 0.0
    %921 = vmatprep.subr.mxu0 0.0
    %922 = vmatpush2.msra.mxu0 0.0
    %923 = vmatprep.subr.mxu0 0.0
    %924 = vmatpush2.msra.mxu0 0.0
    %925 = vmatprep.subr.mxu0 0.0
    %926 = vmatpush2.msra.mxu0 0.0
    %927 = vmatprep.subr.mxu0 0.0
    %928 = vmatpush2.msra.mxu0 0.0
    %929 = vmatprep.subr.mxu0 0.0
    %930 = vmatpush2.msra.mxu0 0.0
    %931 = vmatprep.subr.mxu0 0.0
    %932 = vmatpush2.msra.mxu0 0.0
    %933 = vmatprep.subr.mxu0 0.0
    %934 = vmatpush2.msra.mxu0 0.0
    %935 = vmatprep.subr.mxu0 0.0
    %936 = vmatpush2.msra.mxu0 0.0
    %937 = vmatprep.subr.mxu0 0.0
    %938 = vmatpush2.msra.mxu0 0.0
    %939 = vmatprep.subr.mxu0 0.0
    %940 = vmatpush2.msra.mxu0 0.0
    %941 = vmatprep.subr.mxu0 0.0
    %942 = vmatpush2.msra.mxu0 0.0
    %943 = vmatprep.subr.mxu0 0.0
    %944 = vmatpush2.msra.mxu0 0.0
    %945 = vmatprep.subr.mxu0 0.0
    %946 = vmatpush2.msra.mxu0 0.0
    %947 = vmatprep.subr.mxu0 0.0
    %948 = vmatpush2.msra.mxu0 0.0
    %949 = vmatprep.subr.mxu0 0.0
    %950 = vmatpush2.msra.mxu0 0.0
    %951 = vmatprep.mubr.f32.mxu0 0.0
    %952 = vmatmul.mubr.f32.gmra.mxu0 %v683
    %v953 = vpop.f32.mrf.mxu0
    %v954 = vadd.f32 0.0, %v953
    %v955 = vpop.f32.mrf.mxu0
    %956 = vdwg.mxu0
    %v957 = vadd.f32 %v867, %v954
    %s958 = scalar_lea.vmem %s3, 384
    %v959 = vld [vmem:[%s958] sm:$0xff]
    %v960 = vld [vmem:[%s958 + $0x8] sm:$0xff]
    %v961 = vld [vmem:[%s958 + $0x10] sm:$0xff]
    %v962 = vld [vmem:[%s958 + $0x18] sm:$0xff]
    %v963 = vld [vmem:[%s958 + $0x20] sm:$0xff]
    %v964 = vld [vmem:[%s958 + $0x28] sm:$0xff]
    %v965 = vld [vmem:[%s958 + $0x30] sm:$0xff]
    %v966 = vld [vmem:[%s958 + $0x38] sm:$0xff]
    %v967 = vld [vmem:[%s958 + $0x40] sm:$0xff]
    %v968 = vld [vmem:[%s958 + $0x48] sm:$0xff]
    %v969 = vld [vmem:[%s958 + $0x50] sm:$0xff]
    %v970 = vld [vmem:[%s958 + $0x58] sm:$0xff]
    %v971 = vld [vmem:[%s958 + $0x60] sm:$0xff]
    %v972 = vld [vmem:[%s958 + $0x68] sm:$0xff]
    %v973 = vld [vmem:[%s958 + $0x70] sm:$0xff]
    %v974 = vld [vmem:[%s958 + $0x78] sm:$0xff]
    %975 = vmatprep.subr.mxu0 0.0
    %976 = vmatpush1.msra.mxu0 %v974
    %977 = vmatprep.subr.mxu0 0.0
    %978 = vmatpush1.msra.mxu0 %v973
    %979 = vmatprep.subr.mxu0 0.0
    %980 = vmatpush1.msra.mxu0 %v972
    %981 = vmatprep.subr.mxu0 0.0
    %982 = vmatpush1.msra.mxu0 %v971
    %983 = vmatprep.subr.mxu0 0.0
    %984 = vmatpush1.msra.mxu0 %v970
    %985 = vmatprep.subr.mxu0 0.0
    %986 = vmatpush1.msra.mxu0 %v969
    %987 = vmatprep.subr.mxu0 0.0
    %988 = vmatpush1.msra.mxu0 %v968
    %989 = vmatprep.subr.mxu0 0.0
    %990 = vmatpush1.msra.mxu0 %v967
    %991 = vmatprep.subr.mxu0 0.0
    %992 = vmatpush1.msra.mxu0 %v966
    %993 = vmatprep.subr.mxu0 0.0
    %994 = vmatpush1.msra.mxu0 %v965
    %995 = vmatprep.subr.mxu0 0.0
    %996 = vmatpush1.msra.mxu0 %v964
    %997 = vmatprep.subr.mxu0 0.0
    %998 = vmatpush1.msra.mxu0 %v963
    %999 = vmatprep.subr.mxu0 0.0
    %1000 = vmatpush1.msra.mxu0 %v962
    %1001 = vmatprep.subr.mxu0 0.0
    %1002 = vmatpush1.msra.mxu0 %v961
    %1003 = vmatprep.subr.mxu0 0.0
    %1004 = vmatpush1.msra.mxu0 %v960
    %1005 = vmatprep.subr.mxu0 0.0
    %1006 = vmatpush1.msra.mxu0 %v959
    %1007 = vmatprep.subr.mxu0 0.0
    %1008 = vmatpush2.msra.mxu0 0.0
    %1009 = vmatprep.subr.mxu0 0.0
    %1010 = vmatpush2.msra.mxu0 0.0
    %1011 = vmatprep.subr.mxu0 0.0
    %1012 = vmatpush2.msra.mxu0 0.0
    %1013 = vmatprep.subr.mxu0 0.0
    %1014 = vmatpush2.msra.mxu0 0.0
    %1015 = vmatprep.subr.mxu0 0.0
    %1016 = vmatpush2.msra.mxu0 0.0
    %1017 = vmatprep.subr.mxu0 0.0
    %1018 = vmatpush2.msra.mxu0 0.0
    %1019 = vmatprep.subr.mxu0 0.0
    %1020 = vmatpush2.msra.mxu0 0.0
    %1021 = vmatprep.subr.mxu0 0.0
    %1022 = vmatpush2.msra.mxu0 0.0
    %1023 = vmatprep.subr.mxu0 0.0
    %1024 = vmatpush2.msra.mxu0 0.0
    %1025 = vmatprep.subr.mxu0 0.0
    %1026 = vmatpush2.msra.mxu0 0.0
    %1027 = vmatprep.subr.mxu0 0.0
    %1028 = vmatpush2.msra.mxu0 0.0
    %1029 = vmatprep.subr.mxu0 0.0
    %1030 = vmatpush2.msra.mxu0 0.0
    %1031 = vmatprep.subr.mxu0 0.0
    %1032 = vmatpush2.msra.mxu0 0.0
    %1033 = vmatprep.subr.mxu0 0.0
    %1034 = vmatpush2.msra.mxu0 0.0
    %1035 = vmatprep.subr.mxu0 0.0
    %1036 = vmatpush2.msra.mxu0 0.0
    %1037 = vmatprep.subr.mxu0 0.0
    %1038 = vmatpush2.msra.mxu0 0.0
    %1039 = vmatprep.mubr.f32.mxu0 0.0
    %1040 = vmatmul.mubr.f32.gmra.mxu0 %v684
    %v1041 = vpop.f32.mrf.mxu0
    %v1042 = vadd.f32 0.0, %v1041
    %v1043 = vpop.f32.mrf.mxu0
    %1044 = vdwg.mxu0
    %v1045 = vadd.f32 %v957, %v1042
    %s1046 = scalar_lea.vmem %s3, 512
    %v1047 = vld [vmem:[%s1046] sm:$0xff]
    %v1048 = vld [vmem:[%s1046 + $0x8] sm:$0xff]
    %v1049 = vld [vmem:[%s1046 + $0x10] sm:$0xff]
    %v1050 = vld [vmem:[%s1046 + $0x18] sm:$0xff]
    %v1051 = vld [vmem:[%s1046 + $0x20] sm:$0xff]
    %v1052 = vld [vmem:[%s1046 + $0x28] sm:$0xff]
    %v1053 = vld [vmem:[%s1046 + $0x30] sm:$0xff]
    %v1054 = vld [vmem:[%s1046 + $0x38] sm:$0xff]
    %v1055 = vld [vmem:[%s1046 + $0x40] sm:$0xff]
    %v1056 = vld [vmem:[%s1046 + $0x48] sm:$0xff]
    %v1057 = vld [vmem:[%s1046 + $0x50] sm:$0xff]
    %v1058 = vld [vmem:[%s1046 + $0x58] sm:$0xff]
    %v1059 = vld [vmem:[%s1046 + $0x60] sm:$0xff]
    %v1060 = vld [vmem:[%s1046 + $0x68] sm:$0xff]
    %v1061 = vld [vmem:[%s1046 + $0x70] sm:$0xff]
    %v1062 = vld [vmem:[%s1046 + $0x78] sm:$0xff]
    %1063 = vmatprep.subr.mxu0 0.0
    %1064 = vmatpush1.msra.mxu0 %v1062
    %1065 = vmatprep.subr.mxu0 0.0
    %1066 = vmatpush1.msra.mxu0 %v1061
    %1067 = vmatprep.subr.mxu0 0.0
    %1068 = vmatpush1.msra.mxu0 %v1060
    %1069 = vmatprep.subr.mxu0 0.0
    %1070 = vmatpush1.msra.mxu0 %v1059
    %1071 = vmatprep.subr.mxu0 0.0
    %1072 = vmatpush1.msra.mxu0 %v1058
    %1073 = vmatprep.subr.mxu0 0.0
    %1074 = vmatpush1.msra.mxu0 %v1057
    %1075 = vmatprep.subr.mxu0 0.0
    %1076 = vmatpush1.msra.mxu0 %v1056
    %1077 = vmatprep.subr.mxu0 0.0
    %1078 = vmatpush1.msra.mxu0 %v1055
    %1079 = vmatprep.subr.mxu0 0.0
    %1080 = vmatpush1.msra.mxu0 %v1054
    %1081 = vmatprep.subr.mxu0 0.0
    %1082 = vmatpush1.msra.mxu0 %v1053
    %1083 = vmatprep.subr.mxu0 0.0
    %1084 = vmatpush1.msra.mxu0 %v1052
    %1085 = vmatprep.subr.mxu0 0.0
    %1086 = vmatpush1.msra.mxu0 %v1051
    %1087 = vmatprep.subr.mxu0 0.0
    %1088 = vmatpush1.msra.mxu0 %v1050
    %1089 = vmatprep.subr.mxu0 0.0
    %1090 = vmatpush1.msra.mxu0 %v1049
    %1091 = vmatprep.subr.mxu0 0.0
    %1092 = vmatpush1.msra.mxu0 %v1048
    %1093 = vmatprep.subr.mxu0 0.0
    %1094 = vmatpush1.msra.mxu0 %v1047
    %1095 = vmatprep.subr.mxu0 0.0
    %1096 = vmatpush2.msra.mxu0 0.0
    %1097 = vmatprep.subr.mxu0 0.0
    %1098 = vmatpush2.msra.mxu0 0.0
    %1099 = vmatprep.subr.mxu0 0.0
    %1100 = vmatpush2.msra.mxu0 0.0
    %1101 = vmatprep.subr.mxu0 0.0
    %1102 = vmatpush2.msra.mxu0 0.0
    %1103 = vmatprep.subr.mxu0 0.0
    %1104 = vmatpush2.msra.mxu0 0.0
    %1105 = vmatprep.subr.mxu0 0.0
    %1106 = vmatpush2.msra.mxu0 0.0
    %1107 = vmatprep.subr.mxu0 0.0
    %1108 = vmatpush2.msra.mxu0 0.0
    %1109 = vmatprep.subr.mxu0 0.0
    %1110 = vmatpush2.msra.mxu0 0.0
    %1111 = vmatprep.subr.mxu0 0.0
    %1112 = vmatpush2.msra.mxu0 0.0
    %1113 = vmatprep.subr.mxu0 0.0
    %1114 = vmatpush2.msra.mxu0 0.0
    %1115 = vmatprep.subr.mxu0 0.0
    %1116 = vmatpush2.msra.mxu0 0.0
    %1117 = vmatprep.subr.mxu0 0.0
    %1118 = vmatpush2.msra.mxu0 0.0
    %1119 = vmatprep.subr.mxu0 0.0
    %1120 = vmatpush2.msra.mxu0 0.0
    %1121 = vmatprep.subr.mxu0 0.0
    %1122 = vmatpush2.msra.mxu0 0.0
    %1123 = vmatprep.subr.mxu0 0.0
    %1124 = vmatpush2.msra.mxu0 0.0
    %1125 = vmatprep.subr.mxu0 0.0
    %1126 = vmatpush2.msra.mxu0 0.0
    %1127 = vmatprep.mubr.f32.mxu0 0.0
    %1128 = vmatmul.mubr.f32.gmra.mxu0 %v685
    %v1129 = vpop.f32.mrf.mxu0
    %v1130 = vadd.f32 0.0, %v1129
    %v1131 = vpop.f32.mrf.mxu0
    %1132 = vdwg.mxu0
    %v1133 = vadd.f32 %v1045, %v1130
    %s1134 = scalar_lea.vmem %s3, 640
    %v1135 = vld [vmem:[%s1134] sm:$0xff]
    %v1136 = vld [vmem:[%s1134 + $0x8] sm:$0xff]
    %v1137 = vld [vmem:[%s1134 + $0x10] sm:$0xff]
    %v1138 = vld [vmem:[%s1134 + $0x18] sm:$0xff]
    %v1139 = vld [vmem:[%s1134 + $0x20] sm:$0xff]
    %v1140 = vld [vmem:[%s1134 + $0x28] sm:$0xff]
    %v1141 = vld [vmem:[%s1134 + $0x30] sm:$0xff]
    %v1142 = vld [vmem:[%s1134 + $0x38] sm:$0xff]
    %v1143 = vld [vmem:[%s1134 + $0x40] sm:$0xff]
    %v1144 = vld [vmem:[%s1134 + $0x48] sm:$0xff]
    %v1145 = vld [vmem:[%s1134 + $0x50] sm:$0xff]
    %v1146 = vld [vmem:[%s1134 + $0x58] sm:$0xff]
    %v1147 = vld [vmem:[%s1134 + $0x60] sm:$0xff]
    %v1148 = vld [vmem:[%s1134 + $0x68] sm:$0xff]
    %v1149 = vld [vmem:[%s1134 + $0x70] sm:$0xff]
    %v1150 = vld [vmem:[%s1134 + $0x78] sm:$0xff]
    %1151 = vmatprep.subr.mxu0 0.0
    %1152 = vmatpush1.msra.mxu0 %v1150
    %1153 = vmatprep.subr.mxu0 0.0
    %1154 = vmatpush1.msra.mxu0 %v1149
    %1155 = vmatprep.subr.mxu0 0.0
    %1156 = vmatpush1.msra.mxu0 %v1148
    %1157 = vmatprep.subr.mxu0 0.0
    %1158 = vmatpush1.msra.mxu0 %v1147
    %1159 = vmatprep.subr.mxu0 0.0
    %1160 = vmatpush1.msra.mxu0 %v1146
    %1161 = vmatprep.subr.mxu0 0.0
    %1162 = vmatpush1.msra.mxu0 %v1145
    %1163 = vmatprep.subr.mxu0 0.0
    %1164 = vmatpush1.msra.mxu0 %v1144
    %1165 = vmatprep.subr.mxu0 0.0
    %1166 = vmatpush1.msra.mxu0 %v1143
    %1167 = vmatprep.subr.mxu0 0.0
    %1168 = vmatpush1.msra.mxu0 %v1142
    %1169 = vmatprep.subr.mxu0 0.0
    %1170 = vmatpush1.msra.mxu0 %v1141
    %1171 = vmatprep.subr.mxu0 0.0
    %1172 = vmatpush1.msra.mxu0 %v1140
    %1173 = vmatprep.subr.mxu0 0.0
    %1174 = vmatpush1.msra.mxu0 %v1139
    %1175 = vmatprep.subr.mxu0 0.0
    %1176 = vmatpush1.msra.mxu0 %v1138
    %1177 = vmatprep.subr.mxu0 0.0
    %1178 = vmatpush1.msra.mxu0 %v1137
    %1179 = vmatprep.subr.mxu0 0.0
    %1180 = vmatpush1.msra.mxu0 %v1136
    %1181 = vmatprep.subr.mxu0 0.0
    %1182 = vmatpush1.msra.mxu0 %v1135
    %1183 = vmatprep.subr.mxu0 0.0
    %1184 = vmatpush2.msra.mxu0 0.0
    %1185 = vmatprep.subr.mxu0 0.0
    %1186 = vmatpush2.msra.mxu0 0.0
    %1187 = vmatprep.subr.mxu0 0.0
    %1188 = vmatpush2.msra.mxu0 0.0
    %1189 = vmatprep.subr.mxu0 0.0
    %1190 = vmatpush2.msra.mxu0 0.0
    %1191 = vmatprep.subr.mxu0 0.0
    %1192 = vmatpush2.msra.mxu0 0.0
    %1193 = vmatprep.subr.mxu0 0.0
    %1194 = vmatpush2.msra.mxu0 0.0
    %1195 = vmatprep.subr.mxu0 0.0
    %1196 = vmatpush2.msra.mxu0 0.0
    %1197 = vmatprep.subr.mxu0 0.0
    %1198 = vmatpush2.msra.mxu0 0.0
    %1199 = vmatprep.subr.mxu0 0.0
    %1200 = vmatpush2.msra.mxu0 0.0
    %1201 = vmatprep.subr.mxu0 0.0
    %1202 = vmatpush2.msra.mxu0 0.0
    %1203 = vmatprep.subr.mxu0 0.0
    %1204 = vmatpush2.msra.mxu0 0.0
    %1205 = vmatprep.subr.mxu0 0.0
    %1206 = vmatpush2.msra.mxu0 0.0
    %1207 = vmatprep.subr.mxu0 0.0
    %1208 = vmatpush2.msra.mxu0 0.0
    %1209 = vmatprep.subr.mxu0 0.0
    %1210 = vmatpush2.msra.mxu0 0.0
    %1211 = vmatprep.subr.mxu0 0.0
    %1212 = vmatpush2.msra.mxu0 0.0
    %1213 = vmatprep.subr.mxu0 0.0
    %1214 = vmatpush2.msra.mxu0 0.0
    %1215 = vmatprep.mubr.f32.mxu0 0.0
    %1216 = vmatmul.mubr.f32.gmra.mxu0 %v686
    %v1217 = vpop.f32.mrf.mxu0
    %v1218 = vadd.f32 0.0, %v1217
    %v1219 = vpop.f32.mrf.mxu0
    %1220 = vdwg.mxu0
    %v1221 = vadd.f32 %v1133, %v1218
    %s1222 = scalar_lea.vmem %s3, 768
    %v1223 = vld [vmem:[%s1222] sm:$0xff]
    %v1224 = vld [vmem:[%s1222 + $0x8] sm:$0xff]
    %v1225 = vld [vmem:[%s1222 + $0x10] sm:$0xff]
    %v1226 = vld [vmem:[%s1222 + $0x18] sm:$0xff]
    %v1227 = vld [vmem:[%s1222 + $0x20] sm:$0xff]
    %v1228 = vld [vmem:[%s1222 + $0x28] sm:$0xff]
    %v1229 = vld [vmem:[%s1222 + $0x30] sm:$0xff]
    %v1230 = vld [vmem:[%s1222 + $0x38] sm:$0xff]
    %v1231 = vld [vmem:[%s1222 + $0x40] sm:$0xff]
    %v1232 = vld [vmem:[%s1222 + $0x48] sm:$0xff]
    %v1233 = vld [vmem:[%s1222 + $0x50] sm:$0xff]
    %v1234 = vld [vmem:[%s1222 + $0x58] sm:$0xff]
    %v1235 = vld [vmem:[%s1222 + $0x60] sm:$0xff]
    %v1236 = vld [vmem:[%s1222 + $0x68] sm:$0xff]
    %v1237 = vld [vmem:[%s1222 + $0x70] sm:$0xff]
    %v1238 = vld [vmem:[%s1222 + $0x78] sm:$0xff]
    %1239 = vmatprep.subr.mxu0 0.0
    %1240 = vmatpush1.msra.mxu0 %v1238
    %1241 = vmatprep.subr.mxu0 0.0
    %1242 = vmatpush1.msra.mxu0 %v1237
    %1243 = vmatprep.subr.mxu0 0.0
    %1244 = vmatpush1.msra.mxu0 %v1236
    %1245 = vmatprep.subr.mxu0 0.0
    %1246 = vmatpush1.msra.mxu0 %v1235
    %1247 = vmatprep.subr.mxu0 0.0
    %1248 = vmatpush1.msra.mxu0 %v1234
    %1249 = vmatprep.subr.mxu0 0.0
    %1250 = vmatpush1.msra.mxu0 %v1233
    %1251 = vmatprep.subr.mxu0 0.0
    %1252 = vmatpush1.msra.mxu0 %v1232
    %1253 = vmatprep.subr.mxu0 0.0
    %1254 = vmatpush1.msra.mxu0 %v1231
    %1255 = vmatprep.subr.mxu0 0.0
    %1256 = vmatpush1.msra.mxu0 %v1230
    %1257 = vmatprep.subr.mxu0 0.0
    %1258 = vmatpush1.msra.mxu0 %v1229
    %1259 = vmatprep.subr.mxu0 0.0
    %1260 = vmatpush1.msra.mxu0 %v1228
    %1261 = vmatprep.subr.mxu0 0.0
    %1262 = vmatpush1.msra.mxu0 %v1227
    %1263 = vmatprep.subr.mxu0 0.0
    %1264 = vmatpush1.msra.mxu0 %v1226
    %1265 = vmatprep.subr.mxu0 0.0
    %1266 = vmatpush1.msra.mxu0 %v1225
    %1267 = vmatprep.subr.mxu0 0.0
    %1268 = vmatpush1.msra.mxu0 %v1224
    %1269 = vmatprep.subr.mxu0 0.0
    %1270 = vmatpush1.msra.mxu0 %v1223
    %1271 = vmatprep.subr.mxu0 0.0
    %1272 = vmatpush2.msra.mxu0 0.0
    %1273 = vmatprep.subr.mxu0 0.0
    %1274 = vmatpush2.msra.mxu0 0.0
    %1275 = vmatprep.subr.mxu0 0.0
    %1276 = vmatpush2.msra.mxu0 0.0
    %1277 = vmatprep.subr.mxu0 0.0
    %1278 = vmatpush2.msra.mxu0 0.0
    %1279 = vmatprep.subr.mxu0 0.0
    %1280 = vmatpush2.msra.mxu0 0.0
    %1281 = vmatprep.subr.mxu0 0.0
    %1282 = vmatpush2.msra.mxu0 0.0
    %1283 = vmatprep.subr.mxu0 0.0
    %1284 = vmatpush2.msra.mxu0 0.0
    %1285 = vmatprep.subr.mxu0 0.0
    %1286 = vmatpush2.msra.mxu0 0.0
    %1287 = vmatprep.subr.mxu0 0.0
    %1288 = vmatpush2.msra.mxu0 0.0
    %1289 = vmatprep.subr.mxu0 0.0
    %1290 = vmatpush2.msra.mxu0 0.0
    %1291 = vmatprep.subr.mxu0 0.0
    %1292 = vmatpush2.msra.mxu0 0.0
    %1293 = vmatprep.subr.mxu0 0.0
    %1294 = vmatpush2.msra.mxu0 0.0
    %1295 = vmatprep.subr.mxu0 0.0
    %1296 = vmatpush2.msra.mxu0 0.0
    %1297 = vmatprep.subr.mxu0 0.0
    %1298 = vmatpush2.msra.mxu0 0.0
    %1299 = vmatprep.subr.mxu0 0.0
    %1300 = vmatpush2.msra.mxu0 0.0
    %1301 = vmatprep.subr.mxu0 0.0
    %1302 = vmatpush2.msra.mxu0 0.0
    %1303 = vmatprep.mubr.f32.mxu0 0.0
    %1304 = vmatmul.mubr.f32.gmra.mxu0 %v687
    %v1305 = vpop.f32.mrf.mxu0
    %v1306 = vadd.f32 0.0, %v1305
    %v1307 = vpop.f32.mrf.mxu0
    %1308 = vdwg.mxu0
    %v1309 = vadd.f32 %v1221, %v1306
    %s1310 = scalar_lea.vmem %s3, 896
    %v1311 = vld [vmem:[%s1310] sm:$0xff]
    %v1312 = vld [vmem:[%s1310 + $0x8] sm:$0xff]
    %v1313 = vld [vmem:[%s1310 + $0x10] sm:$0xff]
    %v1314 = vld [vmem:[%s1310 + $0x18] sm:$0xff]
    %v1315 = vld [vmem:[%s1310 + $0x20] sm:$0xff]
    %v1316 = vld [vmem:[%s1310 + $0x28] sm:$0xff]
    %v1317 = vld [vmem:[%s1310 + $0x30] sm:$0xff]
    %v1318 = vld [vmem:[%s1310 + $0x38] sm:$0xff]
    %v1319 = vld [vmem:[%s1310 + $0x40] sm:$0xff]
    %v1320 = vld [vmem:[%s1310 + $0x48] sm:$0xff]
    %v1321 = vld [vmem:[%s1310 + $0x50] sm:$0xff]
    %v1322 = vld [vmem:[%s1310 + $0x58] sm:$0xff]
    %v1323 = vld [vmem:[%s1310 + $0x60] sm:$0xff]
    %v1324 = vld [vmem:[%s1310 + $0x68] sm:$0xff]
    %v1325 = vld [vmem:[%s1310 + $0x70] sm:$0xff]
    %v1326 = vld [vmem:[%s1310 + $0x78] sm:$0xff]
    %1327 = vmatprep.subr.mxu0 0.0
    %1328 = vmatpush1.msra.mxu0 %v1326
    %1329 = vmatprep.subr.mxu0 0.0
    %1330 = vmatpush1.msra.mxu0 %v1325
    %1331 = vmatprep.subr.mxu0 0.0
    %1332 = vmatpush1.msra.mxu0 %v1324
    %1333 = vmatprep.subr.mxu0 0.0
    %1334 = vmatpush1.msra.mxu0 %v1323
    %1335 = vmatprep.subr.mxu0 0.0
    %1336 = vmatpush1.msra.mxu0 %v1322
    %1337 = vmatprep.subr.mxu0 0.0
    %1338 = vmatpush1.msra.mxu0 %v1321
    %1339 = vmatprep.subr.mxu0 0.0
    %1340 = vmatpush1.msra.mxu0 %v1320
    %1341 = vmatprep.subr.mxu0 0.0
    %1342 = vmatpush1.msra.mxu0 %v1319
    %1343 = vmatprep.subr.mxu0 0.0
    %1344 = vmatpush1.msra.mxu0 %v1318
    %1345 = vmatprep.subr.mxu0 0.0
    %1346 = vmatpush1.msra.mxu0 %v1317
    %1347 = vmatprep.subr.mxu0 0.0
    %1348 = vmatpush1.msra.mxu0 %v1316
    %1349 = vmatprep.subr.mxu0 0.0
    %1350 = vmatpush1.msra.mxu0 %v1315
    %1351 = vmatprep.subr.mxu0 0.0
    %1352 = vmatpush1.msra.mxu0 %v1314
    %1353 = vmatprep.subr.mxu0 0.0
    %1354 = vmatpush1.msra.mxu0 %v1313
    %1355 = vmatprep.subr.mxu0 0.0
    %1356 = vmatpush1.msra.mxu0 %v1312
    %1357 = vmatprep.subr.mxu0 0.0
    %1358 = vmatpush1.msra.mxu0 %v1311
    %1359 = vmatprep.subr.mxu0 0.0
    %1360 = vmatpush2.msra.mxu0 0.0
    %1361 = vmatprep.subr.mxu0 0.0
    %1362 = vmatpush2.msra.mxu0 0.0
    %1363 = vmatprep.subr.mxu0 0.0
    %1364 = vmatpush2.msra.mxu0 0.0
    %1365 = vmatprep.subr.mxu0 0.0
    %1366 = vmatpush2.msra.mxu0 0.0
    %1367 = vmatprep.subr.mxu0 0.0
    %1368 = vmatpush2.msra.mxu0 0.0
    %1369 = vmatprep.subr.mxu0 0.0
    %1370 = vmatpush2.msra.mxu0 0.0
    %1371 = vmatprep.subr.mxu0 0.0
    %1372 = vmatpush2.msra.mxu0 0.0
    %1373 = vmatprep.subr.mxu0 0.0
    %1374 = vmatpush2.msra.mxu0 0.0
    %1375 = vmatprep.subr.mxu0 0.0
    %1376 = vmatpush2.msra.mxu0 0.0
    %1377 = vmatprep.subr.mxu0 0.0
    %1378 = vmatpush2.msra.mxu0 0.0
    %1379 = vmatprep.subr.mxu0 0.0
    %1380 = vmatpush2.msra.mxu0 0.0
    %1381 = vmatprep.subr.mxu0 0.0
    %1382 = vmatpush2.msra.mxu0 0.0
    %1383 = vmatprep.subr.mxu0 0.0
    %1384 = vmatpush2.msra.mxu0 0.0
    %1385 = vmatprep.subr.mxu0 0.0
    %1386 = vmatpush2.msra.mxu0 0.0
    %1387 = vmatprep.subr.mxu0 0.0
    %1388 = vmatpush2.msra.mxu0 0.0
    %1389 = vmatprep.subr.mxu0 0.0
    %1390 = vmatpush2.msra.mxu0 0.0
    %1391 = vmatprep.mubr.f32.mxu0 0.0
    %1392 = vmatmul.mubr.f32.gmra.mxu0 %v688
    %v1393 = vpop.f32.mrf.mxu0
    %v1394 = vadd.f32 0.0, %v1393
    %v1395 = vpop.f32.mrf.mxu0
    %1396 = vdwg.mxu0
    %v1397 = vadd.f32 %v1309, %v1394
    %s1398 = scalar_lea.vmem %s3, 1024
    %v1399 = vld [vmem:[%s1398] sm:$0xff]
    %v1400 = vld [vmem:[%s1398 + $0x8] sm:$0xff]
    %v1401 = vld [vmem:[%s1398 + $0x10] sm:$0xff]
    %v1402 = vld [vmem:[%s1398 + $0x18] sm:$0xff]
    %v1403 = vld [vmem:[%s1398 + $0x20] sm:$0xff]
    %v1404 = vld [vmem:[%s1398 + $0x28] sm:$0xff]
    %v1405 = vld [vmem:[%s1398 + $0x30] sm:$0xff]
    %v1406 = vld [vmem:[%s1398 + $0x38] sm:$0xff]
    %v1407 = vld [vmem:[%s1398 + $0x40] sm:$0xff]
    %v1408 = vld [vmem:[%s1398 + $0x48] sm:$0xff]
    %v1409 = vld [vmem:[%s1398 + $0x50] sm:$0xff]
    %v1410 = vld [vmem:[%s1398 + $0x58] sm:$0xff]
    %v1411 = vld [vmem:[%s1398 + $0x60] sm:$0xff]
    %v1412 = vld [vmem:[%s1398 + $0x68] sm:$0xff]
    %v1413 = vld [vmem:[%s1398 + $0x70] sm:$0xff]
    %v1414 = vld [vmem:[%s1398 + $0x78] sm:$0xff]
    %1415 = vmatprep.subr.mxu0 0.0
    %1416 = vmatpush1.msra.mxu0 %v1414
    %1417 = vmatprep.subr.mxu0 0.0
    %1418 = vmatpush1.msra.mxu0 %v1413
    %1419 = vmatprep.subr.mxu0 0.0
    %1420 = vmatpush1.msra.mxu0 %v1412
    %1421 = vmatprep.subr.mxu0 0.0
    %1422 = vmatpush1.msra.mxu0 %v1411
    %1423 = vmatprep.subr.mxu0 0.0
    %1424 = vmatpush1.msra.mxu0 %v1410
    %1425 = vmatprep.subr.mxu0 0.0
    %1426 = vmatpush1.msra.mxu0 %v1409
    %1427 = vmatprep.subr.mxu0 0.0
    %1428 = vmatpush1.msra.mxu0 %v1408
    %1429 = vmatprep.subr.mxu0 0.0
    %1430 = vmatpush1.msra.mxu0 %v1407
    %1431 = vmatprep.subr.mxu0 0.0
    %1432 = vmatpush1.msra.mxu0 %v1406
    %1433 = vmatprep.subr.mxu0 0.0
    %1434 = vmatpush1.msra.mxu0 %v1405
    %1435 = vmatprep.subr.mxu0 0.0
    %1436 = vmatpush1.msra.mxu0 %v1404
    %1437 = vmatprep.subr.mxu0 0.0
    %1438 = vmatpush1.msra.mxu0 %v1403
    %1439 = vmatprep.subr.mxu0 0.0
    %1440 = vmatpush1.msra.mxu0 %v1402
    %1441 = vmatprep.subr.mxu0 0.0
    %1442 = vmatpush1.msra.mxu0 %v1401
    %1443 = vmatprep.subr.mxu0 0.0
    %1444 = vmatpush1.msra.mxu0 %v1400
    %1445 = vmatprep.subr.mxu0 0.0
    %1446 = vmatpush1.msra.mxu0 %v1399
    %1447 = vmatprep.subr.mxu0 0.0
    %1448 = vmatpush2.msra.mxu0 0.0
    %1449 = vmatprep.subr.mxu0 0.0
    %1450 = vmatpush2.msra.mxu0 0.0
    %1451 = vmatprep.subr.mxu0 0.0
    %1452 = vmatpush2.msra.mxu0 0.0
    %1453 = vmatprep.subr.mxu0 0.0
    %1454 = vmatpush2.msra.mxu0 0.0
    %1455 = vmatprep.subr.mxu0 0.0
    %1456 = vmatpush2.msra.mxu0 0.0
    %1457 = vmatprep.subr.mxu0 0.0
    %1458 = vmatpush2.msra.mxu0 0.0
    %1459 = vmatprep.subr.mxu0 0.0
    %1460 = vmatpush2.msra.mxu0 0.0
    %1461 = vmatprep.subr.mxu0 0.0
    %1462 = vmatpush2.msra.mxu0 0.0
    %1463 = vmatprep.subr.mxu0 0.0
    %1464 = vmatpush2.msra.mxu0 0.0
    %1465 = vmatprep.subr.mxu0 0.0
    %1466 = vmatpush2.msra.mxu0 0.0
    %1467 = vmatprep.subr.mxu0 0.0
    %1468 = vmatpush2.msra.mxu0 0.0
    %1469 = vmatprep.subr.mxu0 0.0
    %1470 = vmatpush2.msra.mxu0 0.0
    %1471 = vmatprep.subr.mxu0 0.0
    %1472 = vmatpush2.msra.mxu0 0.0
    %1473 = vmatprep.subr.mxu0 0.0
    %1474 = vmatpush2.msra.mxu0 0.0
    %1475 = vmatprep.subr.mxu0 0.0
    %1476 = vmatpush2.msra.mxu0 0.0
    %1477 = vmatprep.subr.mxu0 0.0
    %1478 = vmatpush2.msra.mxu0 0.0
    %1479 = vmatprep.mubr.f32.mxu0 0.0
    %1480 = vmatmul.mubr.f32.gmra.mxu0 %v689
    %v1481 = vpop.f32.mrf.mxu0
    %v1482 = vadd.f32 0.0, %v1481
    %v1483 = vpop.f32.mrf.mxu0
    %1484 = vdwg.mxu0
    %v1485 = vadd.f32 %v1397, %v1482
    %s1486 = scalar_lea.vmem %s3, 1152
    %v1487 = vld [vmem:[%s1486] sm:$0xff]
    %v1488 = vld [vmem:[%s1486 + $0x8] sm:$0xff]
    %v1489 = vld [vmem:[%s1486 + $0x10] sm:$0xff]
    %v1490 = vld [vmem:[%s1486 + $0x18] sm:$0xff]
    %v1491 = vld [vmem:[%s1486 + $0x20] sm:$0xff]
    %v1492 = vld [vmem:[%s1486 + $0x28] sm:$0xff]
    %v1493 = vld [vmem:[%s1486 + $0x30] sm:$0xff]
    %v1494 = vld [vmem:[%s1486 + $0x38] sm:$0xff]
    %v1495 = vld [vmem:[%s1486 + $0x40] sm:$0xff]
    %v1496 = vld [vmem:[%s1486 + $0x48] sm:$0xff]
    %v1497 = vld [vmem:[%s1486 + $0x50] sm:$0xff]
    %v1498 = vld [vmem:[%s1486 + $0x58] sm:$0xff]
    %v1499 = vld [vmem:[%s1486 + $0x60] sm:$0xff]
    %v1500 = vld [vmem:[%s1486 + $0x68] sm:$0xff]
    %v1501 = vld [vmem:[%s1486 + $0x70] sm:$0xff]
    %v1502 = vld [vmem:[%s1486 + $0x78] sm:$0xff]
    %1503 = vmatprep.subr.mxu0 0.0
    %1504 = vmatpush1.msra.mxu0 %v1502
    %1505 = vmatprep.subr.mxu0 0.0
    %1506 = vmatpush1.msra.mxu0 %v1501
    %1507 = vmatprep.subr.mxu0 0.0
    %1508 = vmatpush1.msra.mxu0 %v1500
    %1509 = vmatprep.subr.mxu0 0.0
    %1510 = vmatpush1.msra.mxu0 %v1499
    %1511 = vmatprep.subr.mxu0 0.0
    %1512 = vmatpush1.msra.mxu0 %v1498
    %1513 = vmatprep.subr.mxu0 0.0
    %1514 = vmatpush1.msra.mxu0 %v1497
    %1515 = vmatprep.subr.mxu0 0.0
    %1516 = vmatpush1.msra.mxu0 %v1496
    %1517 = vmatprep.subr.mxu0 0.0
    %1518 = vmatpush1.msra.mxu0 %v1495
    %1519 = vmatprep.subr.mxu0 0.0
    %1520 = vmatpush1.msra.mxu0 %v1494
    %1521 = vmatprep.subr.mxu0 0.0
    %1522 = vmatpush1.msra.mxu0 %v1493
    %1523 = vmatprep.subr.mxu0 0.0
    %1524 = vmatpush1.msra.mxu0 %v1492
    %1525 = vmatprep.subr.mxu0 0.0
    %1526 = vmatpush1.msra.mxu0 %v1491
    %1527 = vmatprep.subr.mxu0 0.0
    %1528 = vmatpush1.msra.mxu0 %v1490
    %1529 = vmatprep.subr.mxu0 0.0
    %1530 = vmatpush1.msra.mxu0 %v1489
    %1531 = vmatprep.subr.mxu0 0.0
    %1532 = vmatpush1.msra.mxu0 %v1488
    %1533 = vmatprep.subr.mxu0 0.0
    %1534 = vmatpush1.msra.mxu0 %v1487
    %1535 = vmatprep.subr.mxu0 0.0
    %1536 = vmatpush2.msra.mxu0 0.0
    %1537 = vmatprep.subr.mxu0 0.0
    %1538 = vmatpush2.msra.mxu0 0.0
    %1539 = vmatprep.subr.mxu0 0.0
    %1540 = vmatpush2.msra.mxu0 0.0
    %1541 = vmatprep.subr.mxu0 0.0
    %1542 = vmatpush2.msra.mxu0 0.0
    %1543 = vmatprep.subr.mxu0 0.0
    %1544 = vmatpush2.msra.mxu0 0.0
    %1545 = vmatprep.subr.mxu0 0.0
    %1546 = vmatpush2.msra.mxu0 0.0
    %1547 = vmatprep.subr.mxu0 0.0
    %1548 = vmatpush2.msra.mxu0 0.0
    %1549 = vmatprep.subr.mxu0 0.0
    %1550 = vmatpush2.msra.mxu0 0.0
    %1551 = vmatprep.subr.mxu0 0.0
    %1552 = vmatpush2.msra.mxu0 0.0
    %1553 = vmatprep.subr.mxu0 0.0
    %1554 = vmatpush2.msra.mxu0 0.0
    %1555 = vmatprep.subr.mxu0 0.0
    %1556 = vmatpush2.msra.mxu0 0.0
    %1557 = vmatprep.subr.mxu0 0.0
    %1558 = vmatpush2.msra.mxu0 0.0
    %1559 = vmatprep.subr.mxu0 0.0
    %1560 = vmatpush2.msra.mxu0 0.0
    %1561 = vmatprep.subr.mxu0 0.0
    %1562 = vmatpush2.msra.mxu0 0.0
    %1563 = vmatprep.subr.mxu0 0.0
    %1564 = vmatpush2.msra.mxu0 0.0
    %1565 = vmatprep.subr.mxu0 0.0
    %1566 = vmatpush2.msra.mxu0 0.0
    %1567 = vmatprep.mubr.f32.mxu0 0.0
    %1568 = vmatmul.mubr.f32.gmra.mxu0 %v690
    %v1569 = vpop.f32.mrf.mxu0
    %v1570 = vadd.f32 0.0, %v1569
    %v1571 = vpop.f32.mrf.mxu0
    %1572 = vdwg.mxu0
    %v1573 = vadd.f32 %v1485, %v1570
    %s1574 = scalar_lea.vmem %s3, 1280
    %v1575 = vld [vmem:[%s1574] sm:$0xff]
    %v1576 = vld [vmem:[%s1574 + $0x8] sm:$0xff]
    %v1577 = vld [vmem:[%s1574 + $0x10] sm:$0xff]
    %v1578 = vld [vmem:[%s1574 + $0x18] sm:$0xff]
    %v1579 = vld [vmem:[%s1574 + $0x20] sm:$0xff]
    %v1580 = vld [vmem:[%s1574 + $0x28] sm:$0xff]
    %v1581 = vld [vmem:[%s1574 + $0x30] sm:$0xff]
    %v1582 = vld [vmem:[%s1574 + $0x38] sm:$0xff]
    %v1583 = vld [vmem:[%s1574 + $0x40] sm:$0xff]
    %v1584 = vld [vmem:[%s1574 + $0x48] sm:$0xff]
    %v1585 = vld [vmem:[%s1574 + $0x50] sm:$0xff]
    %v1586 = vld [vmem:[%s1574 + $0x58] sm:$0xff]
    %v1587 = vld [vmem:[%s1574 + $0x60] sm:$0xff]
    %v1588 = vld [vmem:[%s1574 + $0x68] sm:$0xff]
    %v1589 = vld [vmem:[%s1574 + $0x70] sm:$0xff]
    %v1590 = vld [vmem:[%s1574 + $0x78] sm:$0xff]
    %1591 = vmatprep.subr.mxu0 0.0
    %1592 = vmatpush1.msra.mxu0 %v1590
    %1593 = vmatprep.subr.mxu0 0.0
    %1594 = vmatpush1.msra.mxu0 %v1589
    %1595 = vmatprep.subr.mxu0 0.0
    %1596 = vmatpush1.msra.mxu0 %v1588
    %1597 = vmatprep.subr.mxu0 0.0
    %1598 = vmatpush1.msra.mxu0 %v1587
    %1599 = vmatprep.subr.mxu0 0.0
    %1600 = vmatpush1.msra.mxu0 %v1586
    %1601 = vmatprep.subr.mxu0 0.0
    %1602 = vmatpush1.msra.mxu0 %v1585
    %1603 = vmatprep.subr.mxu0 0.0
    %1604 = vmatpush1.msra.mxu0 %v1584
    %1605 = vmatprep.subr.mxu0 0.0
    %1606 = vmatpush1.msra.mxu0 %v1583
    %1607 = vmatprep.subr.mxu0 0.0
    %1608 = vmatpush1.msra.mxu0 %v1582
    %1609 = vmatprep.subr.mxu0 0.0
    %1610 = vmatpush1.msra.mxu0 %v1581
    %1611 = vmatprep.subr.mxu0 0.0
    %1612 = vmatpush1.msra.mxu0 %v1580
    %1613 = vmatprep.subr.mxu0 0.0
    %1614 = vmatpush1.msra.mxu0 %v1579
    %1615 = vmatprep.subr.mxu0 0.0
    %1616 = vmatpush1.msra.mxu0 %v1578
    %1617 = vmatprep.subr.mxu0 0.0
    %1618 = vmatpush1.msra.mxu0 %v1577
    %1619 = vmatprep.subr.mxu0 0.0
    %1620 = vmatpush1.msra.mxu0 %v1576
    %1621 = vmatprep.subr.mxu0 0.0
    %1622 = vmatpush1.msra.mxu0 %v1575
    %1623 = vmatprep.subr.mxu0 0.0
    %1624 = vmatpush2.msra.mxu0 0.0
    %1625 = vmatprep.subr.mxu0 0.0
    %1626 = vmatpush2.msra.mxu0 0.0
    %1627 = vmatprep.subr.mxu0 0.0
    %1628 = vmatpush2.msra.mxu0 0.0
    %1629 = vmatprep.subr.mxu0 0.0
    %1630 = vmatpush2.msra.mxu0 0.0
    %1631 = vmatprep.subr.mxu0 0.0
    %1632 = vmatpush2.msra.mxu0 0.0
    %1633 = vmatprep.subr.mxu0 0.0
    %1634 = vmatpush2.msra.mxu0 0.0
    %1635 = vmatprep.subr.mxu0 0.0
    %1636 = vmatpush2.msra.mxu0 0.0
    %1637 = vmatprep.subr.mxu0 0.0
    %1638 = vmatpush2.msra.mxu0 0.0
    %1639 = vmatprep.subr.mxu0 0.0
    %1640 = vmatpush2.msra.mxu0 0.0
    %1641 = vmatprep.subr.mxu0 0.0
    %1642 = vmatpush2.msra.mxu0 0.0
    %1643 = vmatprep.subr.mxu0 0.0
    %1644 = vmatpush2.msra.mxu0 0.0
    %1645 = vmatprep.subr.mxu0 0.0
    %1646 = vmatpush2.msra.mxu0 0.0
    %1647 = vmatprep.subr.mxu0 0.0
    %1648 = vmatpush2.msra.mxu0 0.0
    %1649 = vmatprep.subr.mxu0 0.0
    %1650 = vmatpush2.msra.mxu0 0.0
    %1651 = vmatprep.subr.mxu0 0.0
    %1652 = vmatpush2.msra.mxu0 0.0
    %1653 = vmatprep.subr.mxu0 0.0
    %1654 = vmatpush2.msra.mxu0 0.0
    %1655 = vmatprep.mubr.f32.mxu0 0.0
    %1656 = vmatmul.mubr.f32.gmra.mxu0 %v691
    %v1657 = vpop.f32.mrf.mxu0
    %v1658 = vadd.f32 0.0, %v1657
    %v1659 = vpop.f32.mrf.mxu0
    %1660 = vdwg.mxu0
    %v1661 = vadd.f32 %v1573, %v1658
    %s1662 = scalar_lea.vmem %s3, 1408
    %v1663 = vld [vmem:[%s1662] sm:$0xff]
    %v1664 = vld [vmem:[%s1662 + $0x8] sm:$0xff]
    %v1665 = vld [vmem:[%s1662 + $0x10] sm:$0xff]
    %v1666 = vld [vmem:[%s1662 + $0x18] sm:$0xff]
    %v1667 = vld [vmem:[%s1662 + $0x20] sm:$0xff]
    %v1668 = vld [vmem:[%s1662 + $0x28] sm:$0xff]
    %v1669 = vld [vmem:[%s1662 + $0x30] sm:$0xff]
    %v1670 = vld [vmem:[%s1662 + $0x38] sm:$0xff]
    %v1671 = vld [vmem:[%s1662 + $0x40] sm:$0xff]
    %v1672 = vld [vmem:[%s1662 + $0x48] sm:$0xff]
    %v1673 = vld [vmem:[%s1662 + $0x50] sm:$0xff]
    %v1674 = vld [vmem:[%s1662 + $0x58] sm:$0xff]
    %v1675 = vld [vmem:[%s1662 + $0x60] sm:$0xff]
    %v1676 = vld [vmem:[%s1662 + $0x68] sm:$0xff]
    %v1677 = vld [vmem:[%s1662 + $0x70] sm:$0xff]
    %v1678 = vld [vmem:[%s1662 + $0x78] sm:$0xff]
    %1679 = vmatprep.subr.mxu0 0.0
    %1680 = vmatpush1.msra.mxu0 %v1678
    %1681 = vmatprep.subr.mxu0 0.0
    %1682 = vmatpush1.msra.mxu0 %v1677
    %1683 = vmatprep.subr.mxu0 0.0
    %1684 = vmatpush1.msra.mxu0 %v1676
    %1685 = vmatprep.subr.mxu0 0.0
    %1686 = vmatpush1.msra.mxu0 %v1675
    %1687 = vmatprep.subr.mxu0 0.0
    %1688 = vmatpush1.msra.mxu0 %v1674
    %1689 = vmatprep.subr.mxu0 0.0
    %1690 = vmatpush1.msra.mxu0 %v1673
    %1691 = vmatprep.subr.mxu0 0.0
    %1692 = vmatpush1.msra.mxu0 %v1672
    %1693 = vmatprep.subr.mxu0 0.0
    %1694 = vmatpush1.msra.mxu0 %v1671
    %1695 = vmatprep.subr.mxu0 0.0
    %1696 = vmatpush1.msra.mxu0 %v1670
    %1697 = vmatprep.subr.mxu0 0.0
    %1698 = vmatpush1.msra.mxu0 %v1669
    %1699 = vmatprep.subr.mxu0 0.0
    %1700 = vmatpush1.msra.mxu0 %v1668
    %1701 = vmatprep.subr.mxu0 0.0
    %1702 = vmatpush1.msra.mxu0 %v1667
    %1703 = vmatprep.subr.mxu0 0.0
    %1704 = vmatpush1.msra.mxu0 %v1666
    %1705 = vmatprep.subr.mxu0 0.0
    %1706 = vmatpush1.msra.mxu0 %v1665
    %1707 = vmatprep.subr.mxu0 0.0
    %1708 = vmatpush1.msra.mxu0 %v1664
    %1709 = vmatprep.subr.mxu0 0.0
    %1710 = vmatpush1.msra.mxu0 %v1663
    %1711 = vmatprep.subr.mxu0 0.0
    %1712 = vmatpush2.msra.mxu0 0.0
    %1713 = vmatprep.subr.mxu0 0.0
    %1714 = vmatpush2.msra.mxu0 0.0
    %1715 = vmatprep.subr.mxu0 0.0
    %1716 = vmatpush2.msra.mxu0 0.0
    %1717 = vmatprep.subr.mxu0 0.0
    %1718 = vmatpush2.msra.mxu0 0.0
    %1719 = vmatprep.subr.mxu0 0.0
    %1720 = vmatpush2.msra.mxu0 0.0
    %1721 = vmatprep.subr.mxu0 0.0
    %1722 = vmatpush2.msra.mxu0 0.0
    %1723 = vmatprep.subr.mxu0 0.0
    %1724 = vmatpush2.msra.mxu0 0.0
    %1725 = vmatprep.subr.mxu0 0.0
    %1726 = vmatpush2.msra.mxu0 0.0
    %1727 = vmatprep.subr.mxu0 0.0
    %1728 = vmatpush2.msra.mxu0 0.0
    %1729 = vmatprep.subr.mxu0 0.0
    %1730 = vmatpush2.msra.mxu0 0.0
    %1731 = vmatprep.subr.mxu0 0.0
    %1732 = vmatpush2.msra.mxu0 0.0
    %1733 = vmatprep.subr.mxu0 0.0
    %1734 = vmatpush2.msra.mxu0 0.0
    %1735 = vmatprep.subr.mxu0 0.0
    %1736 = vmatpush2.msra.mxu0 0.0
    %1737 = vmatprep.subr.mxu0 0.0
    %1738 = vmatpush2.msra.mxu0 0.0
    %1739 = vmatprep.subr.mxu0 0.0
    %1740 = vmatpush2.msra.mxu0 0.0
    %1741 = vmatprep.subr.mxu0 0.0
    %1742 = vmatpush2.msra.mxu0 0.0
    %1743 = vmatprep.mubr.f32.mxu0 0.0
    %1744 = vmatmul.mubr.f32.gmra.mxu0 %v692
    %v1745 = vpop.f32.mrf.mxu0
    %v1746 = vadd.f32 0.0, %v1745
    %v1747 = vpop.f32.mrf.mxu0
    %1748 = vdwg.mxu0
    %v1749 = vadd.f32 %v1661, %v1746
    %s1750 = scalar_lea.vmem %s3, 1536
    %v1751 = vld [vmem:[%s1750] sm:$0xff]
    %v1752 = vld [vmem:[%s1750 + $0x8] sm:$0xff]
    %v1753 = vld [vmem:[%s1750 + $0x10] sm:$0xff]
    %v1754 = vld [vmem:[%s1750 + $0x18] sm:$0xff]
    %v1755 = vld [vmem:[%s1750 + $0x20] sm:$0xff]
    %v1756 = vld [vmem:[%s1750 + $0x28] sm:$0xff]
    %v1757 = vld [vmem:[%s1750 + $0x30] sm:$0xff]
    %v1758 = vld [vmem:[%s1750 + $0x38] sm:$0xff]
    %v1759 = vld [vmem:[%s1750 + $0x40] sm:$0xff]
    %v1760 = vld [vmem:[%s1750 + $0x48] sm:$0xff]
    %v1761 = vld [vmem:[%s1750 + $0x50] sm:$0xff]
    %v1762 = vld [vmem:[%s1750 + $0x58] sm:$0xff]
    %v1763 = vld [vmem:[%s1750 + $0x60] sm:$0xff]
    %v1764 = vld [vmem:[%s1750 + $0x68] sm:$0xff]
    %v1765 = vld [vmem:[%s1750 + $0x70] sm:$0xff]
    %v1766 = vld [vmem:[%s1750 + $0x78] sm:$0xff]
    %1767 = vmatprep.subr.mxu0 0.0
    %1768 = vmatpush1.msra.mxu0 %v1766
    %1769 = vmatprep.subr.mxu0 0.0
    %1770 = vmatpush1.msra.mxu0 %v1765
    %1771 = vmatprep.subr.mxu0 0.0
    %1772 = vmatpush1.msra.mxu0 %v1764
    %1773 = vmatprep.subr.mxu0 0.0
    %1774 = vmatpush1.msra.mxu0 %v1763
    %1775 = vmatprep.subr.mxu0 0.0
    %1776 = vmatpush1.msra.mxu0 %v1762
    %1777 = vmatprep.subr.mxu0 0.0
    %1778 = vmatpush1.msra.mxu0 %v1761
    %1779 = vmatprep.subr.mxu0 0.0
    %1780 = vmatpush1.msra.mxu0 %v1760
    %1781 = vmatprep.subr.mxu0 0.0
    %1782 = vmatpush1.msra.mxu0 %v1759
    %1783 = vmatprep.subr.mxu0 0.0
    %1784 = vmatpush1.msra.mxu0 %v1758
    %1785 = vmatprep.subr.mxu0 0.0
    %1786 = vmatpush1.msra.mxu0 %v1757
    %1787 = vmatprep.subr.mxu0 0.0
    %1788 = vmatpush1.msra.mxu0 %v1756
    %1789 = vmatprep.subr.mxu0 0.0
    %1790 = vmatpush1.msra.mxu0 %v1755
    %1791 = vmatprep.subr.mxu0 0.0
    %1792 = vmatpush1.msra.mxu0 %v1754
    %1793 = vmatprep.subr.mxu0 0.0
    %1794 = vmatpush1.msra.mxu0 %v1753
    %1795 = vmatprep.subr.mxu0 0.0
    %1796 = vmatpush1.msra.mxu0 %v1752
    %1797 = vmatprep.subr.mxu0 0.0
    %1798 = vmatpush1.msra.mxu0 %v1751
    %1799 = vmatprep.subr.mxu0 0.0
    %1800 = vmatpush2.msra.mxu0 0.0
    %1801 = vmatprep.subr.mxu0 0.0
    %1802 = vmatpush2.msra.mxu0 0.0
    %1803 = vmatprep.subr.mxu0 0.0
    %1804 = vmatpush2.msra.mxu0 0.0
    %1805 = vmatprep.subr.mxu0 0.0
    %1806 = vmatpush2.msra.mxu0 0.0
    %1807 = vmatprep.subr.mxu0 0.0
    %1808 = vmatpush2.msra.mxu0 0.0
    %1809 = vmatprep.subr.mxu0 0.0
    %1810 = vmatpush2.msra.mxu0 0.0
    %1811 = vmatprep.subr.mxu0 0.0
    %1812 = vmatpush2.msra.mxu0 0.0
    %1813 = vmatprep.subr.mxu0 0.0
    %1814 = vmatpush2.msra.mxu0 0.0
    %1815 = vmatprep.subr.mxu0 0.0
    %1816 = vmatpush2.msra.mxu0 0.0
    %1817 = vmatprep.subr.mxu0 0.0
    %1818 = vmatpush2.msra.mxu0 0.0
    %1819 = vmatprep.subr.mxu0 0.0
    %1820 = vmatpush2.msra.mxu0 0.0
    %1821 = vmatprep.subr.mxu0 0.0
    %1822 = vmatpush2.msra.mxu0 0.0
    %1823 = vmatprep.subr.mxu0 0.0
    %1824 = vmatpush2.msra.mxu0 0.0
    %1825 = vmatprep.subr.mxu0 0.0
    %1826 = vmatpush2.msra.mxu0 0.0
    %1827 = vmatprep.subr.mxu0 0.0
    %1828 = vmatpush2.msra.mxu0 0.0
    %1829 = vmatprep.subr.mxu0 0.0
    %1830 = vmatpush2.msra.mxu0 0.0
    %1831 = vmatprep.mubr.f32.mxu0 0.0
    %1832 = vmatmul.mubr.f32.gmra.mxu0 %v693
    %v1833 = vpop.f32.mrf.mxu0
    %v1834 = vadd.f32 0.0, %v1833
    %v1835 = vpop.f32.mrf.mxu0
    %1836 = vdwg.mxu0
    %v1837 = vadd.f32 %v1749, %v1834
    %s1838 = scalar_lea.vmem %s3, 1664
    %v1839 = vld [vmem:[%s1838] sm:$0xff]
    %v1840 = vld [vmem:[%s1838 + $0x8] sm:$0xff]
    %v1841 = vld [vmem:[%s1838 + $0x10] sm:$0xff]
    %v1842 = vld [vmem:[%s1838 + $0x18] sm:$0xff]
    %v1843 = vld [vmem:[%s1838 + $0x20] sm:$0xff]
    %v1844 = vld [vmem:[%s1838 + $0x28] sm:$0xff]
    %v1845 = vld [vmem:[%s1838 + $0x30] sm:$0xff]
    %v1846 = vld [vmem:[%s1838 + $0x38] sm:$0xff]
    %v1847 = vld [vmem:[%s1838 + $0x40] sm:$0xff]
    %v1848 = vld [vmem:[%s1838 + $0x48] sm:$0xff]
    %v1849 = vld [vmem:[%s1838 + $0x50] sm:$0xff]
    %v1850 = vld [vmem:[%s1838 + $0x58] sm:$0xff]
    %v1851 = vld [vmem:[%s1838 + $0x60] sm:$0xff]
    %v1852 = vld [vmem:[%s1838 + $0x68] sm:$0xff]
    %v1853 = vld [vmem:[%s1838 + $0x70] sm:$0xff]
    %v1854 = vld [vmem:[%s1838 + $0x78] sm:$0xff]
    %1855 = vmatprep.subr.mxu0 0.0
    %1856 = vmatpush1.msra.mxu0 %v1854
    %1857 = vmatprep.subr.mxu0 0.0
    %1858 = vmatpush1.msra.mxu0 %v1853
    %1859 = vmatprep.subr.mxu0 0.0
    %1860 = vmatpush1.msra.mxu0 %v1852
    %1861 = vmatprep.subr.mxu0 0.0
    %1862 = vmatpush1.msra.mxu0 %v1851
    %1863 = vmatprep.subr.mxu0 0.0
    %1864 = vmatpush1.msra.mxu0 %v1850
    %1865 = vmatprep.subr.mxu0 0.0
    %1866 = vmatpush1.msra.mxu0 %v1849
    %1867 = vmatprep.subr.mxu0 0.0
    %1868 = vmatpush1.msra.mxu0 %v1848
    %1869 = vmatprep.subr.mxu0 0.0
    %1870 = vmatpush1.msra.mxu0 %v1847
    %1871 = vmatprep.subr.mxu0 0.0
    %1872 = vmatpush1.msra.mxu0 %v1846
    %1873 = vmatprep.subr.mxu0 0.0
    %1874 = vmatpush1.msra.mxu0 %v1845
    %1875 = vmatprep.subr.mxu0 0.0
    %1876 = vmatpush1.msra.mxu0 %v1844
    %1877 = vmatprep.subr.mxu0 0.0
    %1878 = vmatpush1.msra.mxu0 %v1843
    %1879 = vmatprep.subr.mxu0 0.0
    %1880 = vmatpush1.msra.mxu0 %v1842
    %1881 = vmatprep.subr.mxu0 0.0
    %1882 = vmatpush1.msra.mxu0 %v1841
    %1883 = vmatprep.subr.mxu0 0.0
    %1884 = vmatpush1.msra.mxu0 %v1840
    %1885 = vmatprep.subr.mxu0 0.0
    %1886 = vmatpush1.msra.mxu0 %v1839
    %1887 = vmatprep.subr.mxu0 0.0
    %1888 = vmatpush2.msra.mxu0 0.0
    %1889 = vmatprep.subr.mxu0 0.0
    %1890 = vmatpush2.msra.mxu0 0.0
    %1891 = vmatprep.subr.mxu0 0.0
    %1892 = vmatpush2.msra.mxu0 0.0
    %1893 = vmatprep.subr.mxu0 0.0
    %1894 = vmatpush2.msra.mxu0 0.0
    %1895 = vmatprep.subr.mxu0 0.0
    %1896 = vmatpush2.msra.mxu0 0.0
    %1897 = vmatprep.subr.mxu0 0.0
    %1898 = vmatpush2.msra.mxu0 0.0
    %1899 = vmatprep.subr.mxu0 0.0
    %1900 = vmatpush2.msra.mxu0 0.0
    %1901 = vmatprep.subr.mxu0 0.0
    %1902 = vmatpush2.msra.mxu0 0.0
    %1903 = vmatprep.subr.mxu0 0.0
    %1904 = vmatpush2.msra.mxu0 0.0
    %1905 = vmatprep.subr.mxu0 0.0
    %1906 = vmatpush2.msra.mxu0 0.0
    %1907 = vmatprep.subr.mxu0 0.0
    %1908 = vmatpush2.msra.mxu0 0.0
    %1909 = vmatprep.subr.mxu0 0.0
    %1910 = vmatpush2.msra.mxu0 0.0
    %1911 = vmatprep.subr.mxu0 0.0
    %1912 = vmatpush2.msra.mxu0 0.0
    %1913 = vmatprep.subr.mxu0 0.0
    %1914 = vmatpush2.msra.mxu0 0.0
    %1915 = vmatprep.subr.mxu0 0.0
    %1916 = vmatpush2.msra.mxu0 0.0
    %1917 = vmatprep.subr.mxu0 0.0
    %1918 = vmatpush2.msra.mxu0 0.0
    %1919 = vmatprep.mubr.f32.mxu0 0.0
    %1920 = vmatmul.mubr.f32.gmra.mxu0 %v694
    %v1921 = vpop.f32.mrf.mxu0
    %v1922 = vadd.f32 0.0, %v1921
    %v1923 = vpop.f32.mrf.mxu0
    %1924 = vdwg.mxu0
    %v1925 = vadd.f32 %v1837, %v1922
    %s1926 = scalar_lea.vmem %s3, 1792
    %v1927 = vld [vmem:[%s1926] sm:$0xff]
    %v1928 = vld [vmem:[%s1926 + $0x8] sm:$0xff]
    %v1929 = vld [vmem:[%s1926 + $0x10] sm:$0xff]
    %v1930 = vld [vmem:[%s1926 + $0x18] sm:$0xff]
    %v1931 = vld [vmem:[%s1926 + $0x20] sm:$0xff]
    %v1932 = vld [vmem:[%s1926 + $0x28] sm:$0xff]
    %v1933 = vld [vmem:[%s1926 + $0x30] sm:$0xff]
    %v1934 = vld [vmem:[%s1926 + $0x38] sm:$0xff]
    %v1935 = vld [vmem:[%s1926 + $0x40] sm:$0xff]
    %v1936 = vld [vmem:[%s1926 + $0x48] sm:$0xff]
    %v1937 = vld [vmem:[%s1926 + $0x50] sm:$0xff]
    %v1938 = vld [vmem:[%s1926 + $0x58] sm:$0xff]
    %v1939 = vld [vmem:[%s1926 + $0x60] sm:$0xff]
    %v1940 = vld [vmem:[%s1926 + $0x68] sm:$0xff]
    %v1941 = vld [vmem:[%s1926 + $0x70] sm:$0xff]
    %v1942 = vld [vmem:[%s1926 + $0x78] sm:$0xff]
    %1943 = vmatprep.subr.mxu0 0.0
    %1944 = vmatpush1.msra.mxu0 %v1942
    %1945 = vmatprep.subr.mxu0 0.0
    %1946 = vmatpush1.msra.mxu0 %v1941
    %1947 = vmatprep.subr.mxu0 0.0
    %1948 = vmatpush1.msra.mxu0 %v1940
    %1949 = vmatprep.subr.mxu0 0.0
    %1950 = vmatpush1.msra.mxu0 %v1939
    %1951 = vmatprep.subr.mxu0 0.0
    %1952 = vmatpush1.msra.mxu0 %v1938
    %1953 = vmatprep.subr.mxu0 0.0
    %1954 = vmatpush1.msra.mxu0 %v1937
    %1955 = vmatprep.subr.mxu0 0.0
    %1956 = vmatpush1.msra.mxu0 %v1936
    %1957 = vmatprep.subr.mxu0 0.0
    %1958 = vmatpush1.msra.mxu0 %v1935
    %1959 = vmatprep.subr.mxu0 0.0
    %1960 = vmatpush1.msra.mxu0 %v1934
    %1961 = vmatprep.subr.mxu0 0.0
    %1962 = vmatpush1.msra.mxu0 %v1933
    %1963 = vmatprep.subr.mxu0 0.0
    %1964 = vmatpush1.msra.mxu0 %v1932
    %1965 = vmatprep.subr.mxu0 0.0
    %1966 = vmatpush1.msra.mxu0 %v1931
    %1967 = vmatprep.subr.mxu0 0.0
    %1968 = vmatpush1.msra.mxu0 %v1930
    %1969 = vmatprep.subr.mxu0 0.0
    %1970 = vmatpush1.msra.mxu0 %v1929
    %1971 = vmatprep.subr.mxu0 0.0
    %1972 = vmatpush1.msra.mxu0 %v1928
    %1973 = vmatprep.subr.mxu0 0.0
    %1974 = vmatpush1.msra.mxu0 %v1927
    %1975 = vmatprep.subr.mxu0 0.0
    %1976 = vmatpush2.msra.mxu0 0.0
    %1977 = vmatprep.subr.mxu0 0.0
    %1978 = vmatpush2.msra.mxu0 0.0
    %1979 = vmatprep.subr.mxu0 0.0
    %1980 = vmatpush2.msra.mxu0 0.0
    %1981 = vmatprep.subr.mxu0 0.0
    %1982 = vmatpush2.msra.mxu0 0.0
    %1983 = vmatprep.subr.mxu0 0.0
    %1984 = vmatpush2.msra.mxu0 0.0
    %1985 = vmatprep.subr.mxu0 0.0
    %1986 = vmatpush2.msra.mxu0 0.0
    %1987 = vmatprep.subr.mxu0 0.0
    %1988 = vmatpush2.msra.mxu0 0.0
    %1989 = vmatprep.subr.mxu0 0.0
    %1990 = vmatpush2.msra.mxu0 0.0
    %1991 = vmatprep.subr.mxu0 0.0
    %1992 = vmatpush2.msra.mxu0 0.0
    %1993 = vmatprep.subr.mxu0 0.0
    %1994 = vmatpush2.msra.mxu0 0.0
    %1995 = vmatprep.subr.mxu0 0.0
    %1996 = vmatpush2.msra.mxu0 0.0
    %1997 = vmatprep.subr.mxu0 0.0
    %1998 = vmatpush2.msra.mxu0 0.0
    %1999 = vmatprep.subr.mxu0 0.0
    %2000 = vmatpush2.msra.mxu0 0.0
    %2001 = vmatprep.subr.mxu0 0.0
    %2002 = vmatpush2.msra.mxu0 0.0
    %2003 = vmatprep.subr.mxu0 0.0
    %2004 = vmatpush2.msra.mxu0 0.0
    %2005 = vmatprep.subr.mxu0 0.0
    %2006 = vmatpush2.msra.mxu0 0.0
    %2007 = vmatprep.mubr.f32.mxu0 0.0
    %2008 = vmatmul.mubr.f32.gmra.mxu0 %v695
    %v2009 = vpop.f32.mrf.mxu0
    %v2010 = vadd.f32 0.0, %v2009
    %v2011 = vpop.f32.mrf.mxu0
    %2012 = vdwg.mxu0
    %v2013 = vadd.f32 %v1925, %v2010
    %s2014 = scalar_lea.vmem %s3, 1920
    %v2015 = vld [vmem:[%s2014] sm:$0xff]
    %v2016 = vld [vmem:[%s2014 + $0x8] sm:$0xff]
    %v2017 = vld [vmem:[%s2014 + $0x10] sm:$0xff]
    %v2018 = vld [vmem:[%s2014 + $0x18] sm:$0xff]
    %v2019 = vld [vmem:[%s2014 + $0x20] sm:$0xff]
    %v2020 = vld [vmem:[%s2014 + $0x28] sm:$0xff]
    %v2021 = vld [vmem:[%s2014 + $0x30] sm:$0xff]
    %v2022 = vld [vmem:[%s2014 + $0x38] sm:$0xff]
    %v2023 = vld [vmem:[%s2014 + $0x40] sm:$0xff]
    %v2024 = vld [vmem:[%s2014 + $0x48] sm:$0xff]
    %v2025 = vld [vmem:[%s2014 + $0x50] sm:$0xff]
    %v2026 = vld [vmem:[%s2014 + $0x58] sm:$0xff]
    %v2027 = vld [vmem:[%s2014 + $0x60] sm:$0xff]
    %v2028 = vld [vmem:[%s2014 + $0x68] sm:$0xff]
    %v2029 = vld [vmem:[%s2014 + $0x70] sm:$0xff]
    %v2030 = vld [vmem:[%s2014 + $0x78] sm:$0xff]
    %2031 = vmatprep.subr.mxu0 0.0
    %2032 = vmatpush1.msra.mxu0 %v2030
    %2033 = vmatprep.subr.mxu0 0.0
    %2034 = vmatpush1.msra.mxu0 %v2029
    %2035 = vmatprep.subr.mxu0 0.0
    %2036 = vmatpush1.msra.mxu0 %v2028
    %2037 = vmatprep.subr.mxu0 0.0
    %2038 = vmatpush1.msra.mxu0 %v2027
    %2039 = vmatprep.subr.mxu0 0.0
    %2040 = vmatpush1.msra.mxu0 %v2026
    %2041 = vmatprep.subr.mxu0 0.0
    %2042 = vmatpush1.msra.mxu0 %v2025
    %2043 = vmatprep.subr.mxu0 0.0
    %2044 = vmatpush1.msra.mxu0 %v2024
    %2045 = vmatprep.subr.mxu0 0.0
    %2046 = vmatpush1.msra.mxu0 %v2023
    %2047 = vmatprep.subr.mxu0 0.0
    %2048 = vmatpush1.msra.mxu0 %v2022
    %2049 = vmatprep.subr.mxu0 0.0
    %2050 = vmatpush1.msra.mxu0 %v2021
    %2051 = vmatprep.subr.mxu0 0.0
    %2052 = vmatpush1.msra.mxu0 %v2020
    %2053 = vmatprep.subr.mxu0 0.0
    %2054 = vmatpush1.msra.mxu0 %v2019
    %2055 = vmatprep.subr.mxu0 0.0
    %2056 = vmatpush1.msra.mxu0 %v2018
    %2057 = vmatprep.subr.mxu0 0.0
    %2058 = vmatpush1.msra.mxu0 %v2017
    %2059 = vmatprep.subr.mxu0 0.0
    %2060 = vmatpush1.msra.mxu0 %v2016
    %2061 = vmatprep.subr.mxu0 0.0
    %2062 = vmatpush1.msra.mxu0 %v2015
    %2063 = vmatprep.subr.mxu0 0.0
    %2064 = vmatpush2.msra.mxu0 0.0
    %2065 = vmatprep.subr.mxu0 0.0
    %2066 = vmatpush2.msra.mxu0 0.0
    %2067 = vmatprep.subr.mxu0 0.0
    %2068 = vmatpush2.msra.mxu0 0.0
    %2069 = vmatprep.subr.mxu0 0.0
    %2070 = vmatpush2.msra.mxu0 0.0
    %2071 = vmatprep.subr.mxu0 0.0
    %2072 = vmatpush2.msra.mxu0 0.0
    %2073 = vmatprep.subr.mxu0 0.0
    %2074 = vmatpush2.msra.mxu0 0.0
    %2075 = vmatprep.subr.mxu0 0.0
    %2076 = vmatpush2.msra.mxu0 0.0
    %2077 = vmatprep.subr.mxu0 0.0
    %2078 = vmatpush2.msra.mxu0 0.0
    %2079 = vmatprep.subr.mxu0 0.0
    %2080 = vmatpush2.msra.mxu0 0.0
    %2081 = vmatprep.subr.mxu0 0.0
    %2082 = vmatpush2.msra.mxu0 0.0
    %2083 = vmatprep.subr.mxu0 0.0
    %2084 = vmatpush2.msra.mxu0 0.0
    %2085 = vmatprep.subr.mxu0 0.0
    %2086 = vmatpush2.msra.mxu0 0.0
    %2087 = vmatprep.subr.mxu0 0.0
    %2088 = vmatpush2.msra.mxu0 0.0
    %2089 = vmatprep.subr.mxu0 0.0
    %2090 = vmatpush2.msra.mxu0 0.0
    %2091 = vmatprep.subr.mxu0 0.0
    %2092 = vmatpush2.msra.mxu0 0.0
    %2093 = vmatprep.subr.mxu0 0.0
    %2094 = vmatpush2.msra.mxu0 0.0
    %2095 = vmatprep.mubr.f32.mxu0 0.0
    %2096 = vmatmul.mubr.f32.gmra.mxu0 %v696
    %v2097 = vpop.f32.mrf.mxu0
    %v2098 = vadd.f32 0.0, %v2097
    %v2099 = vpop.f32.mrf.mxu0
    %2100 = vdwg.mxu0
    %v2101 = vadd.f32 %v2013, %v2098
    %v2102 = vld [vmem:[%s4] sm:$0x1]
    %v2104 = vlaneseq
    %v2105 = vshrl.u32 %v2104, 7
    %v2106 = vsub.s32 0, %v2105
    %v2107 = vrot.slane %v2102, %v2106
    %v2109 = vadd.f32 %v2101, %v2107
    %v2110 = vmax.f32 %v2109, 0.0
    %v2111 = vld [vmem:[%s5] sm:$0xff]
    %v2112 = vld [vmem:[%s5 + $0x8] sm:$0xff]
    %v2113 = vld [vmem:[%s5 + $0x10] sm:$0xff]
    %v2114 = vld [vmem:[%s5 + $0x18] sm:$0xff]
    %v2115 = vld [vmem:[%s5 + $0x20] sm:$0xff]
    %v2116 = vld [vmem:[%s5 + $0x28] sm:$0xff]
    %v2117 = vld [vmem:[%s5 + $0x30] sm:$0xff]
    %v2118 = vld [vmem:[%s5 + $0x38] sm:$0xff]
    %v2119 = vld [vmem:[%s5 + $0x40] sm:$0xff]
    %v2120 = vld [vmem:[%s5 + $0x48] sm:$0xff]
    %v2121 = vld [vmem:[%s5 + $0x50] sm:$0xff]
    %v2122 = vld [vmem:[%s5 + $0x58] sm:$0xff]
    %v2123 = vld [vmem:[%s5 + $0x60] sm:$0xff]
    %v2124 = vld [vmem:[%s5 + $0x68] sm:$0xff]
    %v2125 = vld [vmem:[%s5 + $0x70] sm:$0xff]
    %v2126 = vld [vmem:[%s5 + $0x78] sm:$0xff]
    %v2127 = vld [vmem:[%s6] sm:$0x1]
    %v2129 = vlaneseq
    %v2130 = vshrl.u32 %v2129, 7
    %v2131 = vsub.s32 0, %v2130
    %v2132 = vrot.slane %v2127, %v2131
    %2134 = vmatprep.subr.mxu0 0.0
    %2135 = vmatpush1.msra.mxu0 %v2126
    %2136 = vmatprep.subr.mxu0 0.0
    %2137 = vmatpush1.msra.mxu0 %v2125
    %2138 = vmatprep.subr.mxu0 0.0
    %2139 = vmatpush1.msra.mxu0 %v2124
    %2140 = vmatprep.subr.mxu0 0.0
    %2141 = vmatpush1.msra.mxu0 %v2123
    %2142 = vmatprep.subr.mxu0 0.0
    %2143 = vmatpush1.msra.mxu0 %v2122
    %2144 = vmatprep.subr.mxu0 0.0
    %2145 = vmatpush1.msra.mxu0 %v2121
    %2146 = vmatprep.subr.mxu0 0.0
    %2147 = vmatpush1.msra.mxu0 %v2120
    %2148 = vmatprep.subr.mxu0 0.0
    %2149 = vmatpush1.msra.mxu0 %v2119
    %2150 = vmatprep.subr.mxu0 0.0
    %2151 = vmatpush1.msra.mxu0 %v2118
    %2152 = vmatprep.subr.mxu0 0.0
    %2153 = vmatpush1.msra.mxu0 %v2117
    %2154 = vmatprep.subr.mxu0 0.0
    %2155 = vmatpush1.msra.mxu0 %v2116
    %2156 = vmatprep.subr.mxu0 0.0
    %2157 = vmatpush1.msra.mxu0 %v2115
    %2158 = vmatprep.subr.mxu0 0.0
    %2159 = vmatpush1.msra.mxu0 %v2114
    %2160 = vmatprep.subr.mxu0 0.0
    %2161 = vmatpush1.msra.mxu0 %v2113
    %2162 = vmatprep.subr.mxu0 0.0
    %2163 = vmatpush1.msra.mxu0 %v2112
    %2164 = vmatprep.subr.mxu0 0.0
    %2165 = vmatpush1.msra.mxu0 %v2111
    %2166 = vmatprep.subr.mxu0 0.0
    %2167 = vmatpush2.msra.mxu0 0.0
    %2168 = vmatprep.subr.mxu0 0.0
    %2169 = vmatpush2.msra.mxu0 0.0
    %2170 = vmatprep.subr.mxu0 0.0
    %2171 = vmatpush2.msra.mxu0 0.0
    %2172 = vmatprep.subr.mxu0 0.0
    %2173 = vmatpush2.msra.mxu0 0.0
    %2174 = vmatprep.subr.mxu0 0.0
    %2175 = vmatpush2.msra.mxu0 0.0
    %2176 = vmatprep.subr.mxu0 0.0
    %2177 = vmatpush2.msra.mxu0 0.0
    %2178 = vmatprep.subr.mxu0 0.0
    %2179 = vmatpush2.msra.mxu0 0.0
    %2180 = vmatprep.subr.mxu0 0.0
    %2181 = vmatpush2.msra.mxu0 0.0
    %2182 = vmatprep.subr.mxu0 0.0
    %2183 = vmatpush2.msra.mxu0 0.0
    %2184 = vmatprep.subr.mxu0 0.0
    %2185 = vmatpush2.msra.mxu0 0.0
    %2186 = vmatprep.subr.mxu0 0.0
    %2187 = vmatpush2.msra.mxu0 0.0
    %2188 = vmatprep.subr.mxu0 0.0
    %2189 = vmatpush2.msra.mxu0 0.0
    %2190 = vmatprep.subr.mxu0 0.0
    %2191 = vmatpush2.msra.mxu0 0.0
    %2192 = vmatprep.subr.mxu0 0.0
    %2193 = vmatpush2.msra.mxu0 0.0
    %2194 = vmatprep.subr.mxu0 0.0
    %2195 = vmatpush2.msra.mxu0 0.0
    %2196 = vmatprep.subr.mxu0 0.0
    %2197 = vmatpush2.msra.mxu0 0.0
    %2198 = vmatprep.mubr.f32.mxu0 0.0
    %2199 = vmatmul.mubr.f32.gmra.mxu0 %v2110
    %v2200 = vpop.f32.mrf.mxu0
    %v2201 = vadd.f32 %v2132, %v2200
    %v2202 = vpop.f32.mrf.mxu0
    %2203 = vdwg.mxu0
    %v2204 = vmax.f32 %v2201, 0.0
    %v2205 = vld [vmem:[%s7] sm:$0xff]
    %v2206 = vld [vmem:[%s7 + $0x8] sm:$0xff]
    %v2207 = vld [vmem:[%s7 + $0x10] sm:$0xff]
    %v2208 = vld [vmem:[%s7 + $0x18] sm:$0xff]
    %v2209 = vld [vmem:[%s7 + $0x20] sm:$0xff]
    %v2210 = vld [vmem:[%s7 + $0x28] sm:$0xff]
    %v2211 = vld [vmem:[%s7 + $0x30] sm:$0xff]
    %v2212 = vld [vmem:[%s7 + $0x38] sm:$0xff]
    %v2213 = vld [vmem:[%s7 + $0x40] sm:$0xff]
    %v2214 = vld [vmem:[%s7 + $0x48] sm:$0xff]
    %v2215 = vld [vmem:[%s7 + $0x50] sm:$0xff]
    %v2216 = vld [vmem:[%s7 + $0x58] sm:$0xff]
    %v2217 = vld [vmem:[%s7 + $0x60] sm:$0xff]
    %v2218 = vld [vmem:[%s7 + $0x68] sm:$0xff]
    %v2219 = vld [vmem:[%s7 + $0x70] sm:$0xff]
    %v2220 = vld [vmem:[%s7 + $0x78] sm:$0xff]
    %v2221 = vld [vmem:[%s8] sm:$0x1]
    %v2223 = vlaneseq
    %v2224 = vshrl.u32 %v2223, 7
    %v2225 = vsub.s32 0, %v2224
    %v2226 = vrot.slane %v2221, %v2225
    %2228 = vmatprep.subr.mxu0 0.0
    %2229 = vmatpush1.msra.mxu0 %v2220
    %2230 = vmatprep.subr.mxu0 0.0
    %2231 = vmatpush1.msra.mxu0 %v2219
    %2232 = vmatprep.subr.mxu0 0.0
    %2233 = vmatpush1.msra.mxu0 %v2218
    %2234 = vmatprep.subr.mxu0 0.0
    %2235 = vmatpush1.msra.mxu0 %v2217
    %2236 = vmatprep.subr.mxu0 0.0
    %2237 = vmatpush1.msra.mxu0 %v2216
    %2238 = vmatprep.subr.mxu0 0.0
    %2239 = vmatpush1.msra.mxu0 %v2215
    %2240 = vmatprep.subr.mxu0 0.0
    %2241 = vmatpush1.msra.mxu0 %v2214
    %2242 = vmatprep.subr.mxu0 0.0
    %2243 = vmatpush1.msra.mxu0 %v2213
    %2244 = vmatprep.subr.mxu0 0.0
    %2245 = vmatpush1.msra.mxu0 %v2212
    %2246 = vmatprep.subr.mxu0 0.0
    %2247 = vmatpush1.msra.mxu0 %v2211
    %2248 = vmatprep.subr.mxu0 0.0
    %2249 = vmatpush1.msra.mxu0 %v2210
    %2250 = vmatprep.subr.mxu0 0.0
    %2251 = vmatpush1.msra.mxu0 %v2209
    %2252 = vmatprep.subr.mxu0 0.0
    %2253 = vmatpush1.msra.mxu0 %v2208
    %2254 = vmatprep.subr.mxu0 0.0
    %2255 = vmatpush1.msra.mxu0 %v2207
    %2256 = vmatprep.subr.mxu0 0.0
    %2257 = vmatpush1.msra.mxu0 %v2206
    %2258 = vmatprep.subr.mxu0 0.0
    %2259 = vmatpush1.msra.mxu0 %v2205
    %2260 = vmatprep.subr.mxu0 0.0
    %2261 = vmatpush2.msra.mxu0 0.0
    %2262 = vmatprep.subr.mxu0 0.0
    %2263 = vmatpush2.msra.mxu0 0.0
    %2264 = vmatprep.subr.mxu0 0.0
    %2265 = vmatpush2.msra.mxu0 0.0
    %2266 = vmatprep.subr.mxu0 0.0
    %2267 = vmatpush2.msra.mxu0 0.0
    %2268 = vmatprep.subr.mxu0 0.0
    %2269 = vmatpush2.msra.mxu0 0.0
    %2270 = vmatprep.subr.mxu0 0.0
    %2271 = vmatpush2.msra.mxu0 0.0
    %2272 = vmatprep.subr.mxu0 0.0
    %2273 = vmatpush2.msra.mxu0 0.0
    %2274 = vmatprep.subr.mxu0 0.0
    %2275 = vmatpush2.msra.mxu0 0.0
    %2276 = vmatprep.subr.mxu0 0.0
    %2277 = vmatpush2.msra.mxu0 0.0
    %2278 = vmatprep.subr.mxu0 0.0
    %2279 = vmatpush2.msra.mxu0 0.0
    %2280 = vmatprep.subr.mxu0 0.0
    %2281 = vmatpush2.msra.mxu0 0.0
    %2282 = vmatprep.subr.mxu0 0.0
    %2283 = vmatpush2.msra.mxu0 0.0
    %2284 = vmatprep.subr.mxu0 0.0
    %2285 = vmatpush2.msra.mxu0 0.0
    %2286 = vmatprep.subr.mxu0 0.0
    %2287 = vmatpush2.msra.mxu0 0.0
    %2288 = vmatprep.subr.mxu0 0.0
    %2289 = vmatpush2.msra.mxu0 0.0
    %2290 = vmatprep.subr.mxu0 0.0
    %2291 = vmatpush2.msra.mxu0 0.0
    %2292 = vmatprep.mubr.f32.mxu0 0.0
    %2293 = vmatmul.mubr.f32.gmra.mxu0 %v2204
    %v2294 = vpop.f32.mrf.mxu0
    %v2295 = vadd.f32 %v2226, %v2294
    %v2296 = vpop.f32.mrf.mxu0
    %2297 = vdwg.mxu0
    %vm2298 = vcmask 74752
    %2299 = vst.msk [vmem:[#allocation2] sm:$0x3] %vm2298, %v2295
    // Predicated region
    $region38: #{net_forward.3} parent=1 // pred_check
      _
    $region39: #{net_forward.3} parent=1 // pred_check_branch
      %2301 = sbr.rel (0) target = $region41
    $region40: #{net_forward.3} parent=1 // pred_region
      %s2303 = ssub.s32 32, 32
      %2304 = vsyncadd [#allocation3], %s2303
      %s2306 = sshll.u32 [#allocation2], 4
      %s2307 = int_to_ptr.vmem [resolvable:$true] %s2306
      %2309 = dma.vmem_to_hbm [thread:$0]  %s2307, 32, %s9, [#allocation3]
    $region41: #{net_forward.3} parent=1 // pred_fallthru
      _
    // Predicated region
    $region42: #{net_forward.3} parent=1 // pred_check
      _
    $region43: #{net_forward.3} parent=1 // pred_check_branch
      %2311 = sbr.rel (0) target = $region45
    $region44: #{net_forward.3} parent=1 // pred_region
      %2312 = dma.done [#allocation3], 32
    $region45: #{net_forward.3} parent=1 // pred_fallthru
      _
    %2313 = vsyncpa [#allocation3], 1

</llo_original>
